<compile_context>
chip_gen: v7x
topology: tpu7x:2x2x1
jax: 0.10.0
libtpu: 0.0.40
codegen_flags: <defaults>
</compile_context>

<pallas_src>
import functools
import math

import jax
import jax.numpy as jnp
from jax.experimental import pallas as pl
from jax.experimental.pallas import tpu as pltpu


# ----------------------------- fused Pallas kernel -----------------------------

def _bert_palm_kernel(
    emb_ref, mask_bias_ref, emb_g_ref, emb_b_ref,
    wqkv_ref, bqkv_ref, wo_ref, bo_ref, ln1_g_ref, ln1_b_ref,
    wi_ref, bi_ref, wo2_ref, bo2_ref, ln2_g_ref, ln2_b_ref,
    pool_w_ref, pool_b_ref, cls_w_ref, cls_b_ref,
    pooled_ref, logits_ref,
    *, num_layers, batch, seq, num_heads, head_dim, ln_eps,
):
    """Whole BERT encoder + pooler + classifier on a VMEM-resident (B*S, H) slab."""
    H = num_heads * head_dim
    scale = 1.0 / math.sqrt(head_dim)

    def ln(x, g, b):
        # LayerNorm with the residual already folded into `x` by the caller.
        mu = jnp.mean(x, axis=-1, keepdims=True)
        var = jnp.mean(jnp.square(x - mu), axis=-1, keepdims=True)
        return (x - mu) * jax.lax.rsqrt(var + ln_eps) * g + b

    def mm(a, w):
        # bf16 MXU inputs, f32 accumulation.
        return jnp.dot(a.astype(jnp.bfloat16), w, preferred_element_type=jnp.float32)

    mask_bias = mask_bias_ref[...]                              # (B, S), f32
    x = ln(emb_ref[...], emb_g_ref[...], emb_b_ref[...])        # (B*S, H), f32

    for l in range(num_layers):                                 # static unroll (L=2)
        # --- fused QKV projection: one (B*S, H) @ (H, 3H) matmul ---
        qkv = mm(x, wqkv_ref[l]) + bqkv_ref[l]                  # (B*S, 3H)
        q = qkv[:, 0 * H:1 * H]
        k = qkv[:, 1 * H:2 * H]
        v = qkv[:, 2 * H:3 * H]

        # --- attention: static loop over (batch, head); contexts stay in vregs ---
        ctx_rows = []
        for b in range(batch):
            bias_b = mask_bias[b:b + 1, :]                      # (1, S) key-position bias
            qb = q[b * seq:(b + 1) * seq, :]                    # (S, H)
            kb = k[b * seq:(b + 1) * seq, :]
            vb = v[b * seq:(b + 1) * seq, :]
            head_ctx = []
            for h in range(num_heads):
                lo, hi = h * head_dim, (h + 1) * head_dim
                qh = qb[:, lo:hi]                               # (S, Dh)
                kh = kb[:, lo:hi]
                vh = vb[:, lo:hi]
                s = jax.lax.dot_general(
                    qh.astype(jnp.bfloat16), kh.astype(jnp.bfloat16),
                    (((1,), (1,)), ((), ())),
                    preferred_element_type=jnp.float32) * scale  # (S, S)
                s = s + bias_b                                   # mask add in f32
                m = jnp.max(s, axis=-1, keepdims=True)
                e = jnp.exp(s - m)
                p = e * pl.reciprocal(jnp.sum(e, axis=-1, keepdims=True), approx=True)
                head_ctx.append(
                    jnp.dot(p.astype(jnp.bfloat16), vh.astype(jnp.bfloat16),
                            preferred_element_type=jnp.float32))  # (S, Dh)
            ctx_rows.append(jnp.concatenate(head_ctx, axis=1))     # (S, H) merge heads
        ctx = jnp.concatenate(ctx_rows, axis=0)                    # (B*S, H)

        # --- attention output projection + residual + LN1 ---
        attn_out = mm(ctx, wo_ref[l]) + bo_ref[l]               # (B*S, H)
        h1 = ln(attn_out + x, ln1_g_ref[l], ln1_b_ref[l])

        # --- FFN: intermediate + GELU + output, residual + LN2 ---
        inter = mm(h1, wi_ref[l]) + bi_ref[l]                   # (B*S, I)
        # TODO(synk): HF BERT default is exact erf-GELU; tanh approximation used here.
        inter = 0.5 * inter * (1.0 + jnp.tanh(
            0.7978845608028654 * (inter + 0.044715 * inter * inter * inter)))
        out = mm(inter, wo2_ref[l]) + bo2_ref[l]                # (B*S, H)
        x = ln(out + h1, ln2_g_ref[l], ln2_b_ref[l])

    # --- CLS token gather + pooler (tanh) + classifier, all in the same kernel ---
    cls = jnp.concatenate([x[b * seq:b * seq + 1, :] for b in range(batch)], axis=0)
    pooled = jnp.tanh(mm(cls, pool_w_ref[...]) + pool_b_ref[...])       # (B, H)
    pooled_ref[...] = pooled
    logits_ref[...] = mm(pooled, cls_w_ref[...]) + cls_b_ref[...]       # (B, C)


# --------------------------- model (params + wrapper) ---------------------------

CONFIG = dict(vocab_size=50, hidden_size=32, num_layers=2, num_heads=4,
              intermediate_size=64, max_position=16, type_vocab_size=2,
              num_classes=3)


def init_params(key, cfg):
    H, I, L = cfg["hidden_size"], cfg["intermediate_size"], cfg["num_layers"]
    C = cfg["num_classes"]

    def nrm(k, shape):
        return 0.02 * jax.random.normal(k, shape, dtype=jnp.float32)

    keys = iter(jax.random.split(key, 32))
    return {
        "word_emb": nrm(next(keys), (cfg["vocab_size"], H)),
        "pos_emb": nrm(next(keys), (cfg["max_position"], H)),
        "type_emb": nrm(next(keys), (cfg["type_vocab_size"], H)),
        "emb_ln_g": jnp.ones((1, H), jnp.float32),
        "emb_ln_b": jnp.zeros((1, H), jnp.float32),
        # Per-layer weights stacked on a leading L axis; q/k/v fused into (H, 3H).
        "wqkv": nrm(next(keys), (L, H, 3 * H)),
        "bqkv": jnp.zeros((L, 1, 3 * H), jnp.float32),
        "wo": nrm(next(keys), (L, H, H)),
        "bo": jnp.zeros((L, 1, H), jnp.float32),
        "ln1_g": jnp.ones((L, 1, H), jnp.float32),
        "ln1_b": jnp.zeros((L, 1, H), jnp.float32),
        "wi": nrm(next(keys), (L, H, I)),
        "bi": jnp.zeros((L, 1, I), jnp.float32),
        "wo2": nrm(next(keys), (L, I, H)),
        "bo2": jnp.zeros((L, 1, H), jnp.float32),
        "ln2_g": jnp.ones((L, 1, H), jnp.float32),
        "ln2_b": jnp.zeros((L, 1, H), jnp.float32),
        "pool_w": nrm(next(keys), (H, H)),
        "pool_b": jnp.zeros((1, H), jnp.float32),
        "cls_w": nrm(next(keys), (H, C)),
        "cls_b": jnp.zeros((1, C), jnp.float32),
    }


def bert_palm_classifier_forward(params, input_ids, attention_mask, cfg,
                                 return_features=False):
    B, S = input_ids.shape
    H = cfg["hidden_size"]
    NH = cfg["num_heads"]
    Dh = H // NH
    L = cfg["num_layers"]
    C = cfg["num_classes"]
    bf16 = jnp.bfloat16

    # Embedding gather is plain-JAX glue (data-dependent gather); everything else is
    # one fused Pallas kernel.
    emb = (jnp.take(params["word_emb"], input_ids, axis=0)
           + params["pos_emb"][:S][None, :, :]
           + params["type_emb"][0][None, None, :]).reshape(B * S, H)
    mask_bias = (1.0 - attention_mask.astype(jnp.float32)) * (-1e9)     # (B, S)

    kernel = functools.partial(
        _bert_palm_kernel,
        num_layers=L, batch=B, seq=S, num_heads=NH, head_dim=Dh, ln_eps=1e-12)

    pooled, logits = pl.pallas_call(
        kernel,
        out_shape=(jax.ShapeDtypeStruct((B, H), jnp.float32),
                   jax.ShapeDtypeStruct((B, C), jnp.float32)),
    )(
        emb, mask_bias,
        params["emb_ln_g"], params["emb_ln_b"],
        params["wqkv"].astype(bf16), params["bqkv"],
        params["wo"].astype(bf16), params["bo"],
        params["ln1_g"], params["ln1_b"],
        params["wi"].astype(bf16), params["bi"],
        params["wo2"].astype(bf16), params["bo2"],
        params["ln2_g"], params["ln2_b"],
        params["pool_w"].astype(bf16), params["pool_b"],
        params["cls_w"].astype(bf16), params["cls_b"],
    )

    if return_features:
        return pooled, logits
    return logits


if __name__ == "__main__":
    cfg = CONFIG
    key = jax.random.PRNGKey(0)
    pkey, dkey = jax.random.split(key)
    params = init_params(pkey, cfg)

    B, S = 2, 8
    input_ids = jax.random.randint(dkey, (B, S), 0, cfg["vocab_size"], dtype=jnp.int32)
    attention_mask = jnp.array([[1, 1, 1, 1, 1, 1, 1, 1],
                                [1, 1, 1, 1, 1, 0, 0, 0]], dtype=jnp.int32)

    fwd = jax.jit(functools.partial(bert_palm_classifier_forward, cfg=cfg),
                  static_argnames=("return_features",))

    logits = fwd(params, input_ids, attention_mask)
    jax.block_until_ready(logits)
    assert logits.shape == (B, cfg["num_classes"]) and logits.dtype == jnp.float32

    pooled, logits2 = fwd(params, input_ids, attention_mask, return_features=True)
    jax.block_until_ready((pooled, logits2))
    assert pooled.shape == (B, cfg["hidden_size"])

    print("KERNEL_OK")
</pallas_src>

<mosaic_0001>
module attributes {stable_mosaic.version = 11 : i64} {
  func.func @_bert_palm_kernel(%arg0: memref<16x32xf32, #tpu.memory_space<vmem>>, %arg1: memref<2x8xf32, #tpu.memory_space<vmem>>, %arg2: memref<1x32xf32, #tpu.memory_space<vmem>>, %arg3: memref<1x32xf32, #tpu.memory_space<vmem>>, %arg4: memref<2x32x96xbf16, #tpu.memory_space<vmem>>, %arg5: memref<2x1x96xf32, #tpu.memory_space<vmem>>, %arg6: memref<2x32x32xbf16, #tpu.memory_space<vmem>>, %arg7: memref<2x1x32xf32, #tpu.memory_space<vmem>>, %arg8: memref<2x1x32xf32, #tpu.memory_space<vmem>>, %arg9: memref<2x1x32xf32, #tpu.memory_space<vmem>>, %arg10: memref<2x32x64xbf16, #tpu.memory_space<vmem>>, %arg11: memref<2x1x64xf32, #tpu.memory_space<vmem>>, %arg12: memref<2x64x32xbf16, #tpu.memory_space<vmem>>, %arg13: memref<2x1x32xf32, #tpu.memory_space<vmem>>, %arg14: memref<2x1x32xf32, #tpu.memory_space<vmem>>, %arg15: memref<2x1x32xf32, #tpu.memory_space<vmem>>, %arg16: memref<32x32xbf16, #tpu.memory_space<vmem>>, %arg17: memref<1x32xf32, #tpu.memory_space<vmem>>, %arg18: memref<32x3xbf16, #tpu.memory_space<vmem>>, %arg19: memref<1x3xf32, #tpu.memory_space<vmem>>, %arg20: memref<2x32xf32, #tpu.memory_space<vmem>>, %arg21: memref<2x3xf32, #tpu.memory_space<vmem>>) attributes {dimension_semantics = [], scalar_prefetch = 0 : i64, scratch_operands = 0 : i64, tpu.core_type = #tpu.core_type<tc>} {
    %c0 = arith.constant 0 : index
    %c0_0 = arith.constant 0 : index
    %0 = vector.load %arg1[%c0, %c0_0] : memref<2x8xf32, #tpu.memory_space<vmem>>, vector<2x8xf32>
    %c0_1 = arith.constant 0 : index
    %c0_2 = arith.constant 0 : index
    %1 = vector.load %arg0[%c0_1, %c0_2] : memref<16x32xf32, #tpu.memory_space<vmem>>, vector<16x32xf32>
    %c0_3 = arith.constant 0 : index
    %c0_4 = arith.constant 0 : index
    %2 = vector.load %arg2[%c0_3, %c0_4] : memref<1x32xf32, #tpu.memory_space<vmem>>, vector<1x32xf32>
    %c0_5 = arith.constant 0 : index
    %c0_6 = arith.constant 0 : index
    %3 = vector.load %arg3[%c0_5, %c0_6] : memref<1x32xf32, #tpu.memory_space<vmem>>, vector<1x32xf32>
    %cst = arith.constant dense<0.000000e+00> : vector<16xf32>
    %4 = vector.multi_reduction <add>, %1, %cst [1] : vector<16x32xf32> to vector<16xf32>
    %5 = vector.shape_cast %4 : vector<16xf32> to vector<16x1xf32>
    %cst_7 = arith.constant 3.200000e+01 : f32
    %6 = vector.broadcast %cst_7 : f32 to vector<16x1xf32>
    %7 = arith.divf %5, %6 : vector<16x1xf32>
    %8 = vector.broadcast %7 : vector<16x1xf32> to vector<16x32xf32>
    %9 = arith.subf %1, %8 : vector<16x32xf32>
    %10 = arith.mulf %9, %9 : vector<16x32xf32>
    %cst_8 = arith.constant dense<0.000000e+00> : vector<16xf32>
    %11 = vector.multi_reduction <add>, %10, %cst_8 [1] : vector<16x32xf32> to vector<16xf32>
    %12 = vector.shape_cast %11 : vector<16xf32> to vector<16x1xf32>
    %cst_9 = arith.constant 3.200000e+01 : f32
    %13 = vector.broadcast %cst_9 : f32 to vector<16x1xf32>
    %14 = arith.divf %12, %13 : vector<16x1xf32>
    %15 = vector.broadcast %7 : vector<16x1xf32> to vector<16x32xf32>
    %16 = arith.subf %1, %15 : vector<16x32xf32>
    %cst_10 = arith.constant 9.99999996E-13 : f32
    %17 = vector.broadcast %cst_10 : f32 to vector<16x1xf32>
    %18 = arith.addf %14, %17 : vector<16x1xf32>
    %19 = math.rsqrt %18 : vector<16x1xf32>
    %20 = vector.broadcast %19 : vector<16x1xf32> to vector<16x32xf32>
    %21 = arith.mulf %16, %20 : vector<16x32xf32>
    %22 = vector.broadcast %2 : vector<1x32xf32> to vector<16x32xf32>
    %23 = arith.mulf %21, %22 : vector<16x32xf32>
    %24 = vector.broadcast %3 : vector<1x32xf32> to vector<16x32xf32>
    %25 = arith.addf %23, %24 : vector<16x32xf32>
    %c0_11 = arith.constant 0 : index
    %c0_12 = arith.constant 0 : index
    %c0_13 = arith.constant 0 : index
    %26 = vector.load %arg4[%c0_11, %c0_12, %c0_13] : memref<2x32x96xbf16, #tpu.memory_space<vmem>>, vector<1x32x96xbf16>
    %27 = vector.shape_cast %26 : vector<1x32x96xbf16> to vector<32x96xbf16>
    %28 = arith.truncf %25 : vector<16x32xf32> to vector<16x32xbf16>
    %cst_14 = arith.constant dense<0.000000e+00> : vector<16x96xf32>
    %29 = tpu.matmul %28, %27, %cst_14 {dimension_numbers = #tpu.dot_dimension_numbers<[1], [0], [0], [1], [0, 0, 1, 1], [], []>} : vector<16x32xbf16>, vector<32x96xbf16>, vector<16x96xf32> -> vector<16x96xf32>
    %c0_15 = arith.constant 0 : index
    %c0_16 = arith.constant 0 : index
    %c0_17 = arith.constant 0 : index
    %30 = vector.load %arg5[%c0_15, %c0_16, %c0_17] : memref<2x1x96xf32, #tpu.memory_space<vmem>>, vector<1x1x96xf32>
    %31 = vector.shape_cast %30 : vector<1x1x96xf32> to vector<1x96xf32>
    %32 = vector.broadcast %31 : vector<1x96xf32> to vector<16x96xf32>
    %33 = arith.addf %29, %32 : vector<16x96xf32>
    %34 = vector.extract_strided_slice %33 {offsets = [0, 0], sizes = [16, 32], strides = [1, 1]} : vector<16x96xf32> to vector<16x32xf32>
    %35 = vector.extract_strided_slice %33 {offsets = [0, 32], sizes = [16, 32], strides = [1, 1]} : vector<16x96xf32> to vector<16x32xf32>
    %36 = vector.extract_strided_slice %33 {offsets = [0, 64], sizes = [16, 32], strides = [1, 1]} : vector<16x96xf32> to vector<16x32xf32>
    %37 = vector.extract_strided_slice %0 {offsets = [0, 0], sizes = [1, 8], strides = [1, 1]} : vector<2x8xf32> to vector<1x8xf32>
    %38 = vector.extract_strided_slice %34 {offsets = [0, 0], sizes = [8, 32], strides = [1, 1]} : vector<16x32xf32> to vector<8x32xf32>
    %39 = vector.extract_strided_slice %35 {offsets = [0, 0], sizes = [8, 32], strides = [1, 1]} : vector<16x32xf32> to vector<8x32xf32>
    %40 = vector.extract_strided_slice %36 {offsets = [0, 0], sizes = [8, 32], strides = [1, 1]} : vector<16x32xf32> to vector<8x32xf32>
    %41 = vector.extract_strided_slice %38 {offsets = [0, 0], sizes = [8, 8], strides = [1, 1]} : vector<8x32xf32> to vector<8x8xf32>
    %42 = vector.extract_strided_slice %39 {offsets = [0, 0], sizes = [8, 8], strides = [1, 1]} : vector<8x32xf32> to vector<8x8xf32>
    %43 = vector.extract_strided_slice %40 {offsets = [0, 0], sizes = [8, 8], strides = [1, 1]} : vector<8x32xf32> to vector<8x8xf32>
    %44 = arith.truncf %41 : vector<8x8xf32> to vector<8x8xbf16>
    %45 = arith.truncf %42 : vector<8x8xf32> to vector<8x8xbf16>
    %cst_18 = arith.constant dense<0.000000e+00> : vector<8x8xf32>
    %46 = tpu.matmul %44, %45, %cst_18 {dimension_numbers = #tpu.dot_dimension_numbers<[1], [1], [0], [0], [0, 0, 1, 0], [], []>} : vector<8x8xbf16>, vector<8x8xbf16>, vector<8x8xf32> -> vector<8x8xf32>
    %cst_19 = arith.constant 0.353553385 : f32
    %47 = vector.broadcast %cst_19 : f32 to vector<8x8xf32>
    %48 = arith.mulf %46, %47 : vector<8x8xf32>
    %49 = vector.broadcast %37 : vector<1x8xf32> to vector<8x8xf32>
    %50 = arith.addf %48, %49 : vector<8x8xf32>
    %cst_20 = arith.constant dense<0xFF800000> : vector<8xf32>
    %51 = vector.multi_reduction <maximumf>, %50, %cst_20 [1] : vector<8x8xf32> to vector<8xf32>
    %52 = vector.shape_cast %51 : vector<8xf32> to vector<8x1xf32>
    %53 = vector.broadcast %52 : vector<8x1xf32> to vector<8x8xf32>
    %54 = arith.subf %50, %53 : vector<8x8xf32>
    %55 = math.exp %54 : vector<8x8xf32>
    %cst_21 = arith.constant dense<0.000000e+00> : vector<8xf32>
    %56 = vector.multi_reduction <add>, %55, %cst_21 [1] : vector<8x8xf32> to vector<8xf32>
    %57 = vector.shape_cast %56 : vector<8xf32> to vector<8x1xf32>
    %58 = tpu.reciprocal %57 {approx = true} : vector<8x1xf32> -> vector<8x1xf32>
    %59 = vector.broadcast %58 : vector<8x1xf32> to vector<8x8xf32>
    %60 = arith.mulf %55, %59 : vector<8x8xf32>
    %61 = arith.truncf %60 : vector<8x8xf32> to vector<8x8xbf16>
    %62 = arith.truncf %43 : vector<8x8xf32> to vector<8x8xbf16>
    %cst_22 = arith.constant dense<0.000000e+00> : vector<8x8xf32>
    %63 = tpu.matmul %61, %62, %cst_22 {dimension_numbers = #tpu.dot_dimension_numbers<[1], [0], [0], [1], [0, 0, 1, 1], [], []>} : vector<8x8xbf16>, vector<8x8xbf16>, vector<8x8xf32> -> vector<8x8xf32>
    %64 = vector.extract_strided_slice %38 {offsets = [0, 8], sizes = [8, 8], strides = [1, 1]} : vector<8x32xf32> to vector<8x8xf32>
    %65 = vector.extract_strided_slice %39 {offsets = [0, 8], sizes = [8, 8], strides = [1, 1]} : vector<8x32xf32> to vector<8x8xf32>
    %66 = vector.extract_strided_slice %40 {offsets = [0, 8], sizes = [8, 8], strides = [1, 1]} : vector<8x32xf32> to vector<8x8xf32>
    %67 = arith.truncf %64 : vector<8x8xf32> to vector<8x8xbf16>
    %68 = arith.truncf %65 : vector<8x8xf32> to vector<8x8xbf16>
    %cst_23 = arith.constant dense<0.000000e+00> : vector<8x8xf32>
    %69 = tpu.matmul %67, %68, %cst_23 {dimension_numbers = #tpu.dot_dimension_numbers<[1], [1], [0], [0], [0, 0, 1, 0], [], []>} : vector<8x8xbf16>, vector<8x8xbf16>, vector<8x8xf32> -> vector<8x8xf32>
    %cst_24 = arith.constant 0.353553385 : f32
    %70 = vector.broadcast %cst_24 : f32 to vector<8x8xf32>
    %71 = arith.mulf %69, %70 : vector<8x8xf32>
    %72 = vector.broadcast %37 : vector<1x8xf32> to vector<8x8xf32>
    %73 = arith.addf %71, %72 : vector<8x8xf32>
    %cst_25 = arith.constant dense<0xFF800000> : vector<8xf32>
    %74 = vector.multi_reduction <maximumf>, %73, %cst_25 [1] : vector<8x8xf32> to vector<8xf32>
    %75 = vector.shape_cast %74 : vector<8xf32> to vector<8x1xf32>
    %76 = vector.broadcast %75 : vector<8x1xf32> to vector<8x8xf32>
    %77 = arith.subf %73, %76 : vector<8x8xf32>
    %78 = math.exp %77 : vector<8x8xf32>
    %cst_26 = arith.constant dense<0.000000e+00> : vector<8xf32>
    %79 = vector.multi_reduction <add>, %78, %cst_26 [1] : vector<8x8xf32> to vector<8xf32>
    %80 = vector.shape_cast %79 : vector<8xf32> to vector<8x1xf32>
    %81 = tpu.reciprocal %80 {approx = true} : vector<8x1xf32> -> vector<8x1xf32>
    %82 = vector.broadcast %81 : vector<8x1xf32> to vector<8x8xf32>
    %83 = arith.mulf %78, %82 : vector<8x8xf32>
    %84 = arith.truncf %83 : vector<8x8xf32> to vector<8x8xbf16>
    %85 = arith.truncf %66 : vector<8x8xf32> to vector<8x8xbf16>
    %cst_27 = arith.constant dense<0.000000e+00> : vector<8x8xf32>
    %86 = tpu.matmul %84, %85, %cst_27 {dimension_numbers = #tpu.dot_dimension_numbers<[1], [0], [0], [1], [0, 0, 1, 1], [], []>} : vector<8x8xbf16>, vector<8x8xbf16>, vector<8x8xf32> -> vector<8x8xf32>
    %87 = vector.extract_strided_slice %38 {offsets = [0, 16], sizes = [8, 8], strides = [1, 1]} : vector<8x32xf32> to vector<8x8xf32>
    %88 = vector.extract_strided_slice %39 {offsets = [0, 16], sizes = [8, 8], strides = [1, 1]} : vector<8x32xf32> to vector<8x8xf32>
    %89 = vector.extract_strided_slice %40 {offsets = [0, 16], sizes = [8, 8], strides = [1, 1]} : vector<8x32xf32> to vector<8x8xf32>
    %90 = arith.truncf %87 : vector<8x8xf32> to vector<8x8xbf16>
    %91 = arith.truncf %88 : vector<8x8xf32> to vector<8x8xbf16>
    %cst_28 = arith.constant dense<0.000000e+00> : vector<8x8xf32>
    %92 = tpu.matmul %90, %91, %cst_28 {dimension_numbers = #tpu.dot_dimension_numbers<[1], [1], [0], [0], [0, 0, 1, 0], [], []>} : vector<8x8xbf16>, vector<8x8xbf16>, vector<8x8xf32> -> vector<8x8xf32>
    %cst_29 = arith.constant 0.353553385 : f32
    %93 = vector.broadcast %cst_29 : f32 to vector<8x8xf32>
    %94 = arith.mulf %92, %93 : vector<8x8xf32>
    %95 = vector.broadcast %37 : vector<1x8xf32> to vector<8x8xf32>
    %96 = arith.addf %94, %95 : vector<8x8xf32>
    %cst_30 = arith.constant dense<0xFF800000> : vector<8xf32>
    %97 = vector.multi_reduction <maximumf>, %96, %cst_30 [1] : vector<8x8xf32> to vector<8xf32>
    %98 = vector.shape_cast %97 : vector<8xf32> to vector<8x1xf32>
    %99 = vector.broadcast %98 : vector<8x1xf32> to vector<8x8xf32>
    %100 = arith.subf %96, %99 : vector<8x8xf32>
    %101 = math.exp %100 : vector<8x8xf32>
    %cst_31 = arith.constant dense<0.000000e+00> : vector<8xf32>
    %102 = vector.multi_reduction <add>, %101, %cst_31 [1] : vector<8x8xf32> to vector<8xf32>
    %103 = vector.shape_cast %102 : vector<8xf32> to vector<8x1xf32>
    %104 = tpu.reciprocal %103 {approx = true} : vector<8x1xf32> -> vector<8x1xf32>
    %105 = vector.broadcast %104 : vector<8x1xf32> to vector<8x8xf32>
    %106 = arith.mulf %101, %105 : vector<8x8xf32>
    %107 = arith.truncf %106 : vector<8x8xf32> to vector<8x8xbf16>
    %108 = arith.truncf %89 : vector<8x8xf32> to vector<8x8xbf16>
    %cst_32 = arith.constant dense<0.000000e+00> : vector<8x8xf32>
    %109 = tpu.matmul %107, %108, %cst_32 {dimension_numbers = #tpu.dot_dimension_numbers<[1], [0], [0], [1], [0, 0, 1, 1], [], []>} : vector<8x8xbf16>, vector<8x8xbf16>, vector<8x8xf32> -> vector<8x8xf32>
    %110 = vector.extract_strided_slice %38 {offsets = [0, 24], sizes = [8, 8], strides = [1, 1]} : vector<8x32xf32> to vector<8x8xf32>
    %111 = vector.extract_strided_slice %39 {offsets = [0, 24], sizes = [8, 8], strides = [1, 1]} : vector<8x32xf32> to vector<8x8xf32>
    %112 = vector.extract_strided_slice %40 {offsets = [0, 24], sizes = [8, 8], strides = [1, 1]} : vector<8x32xf32> to vector<8x8xf32>
    %113 = arith.truncf %110 : vector<8x8xf32> to vector<8x8xbf16>
    %114 = arith.truncf %111 : vector<8x8xf32> to vector<8x8xbf16>
    %cst_33 = arith.constant dense<0.000000e+00> : vector<8x8xf32>
    %115 = tpu.matmul %113, %114, %cst_33 {dimension_numbers = #tpu.dot_dimension_numbers<[1], [1], [0], [0], [0, 0, 1, 0], [], []>} : vector<8x8xbf16>, vector<8x8xbf16>, vector<8x8xf32> -> vector<8x8xf32>
    %cst_34 = arith.constant 0.353553385 : f32
    %116 = vector.broadcast %cst_34 : f32 to vector<8x8xf32>
    %117 = arith.mulf %115, %116 : vector<8x8xf32>
    %118 = vector.broadcast %37 : vector<1x8xf32> to vector<8x8xf32>
    %119 = arith.addf %117, %118 : vector<8x8xf32>
    %cst_35 = arith.constant dense<0xFF800000> : vector<8xf32>
    %120 = vector.multi_reduction <maximumf>, %119, %cst_35 [1] : vector<8x8xf32> to vector<8xf32>
    %121 = vector.shape_cast %120 : vector<8xf32> to vector<8x1xf32>
    %122 = vector.broadcast %121 : vector<8x1xf32> to vector<8x8xf32>
    %123 = arith.subf %119, %122 : vector<8x8xf32>
    %124 = math.exp %123 : vector<8x8xf32>
    %cst_36 = arith.constant dense<0.000000e+00> : vector<8xf32>
    %125 = vector.multi_reduction <add>, %124, %cst_36 [1] : vector<8x8xf32> to vector<8xf32>
    %126 = vector.shape_cast %125 : vector<8xf32> to vector<8x1xf32>
    %127 = tpu.reciprocal %126 {approx = true} : vector<8x1xf32> -> vector<8x1xf32>
    %128 = vector.broadcast %127 : vector<8x1xf32> to vector<8x8xf32>
    %129 = arith.mulf %124, %128 : vector<8x8xf32>
    %130 = arith.truncf %129 : vector<8x8xf32> to vector<8x8xbf16>
    %131 = arith.truncf %112 : vector<8x8xf32> to vector<8x8xbf16>
    %cst_37 = arith.constant dense<0.000000e+00> : vector<8x8xf32>
    %132 = tpu.matmul %130, %131, %cst_37 {dimension_numbers = #tpu.dot_dimension_numbers<[1], [0], [0], [1], [0, 0, 1, 1], [], []>} : vector<8x8xbf16>, vector<8x8xbf16>, vector<8x8xf32> -> vector<8x8xf32>
    %133 = tpu.concatenate %63, %86, %109, %132 in 1 : vector<8x8xf32>, vector<8x8xf32>, vector<8x8xf32>, vector<8x8xf32> -> vector<8x32xf32>
    %134 = vector.extract_strided_slice %0 {offsets = [1, 0], sizes = [1, 8], strides = [1, 1]} : vector<2x8xf32> to vector<1x8xf32>
    %135 = vector.extract_strided_slice %34 {offsets = [8, 0], sizes = [8, 32], strides = [1, 1]} : vector<16x32xf32> to vector<8x32xf32>
    %136 = vector.extract_strided_slice %35 {offsets = [8, 0], sizes = [8, 32], strides = [1, 1]} : vector<16x32xf32> to vector<8x32xf32>
    %137 = vector.extract_strided_slice %36 {offsets = [8, 0], sizes = [8, 32], strides = [1, 1]} : vector<16x32xf32> to vector<8x32xf32>
    %138 = vector.extract_strided_slice %135 {offsets = [0, 0], sizes = [8, 8], strides = [1, 1]} : vector<8x32xf32> to vector<8x8xf32>
    %139 = vector.extract_strided_slice %136 {offsets = [0, 0], sizes = [8, 8], strides = [1, 1]} : vector<8x32xf32> to vector<8x8xf32>
    %140 = vector.extract_strided_slice %137 {offsets = [0, 0], sizes = [8, 8], strides = [1, 1]} : vector<8x32xf32> to vector<8x8xf32>
    %141 = arith.truncf %138 : vector<8x8xf32> to vector<8x8xbf16>
    %142 = arith.truncf %139 : vector<8x8xf32> to vector<8x8xbf16>
    %cst_38 = arith.constant dense<0.000000e+00> : vector<8x8xf32>
    %143 = tpu.matmul %141, %142, %cst_38 {dimension_numbers = #tpu.dot_dimension_numbers<[1], [1], [0], [0], [0, 0, 1, 0], [], []>} : vector<8x8xbf16>, vector<8x8xbf16>, vector<8x8xf32> -> vector<8x8xf32>
    %cst_39 = arith.constant 0.353553385 : f32
    %144 = vector.broadcast %cst_39 : f32 to vector<8x8xf32>
    %145 = arith.mulf %143, %144 : vector<8x8xf32>
    %146 = vector.broadcast %134 : vector<1x8xf32> to vector<8x8xf32>
    %147 = arith.addf %145, %146 : vector<8x8xf32>
    %cst_40 = arith.constant dense<0xFF800000> : vector<8xf32>
    %148 = vector.multi_reduction <maximumf>, %147, %cst_40 [1] : vector<8x8xf32> to vector<8xf32>
    %149 = vector.shape_cast %148 : vector<8xf32> to vector<8x1xf32>
    %150 = vector.broadcast %149 : vector<8x1xf32> to vector<8x8xf32>
    %151 = arith.subf %147, %150 : vector<8x8xf32>
    %152 = math.exp %151 : vector<8x8xf32>
    %cst_41 = arith.constant dense<0.000000e+00> : vector<8xf32>
    %153 = vector.multi_reduction <add>, %152, %cst_41 [1] : vector<8x8xf32> to vector<8xf32>
    %154 = vector.shape_cast %153 : vector<8xf32> to vector<8x1xf32>
    %155 = tpu.reciprocal %154 {approx = true} : vector<8x1xf32> -> vector<8x1xf32>
    %156 = vector.broadcast %155 : vector<8x1xf32> to vector<8x8xf32>
    %157 = arith.mulf %152, %156 : vector<8x8xf32>
    %158 = arith.truncf %157 : vector<8x8xf32> to vector<8x8xbf16>
    %159 = arith.truncf %140 : vector<8x8xf32> to vector<8x8xbf16>
    %cst_42 = arith.constant dense<0.000000e+00> : vector<8x8xf32>
    %160 = tpu.matmul %158, %159, %cst_42 {dimension_numbers = #tpu.dot_dimension_numbers<[1], [0], [0], [1], [0, 0, 1, 1], [], []>} : vector<8x8xbf16>, vector<8x8xbf16>, vector<8x8xf32> -> vector<8x8xf32>
    %161 = vector.extract_strided_slice %135 {offsets = [0, 8], sizes = [8, 8], strides = [1, 1]} : vector<8x32xf32> to vector<8x8xf32>
    %162 = vector.extract_strided_slice %136 {offsets = [0, 8], sizes = [8, 8], strides = [1, 1]} : vector<8x32xf32> to vector<8x8xf32>
    %163 = vector.extract_strided_slice %137 {offsets = [0, 8], sizes = [8, 8], strides = [1, 1]} : vector<8x32xf32> to vector<8x8xf32>
    %164 = arith.truncf %161 : vector<8x8xf32> to vector<8x8xbf16>
    %165 = arith.truncf %162 : vector<8x8xf32> to vector<8x8xbf16>
    %cst_43 = arith.constant dense<0.000000e+00> : vector<8x8xf32>
    %166 = tpu.matmul %164, %165, %cst_43 {dimension_numbers = #tpu.dot_dimension_numbers<[1], [1], [0], [0], [0, 0, 1, 0], [], []>} : vector<8x8xbf16>, vector<8x8xbf16>, vector<8x8xf32> -> vector<8x8xf32>
    %cst_44 = arith.constant 0.353553385 : f32
    %167 = vector.broadcast %cst_44 : f32 to vector<8x8xf32>
    %168 = arith.mulf %166, %167 : vector<8x8xf32>
    %169 = vector.broadcast %134 : vector<1x8xf32> to vector<8x8xf32>
    %170 = arith.addf %168, %169 : vector<8x8xf32>
    %cst_45 = arith.constant dense<0xFF800000> : vector<8xf32>
    %171 = vector.multi_reduction <maximumf>, %170, %cst_45 [1] : vector<8x8xf32> to vector<8xf32>
    %172 = vector.shape_cast %171 : vector<8xf32> to vector<8x1xf32>
    %173 = vector.broadcast %172 : vector<8x1xf32> to vector<8x8xf32>
    %174 = arith.subf %170, %173 : vector<8x8xf32>
    %175 = math.exp %174 : vector<8x8xf32>
    %cst_46 = arith.constant dense<0.000000e+00> : vector<8xf32>
    %176 = vector.multi_reduction <add>, %175, %cst_46 [1] : vector<8x8xf32> to vector<8xf32>
    %177 = vector.shape_cast %176 : vector<8xf32> to vector<8x1xf32>
    %178 = tpu.reciprocal %177 {approx = true} : vector<8x1xf32> -> vector<8x1xf32>
    %179 = vector.broadcast %178 : vector<8x1xf32> to vector<8x8xf32>
    %180 = arith.mulf %175, %179 : vector<8x8xf32>
    %181 = arith.truncf %180 : vector<8x8xf32> to vector<8x8xbf16>
    %182 = arith.truncf %163 : vector<8x8xf32> to vector<8x8xbf16>
    %cst_47 = arith.constant dense<0.000000e+00> : vector<8x8xf32>
    %183 = tpu.matmul %181, %182, %cst_47 {dimension_numbers = #tpu.dot_dimension_numbers<[1], [0], [0], [1], [0, 0, 1, 1], [], []>} : vector<8x8xbf16>, vector<8x8xbf16>, vector<8x8xf32> -> vector<8x8xf32>
    %184 = vector.extract_strided_slice %135 {offsets = [0, 16], sizes = [8, 8], strides = [1, 1]} : vector<8x32xf32> to vector<8x8xf32>
    %185 = vector.extract_strided_slice %136 {offsets = [0, 16], sizes = [8, 8], strides = [1, 1]} : vector<8x32xf32> to vector<8x8xf32>
    %186 = vector.extract_strided_slice %137 {offsets = [0, 16], sizes = [8, 8], strides = [1, 1]} : vector<8x32xf32> to vector<8x8xf32>
    %187 = arith.truncf %184 : vector<8x8xf32> to vector<8x8xbf16>
    %188 = arith.truncf %185 : vector<8x8xf32> to vector<8x8xbf16>
    %cst_48 = arith.constant dense<0.000000e+00> : vector<8x8xf32>
    %189 = tpu.matmul %187, %188, %cst_48 {dimension_numbers = #tpu.dot_dimension_numbers<[1], [1], [0], [0], [0, 0, 1, 0], [], []>} : vector<8x8xbf16>, vector<8x8xbf16>, vector<8x8xf32> -> vector<8x8xf32>
    %cst_49 = arith.constant 0.353553385 : f32
    %190 = vector.broadcast %cst_49 : f32 to vector<8x8xf32>
    %191 = arith.mulf %189, %190 : vector<8x8xf32>
    %192 = vector.broadcast %134 : vector<1x8xf32> to vector<8x8xf32>
    %193 = arith.addf %191, %192 : vector<8x8xf32>
    %cst_50 = arith.constant dense<0xFF800000> : vector<8xf32>
    %194 = vector.multi_reduction <maximumf>, %193, %cst_50 [1] : vector<8x8xf32> to vector<8xf32>
    %195 = vector.shape_cast %194 : vector<8xf32> to vector<8x1xf32>
    %196 = vector.broadcast %195 : vector<8x1xf32> to vector<8x8xf32>
    %197 = arith.subf %193, %196 : vector<8x8xf32>
    %198 = math.exp %197 : vector<8x8xf32>
    %cst_51 = arith.constant dense<0.000000e+00> : vector<8xf32>
    %199 = vector.multi_reduction <add>, %198, %cst_51 [1] : vector<8x8xf32> to vector<8xf32>
    %200 = vector.shape_cast %199 : vector<8xf32> to vector<8x1xf32>
    %201 = tpu.reciprocal %200 {approx = true} : vector<8x1xf32> -> vector<8x1xf32>
    %202 = vector.broadcast %201 : vector<8x1xf32> to vector<8x8xf32>
    %203 = arith.mulf %198, %202 : vector<8x8xf32>
    %204 = arith.truncf %203 : vector<8x8xf32> to vector<8x8xbf16>
    %205 = arith.truncf %186 : vector<8x8xf32> to vector<8x8xbf16>
    %cst_52 = arith.constant dense<0.000000e+00> : vector<8x8xf32>
    %206 = tpu.matmul %204, %205, %cst_52 {dimension_numbers = #tpu.dot_dimension_numbers<[1], [0], [0], [1], [0, 0, 1, 1], [], []>} : vector<8x8xbf16>, vector<8x8xbf16>, vector<8x8xf32> -> vector<8x8xf32>
    %207 = vector.extract_strided_slice %135 {offsets = [0, 24], sizes = [8, 8], strides = [1, 1]} : vector<8x32xf32> to vector<8x8xf32>
    %208 = vector.extract_strided_slice %136 {offsets = [0, 24], sizes = [8, 8], strides = [1, 1]} : vector<8x32xf32> to vector<8x8xf32>
    %209 = vector.extract_strided_slice %137 {offsets = [0, 24], sizes = [8, 8], strides = [1, 1]} : vector<8x32xf32> to vector<8x8xf32>
    %210 = arith.truncf %207 : vector<8x8xf32> to vector<8x8xbf16>
    %211 = arith.truncf %208 : vector<8x8xf32> to vector<8x8xbf16>
    %cst_53 = arith.constant dense<0.000000e+00> : vector<8x8xf32>
    %212 = tpu.matmul %210, %211, %cst_53 {dimension_numbers = #tpu.dot_dimension_numbers<[1], [1], [0], [0], [0, 0, 1, 0], [], []>} : vector<8x8xbf16>, vector<8x8xbf16>, vector<8x8xf32> -> vector<8x8xf32>
    %cst_54 = arith.constant 0.353553385 : f32
    %213 = vector.broadcast %cst_54 : f32 to vector<8x8xf32>
    %214 = arith.mulf %212, %213 : vector<8x8xf32>
    %215 = vector.broadcast %134 : vector<1x8xf32> to vector<8x8xf32>
    %216 = arith.addf %214, %215 : vector<8x8xf32>
    %cst_55 = arith.constant dense<0xFF800000> : vector<8xf32>
    %217 = vector.multi_reduction <maximumf>, %216, %cst_55 [1] : vector<8x8xf32> to vector<8xf32>
    %218 = vector.shape_cast %217 : vector<8xf32> to vector<8x1xf32>
    %219 = vector.broadcast %218 : vector<8x1xf32> to vector<8x8xf32>
    %220 = arith.subf %216, %219 : vector<8x8xf32>
    %221 = math.exp %220 : vector<8x8xf32>
    %cst_56 = arith.constant dense<0.000000e+00> : vector<8xf32>
    %222 = vector.multi_reduction <add>, %221, %cst_56 [1] : vector<8x8xf32> to vector<8xf32>
    %223 = vector.shape_cast %222 : vector<8xf32> to vector<8x1xf32>
    %224 = tpu.reciprocal %223 {approx = true} : vector<8x1xf32> -> vector<8x1xf32>
    %225 = vector.broadcast %224 : vector<8x1xf32> to vector<8x8xf32>
    %226 = arith.mulf %221, %225 : vector<8x8xf32>
    %227 = arith.truncf %226 : vector<8x8xf32> to vector<8x8xbf16>
    %228 = arith.truncf %209 : vector<8x8xf32> to vector<8x8xbf16>
    %cst_57 = arith.constant dense<0.000000e+00> : vector<8x8xf32>
    %229 = tpu.matmul %227, %228, %cst_57 {dimension_numbers = #tpu.dot_dimension_numbers<[1], [0], [0], [1], [0, 0, 1, 1], [], []>} : vector<8x8xbf16>, vector<8x8xbf16>, vector<8x8xf32> -> vector<8x8xf32>
    %230 = tpu.concatenate %160, %183, %206, %229 in 1 : vector<8x8xf32>, vector<8x8xf32>, vector<8x8xf32>, vector<8x8xf32> -> vector<8x32xf32>
    %231 = tpu.concatenate %133, %230 in 0 : vector<8x32xf32>, vector<8x32xf32> -> vector<16x32xf32>
    %c0_58 = arith.constant 0 : index
    %c0_59 = arith.constant 0 : index
    %c0_60 = arith.constant 0 : index
    %232 = vector.load %arg6[%c0_58, %c0_59, %c0_60] : memref<2x32x32xbf16, #tpu.memory_space<vmem>>, vector<1x32x32xbf16>
    %233 = vector.shape_cast %232 : vector<1x32x32xbf16> to vector<32x32xbf16>
    %234 = arith.truncf %231 : vector<16x32xf32> to vector<16x32xbf16>
    %cst_61 = arith.constant dense<0.000000e+00> : vector<16x32xf32>
    %235 = tpu.matmul %234, %233, %cst_61 {dimension_numbers = #tpu.dot_dimension_numbers<[1], [0], [0], [1], [0, 0, 1, 1], [], []>} : vector<16x32xbf16>, vector<32x32xbf16>, vector<16x32xf32> -> vector<16x32xf32>
    %c0_62 = arith.constant 0 : index
    %c0_63 = arith.constant 0 : index
    %c0_64 = arith.constant 0 : index
    %236 = vector.load %arg7[%c0_62, %c0_63, %c0_64] : memref<2x1x32xf32, #tpu.memory_space<vmem>>, vector<1x1x32xf32>
    %237 = vector.shape_cast %236 : vector<1x1x32xf32> to vector<1x32xf32>
    %238 = vector.broadcast %237 : vector<1x32xf32> to vector<16x32xf32>
    %239 = arith.addf %235, %238 : vector<16x32xf32>
    %240 = arith.addf %239, %25 : vector<16x32xf32>
    %c0_65 = arith.constant 0 : index
    %c0_66 = arith.constant 0 : index
    %c0_67 = arith.constant 0 : index
    %241 = vector.load %arg8[%c0_65, %c0_66, %c0_67] : memref<2x1x32xf32, #tpu.memory_space<vmem>>, vector<1x1x32xf32>
    %242 = vector.shape_cast %241 : vector<1x1x32xf32> to vector<1x32xf32>
    %c0_68 = arith.constant 0 : index
    %c0_69 = arith.constant 0 : index
    %c0_70 = arith.constant 0 : index
    %243 = vector.load %arg9[%c0_68, %c0_69, %c0_70] : memref<2x1x32xf32, #tpu.memory_space<vmem>>, vector<1x1x32xf32>
    %244 = vector.shape_cast %243 : vector<1x1x32xf32> to vector<1x32xf32>
    %cst_71 = arith.constant dense<0.000000e+00> : vector<16xf32>
    %245 = vector.multi_reduction <add>, %240, %cst_71 [1] : vector<16x32xf32> to vector<16xf32>
    %246 = vector.shape_cast %245 : vector<16xf32> to vector<16x1xf32>
    %cst_72 = arith.constant 3.200000e+01 : f32
    %247 = vector.broadcast %cst_72 : f32 to vector<16x1xf32>
    %248 = arith.divf %246, %247 : vector<16x1xf32>
    %249 = vector.broadcast %248 : vector<16x1xf32> to vector<16x32xf32>
    %250 = arith.subf %240, %249 : vector<16x32xf32>
    %251 = arith.mulf %250, %250 : vector<16x32xf32>
    %cst_73 = arith.constant dense<0.000000e+00> : vector<16xf32>
    %252 = vector.multi_reduction <add>, %251, %cst_73 [1] : vector<16x32xf32> to vector<16xf32>
    %253 = vector.shape_cast %252 : vector<16xf32> to vector<16x1xf32>
    %cst_74 = arith.constant 3.200000e+01 : f32
    %254 = vector.broadcast %cst_74 : f32 to vector<16x1xf32>
    %255 = arith.divf %253, %254 : vector<16x1xf32>
    %256 = vector.broadcast %248 : vector<16x1xf32> to vector<16x32xf32>
    %257 = arith.subf %240, %256 : vector<16x32xf32>
    %cst_75 = arith.constant 9.99999996E-13 : f32
    %258 = vector.broadcast %cst_75 : f32 to vector<16x1xf32>
    %259 = arith.addf %255, %258 : vector<16x1xf32>
    %260 = math.rsqrt %259 : vector<16x1xf32>
    %261 = vector.broadcast %260 : vector<16x1xf32> to vector<16x32xf32>
    %262 = arith.mulf %257, %261 : vector<16x32xf32>
    %263 = vector.broadcast %242 : vector<1x32xf32> to vector<16x32xf32>
    %264 = arith.mulf %262, %263 : vector<16x32xf32>
    %265 = vector.broadcast %244 : vector<1x32xf32> to vector<16x32xf32>
    %266 = arith.addf %264, %265 : vector<16x32xf32>
    %c0_76 = arith.constant 0 : index
    %c0_77 = arith.constant 0 : index
    %c0_78 = arith.constant 0 : index
    %267 = vector.load %arg10[%c0_76, %c0_77, %c0_78] : memref<2x32x64xbf16, #tpu.memory_space<vmem>>, vector<1x32x64xbf16>
    %268 = vector.shape_cast %267 : vector<1x32x64xbf16> to vector<32x64xbf16>
    %269 = arith.truncf %266 : vector<16x32xf32> to vector<16x32xbf16>
    %cst_79 = arith.constant dense<0.000000e+00> : vector<16x64xf32>
    %270 = tpu.matmul %269, %268, %cst_79 {dimension_numbers = #tpu.dot_dimension_numbers<[1], [0], [0], [1], [0, 0, 1, 1], [], []>} : vector<16x32xbf16>, vector<32x64xbf16>, vector<16x64xf32> -> vector<16x64xf32>
    %c0_80 = arith.constant 0 : index
    %c0_81 = arith.constant 0 : index
    %c0_82 = arith.constant 0 : index
    %271 = vector.load %arg11[%c0_80, %c0_81, %c0_82] : memref<2x1x64xf32, #tpu.memory_space<vmem>>, vector<1x1x64xf32>
    %272 = vector.shape_cast %271 : vector<1x1x64xf32> to vector<1x64xf32>
    %273 = vector.broadcast %272 : vector<1x64xf32> to vector<16x64xf32>
    %274 = arith.addf %270, %273 : vector<16x64xf32>
    %cst_83 = arith.constant 5.000000e-01 : f32
    %275 = vector.broadcast %cst_83 : f32 to vector<16x64xf32>
    %276 = arith.mulf %275, %274 : vector<16x64xf32>
    %cst_84 = arith.constant 4.471500e-02 : f32
    %277 = vector.broadcast %cst_84 : f32 to vector<16x64xf32>
    %278 = arith.mulf %277, %274 : vector<16x64xf32>
    %279 = arith.mulf %278, %274 : vector<16x64xf32>
    %280 = arith.mulf %279, %274 : vector<16x64xf32>
    %281 = arith.addf %274, %280 : vector<16x64xf32>
    %cst_85 = arith.constant 0.797884583 : f32
    %282 = vector.broadcast %cst_85 : f32 to vector<16x64xf32>
    %283 = arith.mulf %282, %281 : vector<16x64xf32>
    %284 = math.tanh %283 : vector<16x64xf32>
    %cst_86 = arith.constant 1.000000e+00 : f32
    %285 = vector.broadcast %cst_86 : f32 to vector<16x64xf32>
    %286 = arith.addf %285, %284 : vector<16x64xf32>
    %287 = arith.mulf %276, %286 : vector<16x64xf32>
    %c0_87 = arith.constant 0 : index
    %c0_88 = arith.constant 0 : index
    %c0_89 = arith.constant 0 : index
    %288 = vector.load %arg12[%c0_87, %c0_88, %c0_89] : memref<2x64x32xbf16, #tpu.memory_space<vmem>>, vector<1x64x32xbf16>
    %289 = vector.shape_cast %288 : vector<1x64x32xbf16> to vector<64x32xbf16>
    %290 = arith.truncf %287 : vector<16x64xf32> to vector<16x64xbf16>
    %cst_90 = arith.constant dense<0.000000e+00> : vector<16x32xf32>
    %291 = tpu.matmul %290, %289, %cst_90 {dimension_numbers = #tpu.dot_dimension_numbers<[1], [0], [0], [1], [0, 0, 1, 1], [], []>} : vector<16x64xbf16>, vector<64x32xbf16>, vector<16x32xf32> -> vector<16x32xf32>
    %c0_91 = arith.constant 0 : index
    %c0_92 = arith.constant 0 : index
    %c0_93 = arith.constant 0 : index
    %292 = vector.load %arg13[%c0_91, %c0_92, %c0_93] : memref<2x1x32xf32, #tpu.memory_space<vmem>>, vector<1x1x32xf32>
    %293 = vector.shape_cast %292 : vector<1x1x32xf32> to vector<1x32xf32>
    %294 = vector.broadcast %293 : vector<1x32xf32> to vector<16x32xf32>
    %295 = arith.addf %291, %294 : vector<16x32xf32>
    %296 = arith.addf %295, %266 : vector<16x32xf32>
    %c0_94 = arith.constant 0 : index
    %c0_95 = arith.constant 0 : index
    %c0_96 = arith.constant 0 : index
    %297 = vector.load %arg14[%c0_94, %c0_95, %c0_96] : memref<2x1x32xf32, #tpu.memory_space<vmem>>, vector<1x1x32xf32>
    %298 = vector.shape_cast %297 : vector<1x1x32xf32> to vector<1x32xf32>
    %c0_97 = arith.constant 0 : index
    %c0_98 = arith.constant 0 : index
    %c0_99 = arith.constant 0 : index
    %299 = vector.load %arg15[%c0_97, %c0_98, %c0_99] : memref<2x1x32xf32, #tpu.memory_space<vmem>>, vector<1x1x32xf32>
    %300 = vector.shape_cast %299 : vector<1x1x32xf32> to vector<1x32xf32>
    %cst_100 = arith.constant dense<0.000000e+00> : vector<16xf32>
    %301 = vector.multi_reduction <add>, %296, %cst_100 [1] : vector<16x32xf32> to vector<16xf32>
    %302 = vector.shape_cast %301 : vector<16xf32> to vector<16x1xf32>
    %cst_101 = arith.constant 3.200000e+01 : f32
    %303 = vector.broadcast %cst_101 : f32 to vector<16x1xf32>
    %304 = arith.divf %302, %303 : vector<16x1xf32>
    %305 = vector.broadcast %304 : vector<16x1xf32> to vector<16x32xf32>
    %306 = arith.subf %296, %305 : vector<16x32xf32>
    %307 = arith.mulf %306, %306 : vector<16x32xf32>
    %cst_102 = arith.constant dense<0.000000e+00> : vector<16xf32>
    %308 = vector.multi_reduction <add>, %307, %cst_102 [1] : vector<16x32xf32> to vector<16xf32>
    %309 = vector.shape_cast %308 : vector<16xf32> to vector<16x1xf32>
    %cst_103 = arith.constant 3.200000e+01 : f32
    %310 = vector.broadcast %cst_103 : f32 to vector<16x1xf32>
    %311 = arith.divf %309, %310 : vector<16x1xf32>
    %312 = vector.broadcast %304 : vector<16x1xf32> to vector<16x32xf32>
    %313 = arith.subf %296, %312 : vector<16x32xf32>
    %cst_104 = arith.constant 9.99999996E-13 : f32
    %314 = vector.broadcast %cst_104 : f32 to vector<16x1xf32>
    %315 = arith.addf %311, %314 : vector<16x1xf32>
    %316 = math.rsqrt %315 : vector<16x1xf32>
    %317 = vector.broadcast %316 : vector<16x1xf32> to vector<16x32xf32>
    %318 = arith.mulf %313, %317 : vector<16x32xf32>
    %319 = vector.broadcast %298 : vector<1x32xf32> to vector<16x32xf32>
    %320 = arith.mulf %318, %319 : vector<16x32xf32>
    %321 = vector.broadcast %300 : vector<1x32xf32> to vector<16x32xf32>
    %322 = arith.addf %320, %321 : vector<16x32xf32>
    %c1 = arith.constant 1 : index
    %c0_105 = arith.constant 0 : index
    %c0_106 = arith.constant 0 : index
    %323 = vector.load %arg4[%c1, %c0_105, %c0_106] : memref<2x32x96xbf16, #tpu.memory_space<vmem>>, vector<1x32x96xbf16>
    %324 = vector.shape_cast %323 : vector<1x32x96xbf16> to vector<32x96xbf16>
    %325 = arith.truncf %322 : vector<16x32xf32> to vector<16x32xbf16>
    %cst_107 = arith.constant dense<0.000000e+00> : vector<16x96xf32>
    %326 = tpu.matmul %325, %324, %cst_107 {dimension_numbers = #tpu.dot_dimension_numbers<[1], [0], [0], [1], [0, 0, 1, 1], [], []>} : vector<16x32xbf16>, vector<32x96xbf16>, vector<16x96xf32> -> vector<16x96xf32>
    %c1_108 = arith.constant 1 : index
    %c0_109 = arith.constant 0 : index
    %c0_110 = arith.constant 0 : index
    %327 = vector.load %arg5[%c1_108, %c0_109, %c0_110] : memref<2x1x96xf32, #tpu.memory_space<vmem>>, vector<1x1x96xf32>
    %328 = vector.shape_cast %327 : vector<1x1x96xf32> to vector<1x96xf32>
    %329 = vector.broadcast %328 : vector<1x96xf32> to vector<16x96xf32>
    %330 = arith.addf %326, %329 : vector<16x96xf32>
    %331 = vector.extract_strided_slice %330 {offsets = [0, 0], sizes = [16, 32], strides = [1, 1]} : vector<16x96xf32> to vector<16x32xf32>
    %332 = vector.extract_strided_slice %330 {offsets = [0, 32], sizes = [16, 32], strides = [1, 1]} : vector<16x96xf32> to vector<16x32xf32>
    %333 = vector.extract_strided_slice %330 {offsets = [0, 64], sizes = [16, 32], strides = [1, 1]} : vector<16x96xf32> to vector<16x32xf32>
    %334 = vector.extract_strided_slice %0 {offsets = [0, 0], sizes = [1, 8], strides = [1, 1]} : vector<2x8xf32> to vector<1x8xf32>
    %335 = vector.extract_strided_slice %331 {offsets = [0, 0], sizes = [8, 32], strides = [1, 1]} : vector<16x32xf32> to vector<8x32xf32>
    %336 = vector.extract_strided_slice %332 {offsets = [0, 0], sizes = [8, 32], strides = [1, 1]} : vector<16x32xf32> to vector<8x32xf32>
    %337 = vector.extract_strided_slice %333 {offsets = [0, 0], sizes = [8, 32], strides = [1, 1]} : vector<16x32xf32> to vector<8x32xf32>
    %338 = vector.extract_strided_slice %335 {offsets = [0, 0], sizes = [8, 8], strides = [1, 1]} : vector<8x32xf32> to vector<8x8xf32>
    %339 = vector.extract_strided_slice %336 {offsets = [0, 0], sizes = [8, 8], strides = [1, 1]} : vector<8x32xf32> to vector<8x8xf32>
    %340 = vector.extract_strided_slice %337 {offsets = [0, 0], sizes = [8, 8], strides = [1, 1]} : vector<8x32xf32> to vector<8x8xf32>
    %341 = arith.truncf %338 : vector<8x8xf32> to vector<8x8xbf16>
    %342 = arith.truncf %339 : vector<8x8xf32> to vector<8x8xbf16>
    %cst_111 = arith.constant dense<0.000000e+00> : vector<8x8xf32>
    %343 = tpu.matmul %341, %342, %cst_111 {dimension_numbers = #tpu.dot_dimension_numbers<[1], [1], [0], [0], [0, 0, 1, 0], [], []>} : vector<8x8xbf16>, vector<8x8xbf16>, vector<8x8xf32> -> vector<8x8xf32>
    %cst_112 = arith.constant 0.353553385 : f32
    %344 = vector.broadcast %cst_112 : f32 to vector<8x8xf32>
    %345 = arith.mulf %343, %344 : vector<8x8xf32>
    %346 = vector.broadcast %334 : vector<1x8xf32> to vector<8x8xf32>
    %347 = arith.addf %345, %346 : vector<8x8xf32>
    %cst_113 = arith.constant dense<0xFF800000> : vector<8xf32>
    %348 = vector.multi_reduction <maximumf>, %347, %cst_113 [1] : vector<8x8xf32> to vector<8xf32>
    %349 = vector.shape_cast %348 : vector<8xf32> to vector<8x1xf32>
    %350 = vector.broadcast %349 : vector<8x1xf32> to vector<8x8xf32>
    %351 = arith.subf %347, %350 : vector<8x8xf32>
    %352 = math.exp %351 : vector<8x8xf32>
    %cst_114 = arith.constant dense<0.000000e+00> : vector<8xf32>
    %353 = vector.multi_reduction <add>, %352, %cst_114 [1] : vector<8x8xf32> to vector<8xf32>
    %354 = vector.shape_cast %353 : vector<8xf32> to vector<8x1xf32>
    %355 = tpu.reciprocal %354 {approx = true} : vector<8x1xf32> -> vector<8x1xf32>
    %356 = vector.broadcast %355 : vector<8x1xf32> to vector<8x8xf32>
    %357 = arith.mulf %352, %356 : vector<8x8xf32>
    %358 = arith.truncf %357 : vector<8x8xf32> to vector<8x8xbf16>
    %359 = arith.truncf %340 : vector<8x8xf32> to vector<8x8xbf16>
    %cst_115 = arith.constant dense<0.000000e+00> : vector<8x8xf32>
    %360 = tpu.matmul %358, %359, %cst_115 {dimension_numbers = #tpu.dot_dimension_numbers<[1], [0], [0], [1], [0, 0, 1, 1], [], []>} : vector<8x8xbf16>, vector<8x8xbf16>, vector<8x8xf32> -> vector<8x8xf32>
    %361 = vector.extract_strided_slice %335 {offsets = [0, 8], sizes = [8, 8], strides = [1, 1]} : vector<8x32xf32> to vector<8x8xf32>
    %362 = vector.extract_strided_slice %336 {offsets = [0, 8], sizes = [8, 8], strides = [1, 1]} : vector<8x32xf32> to vector<8x8xf32>
    %363 = vector.extract_strided_slice %337 {offsets = [0, 8], sizes = [8, 8], strides = [1, 1]} : vector<8x32xf32> to vector<8x8xf32>
    %364 = arith.truncf %361 : vector<8x8xf32> to vector<8x8xbf16>
    %365 = arith.truncf %362 : vector<8x8xf32> to vector<8x8xbf16>
    %cst_116 = arith.constant dense<0.000000e+00> : vector<8x8xf32>
    %366 = tpu.matmul %364, %365, %cst_116 {dimension_numbers = #tpu.dot_dimension_numbers<[1], [1], [0], [0], [0, 0, 1, 0], [], []>} : vector<8x8xbf16>, vector<8x8xbf16>, vector<8x8xf32> -> vector<8x8xf32>
    %cst_117 = arith.constant 0.353553385 : f32
    %367 = vector.broadcast %cst_117 : f32 to vector<8x8xf32>
    %368 = arith.mulf %366, %367 : vector<8x8xf32>
    %369 = vector.broadcast %334 : vector<1x8xf32> to vector<8x8xf32>
    %370 = arith.addf %368, %369 : vector<8x8xf32>
    %cst_118 = arith.constant dense<0xFF800000> : vector<8xf32>
    %371 = vector.multi_reduction <maximumf>, %370, %cst_118 [1] : vector<8x8xf32> to vector<8xf32>
    %372 = vector.shape_cast %371 : vector<8xf32> to vector<8x1xf32>
    %373 = vector.broadcast %372 : vector<8x1xf32> to vector<8x8xf32>
    %374 = arith.subf %370, %373 : vector<8x8xf32>
    %375 = math.exp %374 : vector<8x8xf32>
    %cst_119 = arith.constant dense<0.000000e+00> : vector<8xf32>
    %376 = vector.multi_reduction <add>, %375, %cst_119 [1] : vector<8x8xf32> to vector<8xf32>
    %377 = vector.shape_cast %376 : vector<8xf32> to vector<8x1xf32>
    %378 = tpu.reciprocal %377 {approx = true} : vector<8x1xf32> -> vector<8x1xf32>
    %379 = vector.broadcast %378 : vector<8x1xf32> to vector<8x8xf32>
    %380 = arith.mulf %375, %379 : vector<8x8xf32>
    %381 = arith.truncf %380 : vector<8x8xf32> to vector<8x8xbf16>
    %382 = arith.truncf %363 : vector<8x8xf32> to vector<8x8xbf16>
    %cst_120 = arith.constant dense<0.000000e+00> : vector<8x8xf32>
    %383 = tpu.matmul %381, %382, %cst_120 {dimension_numbers = #tpu.dot_dimension_numbers<[1], [0], [0], [1], [0, 0, 1, 1], [], []>} : vector<8x8xbf16>, vector<8x8xbf16>, vector<8x8xf32> -> vector<8x8xf32>
    %384 = vector.extract_strided_slice %335 {offsets = [0, 16], sizes = [8, 8], strides = [1, 1]} : vector<8x32xf32> to vector<8x8xf32>
    %385 = vector.extract_strided_slice %336 {offsets = [0, 16], sizes = [8, 8], strides = [1, 1]} : vector<8x32xf32> to vector<8x8xf32>
    %386 = vector.extract_strided_slice %337 {offsets = [0, 16], sizes = [8, 8], strides = [1, 1]} : vector<8x32xf32> to vector<8x8xf32>
    %387 = arith.truncf %384 : vector<8x8xf32> to vector<8x8xbf16>
    %388 = arith.truncf %385 : vector<8x8xf32> to vector<8x8xbf16>
    %cst_121 = arith.constant dense<0.000000e+00> : vector<8x8xf32>
    %389 = tpu.matmul %387, %388, %cst_121 {dimension_numbers = #tpu.dot_dimension_numbers<[1], [1], [0], [0], [0, 0, 1, 0], [], []>} : vector<8x8xbf16>, vector<8x8xbf16>, vector<8x8xf32> -> vector<8x8xf32>
    %cst_122 = arith.constant 0.353553385 : f32
    %390 = vector.broadcast %cst_122 : f32 to vector<8x8xf32>
    %391 = arith.mulf %389, %390 : vector<8x8xf32>
    %392 = vector.broadcast %334 : vector<1x8xf32> to vector<8x8xf32>
    %393 = arith.addf %391, %392 : vector<8x8xf32>
    %cst_123 = arith.constant dense<0xFF800000> : vector<8xf32>
    %394 = vector.multi_reduction <maximumf>, %393, %cst_123 [1] : vector<8x8xf32> to vector<8xf32>
    %395 = vector.shape_cast %394 : vector<8xf32> to vector<8x1xf32>
    %396 = vector.broadcast %395 : vector<8x1xf32> to vector<8x8xf32>
    %397 = arith.subf %393, %396 : vector<8x8xf32>
    %398 = math.exp %397 : vector<8x8xf32>
    %cst_124 = arith.constant dense<0.000000e+00> : vector<8xf32>
    %399 = vector.multi_reduction <add>, %398, %cst_124 [1] : vector<8x8xf32> to vector<8xf32>
    %400 = vector.shape_cast %399 : vector<8xf32> to vector<8x1xf32>
    %401 = tpu.reciprocal %400 {approx = true} : vector<8x1xf32> -> vector<8x1xf32>
    %402 = vector.broadcast %401 : vector<8x1xf32> to vector<8x8xf32>
    %403 = arith.mulf %398, %402 : vector<8x8xf32>
    %404 = arith.truncf %403 : vector<8x8xf32> to vector<8x8xbf16>
    %405 = arith.truncf %386 : vector<8x8xf32> to vector<8x8xbf16>
    %cst_125 = arith.constant dense<0.000000e+00> : vector<8x8xf32>
    %406 = tpu.matmul %404, %405, %cst_125 {dimension_numbers = #tpu.dot_dimension_numbers<[1], [0], [0], [1], [0, 0, 1, 1], [], []>} : vector<8x8xbf16>, vector<8x8xbf16>, vector<8x8xf32> -> vector<8x8xf32>
    %407 = vector.extract_strided_slice %335 {offsets = [0, 24], sizes = [8, 8], strides = [1, 1]} : vector<8x32xf32> to vector<8x8xf32>
    %408 = vector.extract_strided_slice %336 {offsets = [0, 24], sizes = [8, 8], strides = [1, 1]} : vector<8x32xf32> to vector<8x8xf32>
    %409 = vector.extract_strided_slice %337 {offsets = [0, 24], sizes = [8, 8], strides = [1, 1]} : vector<8x32xf32> to vector<8x8xf32>
    %410 = arith.truncf %407 : vector<8x8xf32> to vector<8x8xbf16>
    %411 = arith.truncf %408 : vector<8x8xf32> to vector<8x8xbf16>
    %cst_126 = arith.constant dense<0.000000e+00> : vector<8x8xf32>
    %412 = tpu.matmul %410, %411, %cst_126 {dimension_numbers = #tpu.dot_dimension_numbers<[1], [1], [0], [0], [0, 0, 1, 0], [], []>} : vector<8x8xbf16>, vector<8x8xbf16>, vector<8x8xf32> -> vector<8x8xf32>
    %cst_127 = arith.constant 0.353553385 : f32
    %413 = vector.broadcast %cst_127 : f32 to vector<8x8xf32>
    %414 = arith.mulf %412, %413 : vector<8x8xf32>
    %415 = vector.broadcast %334 : vector<1x8xf32> to vector<8x8xf32>
    %416 = arith.addf %414, %415 : vector<8x8xf32>
    %cst_128 = arith.constant dense<0xFF800000> : vector<8xf32>
    %417 = vector.multi_reduction <maximumf>, %416, %cst_128 [1] : vector<8x8xf32> to vector<8xf32>
    %418 = vector.shape_cast %417 : vector<8xf32> to vector<8x1xf32>
    %419 = vector.broadcast %418 : vector<8x1xf32> to vector<8x8xf32>
    %420 = arith.subf %416, %419 : vector<8x8xf32>
    %421 = math.exp %420 : vector<8x8xf32>
    %cst_129 = arith.constant dense<0.000000e+00> : vector<8xf32>
    %422 = vector.multi_reduction <add>, %421, %cst_129 [1] : vector<8x8xf32> to vector<8xf32>
    %423 = vector.shape_cast %422 : vector<8xf32> to vector<8x1xf32>
    %424 = tpu.reciprocal %423 {approx = true} : vector<8x1xf32> -> vector<8x1xf32>
    %425 = vector.broadcast %424 : vector<8x1xf32> to vector<8x8xf32>
    %426 = arith.mulf %421, %425 : vector<8x8xf32>
    %427 = arith.truncf %426 : vector<8x8xf32> to vector<8x8xbf16>
    %428 = arith.truncf %409 : vector<8x8xf32> to vector<8x8xbf16>
    %cst_130 = arith.constant dense<0.000000e+00> : vector<8x8xf32>
    %429 = tpu.matmul %427, %428, %cst_130 {dimension_numbers = #tpu.dot_dimension_numbers<[1], [0], [0], [1], [0, 0, 1, 1], [], []>} : vector<8x8xbf16>, vector<8x8xbf16>, vector<8x8xf32> -> vector<8x8xf32>
    %430 = tpu.concatenate %360, %383, %406, %429 in 1 : vector<8x8xf32>, vector<8x8xf32>, vector<8x8xf32>, vector<8x8xf32> -> vector<8x32xf32>
    %431 = vector.extract_strided_slice %0 {offsets = [1, 0], sizes = [1, 8], strides = [1, 1]} : vector<2x8xf32> to vector<1x8xf32>
    %432 = vector.extract_strided_slice %331 {offsets = [8, 0], sizes = [8, 32], strides = [1, 1]} : vector<16x32xf32> to vector<8x32xf32>
    %433 = vector.extract_strided_slice %332 {offsets = [8, 0], sizes = [8, 32], strides = [1, 1]} : vector<16x32xf32> to vector<8x32xf32>
    %434 = vector.extract_strided_slice %333 {offsets = [8, 0], sizes = [8, 32], strides = [1, 1]} : vector<16x32xf32> to vector<8x32xf32>
    %435 = vector.extract_strided_slice %432 {offsets = [0, 0], sizes = [8, 8], strides = [1, 1]} : vector<8x32xf32> to vector<8x8xf32>
    %436 = vector.extract_strided_slice %433 {offsets = [0, 0], sizes = [8, 8], strides = [1, 1]} : vector<8x32xf32> to vector<8x8xf32>
    %437 = vector.extract_strided_slice %434 {offsets = [0, 0], sizes = [8, 8], strides = [1, 1]} : vector<8x32xf32> to vector<8x8xf32>
    %438 = arith.truncf %435 : vector<8x8xf32> to vector<8x8xbf16>
    %439 = arith.truncf %436 : vector<8x8xf32> to vector<8x8xbf16>
    %cst_131 = arith.constant dense<0.000000e+00> : vector<8x8xf32>
    %440 = tpu.matmul %438, %439, %cst_131 {dimension_numbers = #tpu.dot_dimension_numbers<[1], [1], [0], [0], [0, 0, 1, 0], [], []>} : vector<8x8xbf16>, vector<8x8xbf16>, vector<8x8xf32> -> vector<8x8xf32>
    %cst_132 = arith.constant 0.353553385 : f32
    %441 = vector.broadcast %cst_132 : f32 to vector<8x8xf32>
    %442 = arith.mulf %440, %441 : vector<8x8xf32>
    %443 = vector.broadcast %431 : vector<1x8xf32> to vector<8x8xf32>
    %444 = arith.addf %442, %443 : vector<8x8xf32>
    %cst_133 = arith.constant dense<0xFF800000> : vector<8xf32>
    %445 = vector.multi_reduction <maximumf>, %444, %cst_133 [1] : vector<8x8xf32> to vector<8xf32>
    %446 = vector.shape_cast %445 : vector<8xf32> to vector<8x1xf32>
    %447 = vector.broadcast %446 : vector<8x1xf32> to vector<8x8xf32>
    %448 = arith.subf %444, %447 : vector<8x8xf32>
    %449 = math.exp %448 : vector<8x8xf32>
    %cst_134 = arith.constant dense<0.000000e+00> : vector<8xf32>
    %450 = vector.multi_reduction <add>, %449, %cst_134 [1] : vector<8x8xf32> to vector<8xf32>
    %451 = vector.shape_cast %450 : vector<8xf32> to vector<8x1xf32>
    %452 = tpu.reciprocal %451 {approx = true} : vector<8x1xf32> -> vector<8x1xf32>
    %453 = vector.broadcast %452 : vector<8x1xf32> to vector<8x8xf32>
    %454 = arith.mulf %449, %453 : vector<8x8xf32>
    %455 = arith.truncf %454 : vector<8x8xf32> to vector<8x8xbf16>
    %456 = arith.truncf %437 : vector<8x8xf32> to vector<8x8xbf16>
    %cst_135 = arith.constant dense<0.000000e+00> : vector<8x8xf32>
    %457 = tpu.matmul %455, %456, %cst_135 {dimension_numbers = #tpu.dot_dimension_numbers<[1], [0], [0], [1], [0, 0, 1, 1], [], []>} : vector<8x8xbf16>, vector<8x8xbf16>, vector<8x8xf32> -> vector<8x8xf32>
    %458 = vector.extract_strided_slice %432 {offsets = [0, 8], sizes = [8, 8], strides = [1, 1]} : vector<8x32xf32> to vector<8x8xf32>
    %459 = vector.extract_strided_slice %433 {offsets = [0, 8], sizes = [8, 8], strides = [1, 1]} : vector<8x32xf32> to vector<8x8xf32>
    %460 = vector.extract_strided_slice %434 {offsets = [0, 8], sizes = [8, 8], strides = [1, 1]} : vector<8x32xf32> to vector<8x8xf32>
    %461 = arith.truncf %458 : vector<8x8xf32> to vector<8x8xbf16>
    %462 = arith.truncf %459 : vector<8x8xf32> to vector<8x8xbf16>
    %cst_136 = arith.constant dense<0.000000e+00> : vector<8x8xf32>
    %463 = tpu.matmul %461, %462, %cst_136 {dimension_numbers = #tpu.dot_dimension_numbers<[1], [1], [0], [0], [0, 0, 1, 0], [], []>} : vector<8x8xbf16>, vector<8x8xbf16>, vector<8x8xf32> -> vector<8x8xf32>
    %cst_137 = arith.constant 0.353553385 : f32
    %464 = vector.broadcast %cst_137 : f32 to vector<8x8xf32>
    %465 = arith.mulf %463, %464 : vector<8x8xf32>
    %466 = vector.broadcast %431 : vector<1x8xf32> to vector<8x8xf32>
    %467 = arith.addf %465, %466 : vector<8x8xf32>
    %cst_138 = arith.constant dense<0xFF800000> : vector<8xf32>
    %468 = vector.multi_reduction <maximumf>, %467, %cst_138 [1] : vector<8x8xf32> to vector<8xf32>
    %469 = vector.shape_cast %468 : vector<8xf32> to vector<8x1xf32>
    %470 = vector.broadcast %469 : vector<8x1xf32> to vector<8x8xf32>
    %471 = arith.subf %467, %470 : vector<8x8xf32>
    %472 = math.exp %471 : vector<8x8xf32>
    %cst_139 = arith.constant dense<0.000000e+00> : vector<8xf32>
    %473 = vector.multi_reduction <add>, %472, %cst_139 [1] : vector<8x8xf32> to vector<8xf32>
    %474 = vector.shape_cast %473 : vector<8xf32> to vector<8x1xf32>
    %475 = tpu.reciprocal %474 {approx = true} : vector<8x1xf32> -> vector<8x1xf32>
    %476 = vector.broadcast %475 : vector<8x1xf32> to vector<8x8xf32>
    %477 = arith.mulf %472, %476 : vector<8x8xf32>
    %478 = arith.truncf %477 : vector<8x8xf32> to vector<8x8xbf16>
    %479 = arith.truncf %460 : vector<8x8xf32> to vector<8x8xbf16>
    %cst_140 = arith.constant dense<0.000000e+00> : vector<8x8xf32>
    %480 = tpu.matmul %478, %479, %cst_140 {dimension_numbers = #tpu.dot_dimension_numbers<[1], [0], [0], [1], [0, 0, 1, 1], [], []>} : vector<8x8xbf16>, vector<8x8xbf16>, vector<8x8xf32> -> vector<8x8xf32>
    %481 = vector.extract_strided_slice %432 {offsets = [0, 16], sizes = [8, 8], strides = [1, 1]} : vector<8x32xf32> to vector<8x8xf32>
    %482 = vector.extract_strided_slice %433 {offsets = [0, 16], sizes = [8, 8], strides = [1, 1]} : vector<8x32xf32> to vector<8x8xf32>
    %483 = vector.extract_strided_slice %434 {offsets = [0, 16], sizes = [8, 8], strides = [1, 1]} : vector<8x32xf32> to vector<8x8xf32>
    %484 = arith.truncf %481 : vector<8x8xf32> to vector<8x8xbf16>
    %485 = arith.truncf %482 : vector<8x8xf32> to vector<8x8xbf16>
    %cst_141 = arith.constant dense<0.000000e+00> : vector<8x8xf32>
    %486 = tpu.matmul %484, %485, %cst_141 {dimension_numbers = #tpu.dot_dimension_numbers<[1], [1], [0], [0], [0, 0, 1, 0], [], []>} : vector<8x8xbf16>, vector<8x8xbf16>, vector<8x8xf32> -> vector<8x8xf32>
    %cst_142 = arith.constant 0.353553385 : f32
    %487 = vector.broadcast %cst_142 : f32 to vector<8x8xf32>
    %488 = arith.mulf %486, %487 : vector<8x8xf32>
    %489 = vector.broadcast %431 : vector<1x8xf32> to vector<8x8xf32>
    %490 = arith.addf %488, %489 : vector<8x8xf32>
    %cst_143 = arith.constant dense<0xFF800000> : vector<8xf32>
    %491 = vector.multi_reduction <maximumf>, %490, %cst_143 [1] : vector<8x8xf32> to vector<8xf32>
    %492 = vector.shape_cast %491 : vector<8xf32> to vector<8x1xf32>
    %493 = vector.broadcast %492 : vector<8x1xf32> to vector<8x8xf32>
    %494 = arith.subf %490, %493 : vector<8x8xf32>
    %495 = math.exp %494 : vector<8x8xf32>
    %cst_144 = arith.constant dense<0.000000e+00> : vector<8xf32>
    %496 = vector.multi_reduction <add>, %495, %cst_144 [1] : vector<8x8xf32> to vector<8xf32>
    %497 = vector.shape_cast %496 : vector<8xf32> to vector<8x1xf32>
    %498 = tpu.reciprocal %497 {approx = true} : vector<8x1xf32> -> vector<8x1xf32>
    %499 = vector.broadcast %498 : vector<8x1xf32> to vector<8x8xf32>
    %500 = arith.mulf %495, %499 : vector<8x8xf32>
    %501 = arith.truncf %500 : vector<8x8xf32> to vector<8x8xbf16>
    %502 = arith.truncf %483 : vector<8x8xf32> to vector<8x8xbf16>
    %cst_145 = arith.constant dense<0.000000e+00> : vector<8x8xf32>
    %503 = tpu.matmul %501, %502, %cst_145 {dimension_numbers = #tpu.dot_dimension_numbers<[1], [0], [0], [1], [0, 0, 1, 1], [], []>} : vector<8x8xbf16>, vector<8x8xbf16>, vector<8x8xf32> -> vector<8x8xf32>
    %504 = vector.extract_strided_slice %432 {offsets = [0, 24], sizes = [8, 8], strides = [1, 1]} : vector<8x32xf32> to vector<8x8xf32>
    %505 = vector.extract_strided_slice %433 {offsets = [0, 24], sizes = [8, 8], strides = [1, 1]} : vector<8x32xf32> to vector<8x8xf32>
    %506 = vector.extract_strided_slice %434 {offsets = [0, 24], sizes = [8, 8], strides = [1, 1]} : vector<8x32xf32> to vector<8x8xf32>
    %507 = arith.truncf %504 : vector<8x8xf32> to vector<8x8xbf16>
    %508 = arith.truncf %505 : vector<8x8xf32> to vector<8x8xbf16>
    %cst_146 = arith.constant dense<0.000000e+00> : vector<8x8xf32>
    %509 = tpu.matmul %507, %508, %cst_146 {dimension_numbers = #tpu.dot_dimension_numbers<[1], [1], [0], [0], [0, 0, 1, 0], [], []>} : vector<8x8xbf16>, vector<8x8xbf16>, vector<8x8xf32> -> vector<8x8xf32>
    %cst_147 = arith.constant 0.353553385 : f32
    %510 = vector.broadcast %cst_147 : f32 to vector<8x8xf32>
    %511 = arith.mulf %509, %510 : vector<8x8xf32>
    %512 = vector.broadcast %431 : vector<1x8xf32> to vector<8x8xf32>
    %513 = arith.addf %511, %512 : vector<8x8xf32>
    %cst_148 = arith.constant dense<0xFF800000> : vector<8xf32>
    %514 = vector.multi_reduction <maximumf>, %513, %cst_148 [1] : vector<8x8xf32> to vector<8xf32>
    %515 = vector.shape_cast %514 : vector<8xf32> to vector<8x1xf32>
    %516 = vector.broadcast %515 : vector<8x1xf32> to vector<8x8xf32>
    %517 = arith.subf %513, %516 : vector<8x8xf32>
    %518 = math.exp %517 : vector<8x8xf32>
    %cst_149 = arith.constant dense<0.000000e+00> : vector<8xf32>
    %519 = vector.multi_reduction <add>, %518, %cst_149 [1] : vector<8x8xf32> to vector<8xf32>
    %520 = vector.shape_cast %519 : vector<8xf32> to vector<8x1xf32>
    %521 = tpu.reciprocal %520 {approx = true} : vector<8x1xf32> -> vector<8x1xf32>
    %522 = vector.broadcast %521 : vector<8x1xf32> to vector<8x8xf32>
    %523 = arith.mulf %518, %522 : vector<8x8xf32>
    %524 = arith.truncf %523 : vector<8x8xf32> to vector<8x8xbf16>
    %525 = arith.truncf %506 : vector<8x8xf32> to vector<8x8xbf16>
    %cst_150 = arith.constant dense<0.000000e+00> : vector<8x8xf32>
    %526 = tpu.matmul %524, %525, %cst_150 {dimension_numbers = #tpu.dot_dimension_numbers<[1], [0], [0], [1], [0, 0, 1, 1], [], []>} : vector<8x8xbf16>, vector<8x8xbf16>, vector<8x8xf32> -> vector<8x8xf32>
    %527 = tpu.concatenate %457, %480, %503, %526 in 1 : vector<8x8xf32>, vector<8x8xf32>, vector<8x8xf32>, vector<8x8xf32> -> vector<8x32xf32>
    %528 = tpu.concatenate %430, %527 in 0 : vector<8x32xf32>, vector<8x32xf32> -> vector<16x32xf32>
    %c1_151 = arith.constant 1 : index
    %c0_152 = arith.constant 0 : index
    %c0_153 = arith.constant 0 : index
    %529 = vector.load %arg6[%c1_151, %c0_152, %c0_153] : memref<2x32x32xbf16, #tpu.memory_space<vmem>>, vector<1x32x32xbf16>
    %530 = vector.shape_cast %529 : vector<1x32x32xbf16> to vector<32x32xbf16>
    %531 = arith.truncf %528 : vector<16x32xf32> to vector<16x32xbf16>
    %cst_154 = arith.constant dense<0.000000e+00> : vector<16x32xf32>
    %532 = tpu.matmul %531, %530, %cst_154 {dimension_numbers = #tpu.dot_dimension_numbers<[1], [0], [0], [1], [0, 0, 1, 1], [], []>} : vector<16x32xbf16>, vector<32x32xbf16>, vector<16x32xf32> -> vector<16x32xf32>
    %c1_155 = arith.constant 1 : index
    %c0_156 = arith.constant 0 : index
    %c0_157 = arith.constant 0 : index
    %533 = vector.load %arg7[%c1_155, %c0_156, %c0_157] : memref<2x1x32xf32, #tpu.memory_space<vmem>>, vector<1x1x32xf32>
    %534 = vector.shape_cast %533 : vector<1x1x32xf32> to vector<1x32xf32>
    %535 = vector.broadcast %534 : vector<1x32xf32> to vector<16x32xf32>
    %536 = arith.addf %532, %535 : vector<16x32xf32>
    %537 = arith.addf %536, %322 : vector<16x32xf32>
    %c1_158 = arith.constant 1 : index
    %c0_159 = arith.constant 0 : index
    %c0_160 = arith.constant 0 : index
    %538 = vector.load %arg8[%c1_158, %c0_159, %c0_160] : memref<2x1x32xf32, #tpu.memory_space<vmem>>, vector<1x1x32xf32>
    %539 = vector.shape_cast %538 : vector<1x1x32xf32> to vector<1x32xf32>
    %c1_161 = arith.constant 1 : index
    %c0_162 = arith.constant 0 : index
    %c0_163 = arith.constant 0 : index
    %540 = vector.load %arg9[%c1_161, %c0_162, %c0_163] : memref<2x1x32xf32, #tpu.memory_space<vmem>>, vector<1x1x32xf32>
    %541 = vector.shape_cast %540 : vector<1x1x32xf32> to vector<1x32xf32>
    %cst_164 = arith.constant dense<0.000000e+00> : vector<16xf32>
    %542 = vector.multi_reduction <add>, %537, %cst_164 [1] : vector<16x32xf32> to vector<16xf32>
    %543 = vector.shape_cast %542 : vector<16xf32> to vector<16x1xf32>
    %cst_165 = arith.constant 3.200000e+01 : f32
    %544 = vector.broadcast %cst_165 : f32 to vector<16x1xf32>
    %545 = arith.divf %543, %544 : vector<16x1xf32>
    %546 = vector.broadcast %545 : vector<16x1xf32> to vector<16x32xf32>
    %547 = arith.subf %537, %546 : vector<16x32xf32>
    %548 = arith.mulf %547, %547 : vector<16x32xf32>
    %cst_166 = arith.constant dense<0.000000e+00> : vector<16xf32>
    %549 = vector.multi_reduction <add>, %548, %cst_166 [1] : vector<16x32xf32> to vector<16xf32>
    %550 = vector.shape_cast %549 : vector<16xf32> to vector<16x1xf32>
    %cst_167 = arith.constant 3.200000e+01 : f32
    %551 = vector.broadcast %cst_167 : f32 to vector<16x1xf32>
    %552 = arith.divf %550, %551 : vector<16x1xf32>
    %553 = vector.broadcast %545 : vector<16x1xf32> to vector<16x32xf32>
    %554 = arith.subf %537, %553 : vector<16x32xf32>
    %cst_168 = arith.constant 9.99999996E-13 : f32
    %555 = vector.broadcast %cst_168 : f32 to vector<16x1xf32>
    %556 = arith.addf %552, %555 : vector<16x1xf32>
    %557 = math.rsqrt %556 : vector<16x1xf32>
    %558 = vector.broadcast %557 : vector<16x1xf32> to vector<16x32xf32>
    %559 = arith.mulf %554, %558 : vector<16x32xf32>
    %560 = vector.broadcast %539 : vector<1x32xf32> to vector<16x32xf32>
    %561 = arith.mulf %559, %560 : vector<16x32xf32>
    %562 = vector.broadcast %541 : vector<1x32xf32> to vector<16x32xf32>
    %563 = arith.addf %561, %562 : vector<16x32xf32>
    %c1_169 = arith.constant 1 : index
    %c0_170 = arith.constant 0 : index
    %c0_171 = arith.constant 0 : index
    %564 = vector.load %arg10[%c1_169, %c0_170, %c0_171] : memref<2x32x64xbf16, #tpu.memory_space<vmem>>, vector<1x32x64xbf16>
    %565 = vector.shape_cast %564 : vector<1x32x64xbf16> to vector<32x64xbf16>
    %566 = arith.truncf %563 : vector<16x32xf32> to vector<16x32xbf16>
    %cst_172 = arith.constant dense<0.000000e+00> : vector<16x64xf32>
    %567 = tpu.matmul %566, %565, %cst_172 {dimension_numbers = #tpu.dot_dimension_numbers<[1], [0], [0], [1], [0, 0, 1, 1], [], []>} : vector<16x32xbf16>, vector<32x64xbf16>, vector<16x64xf32> -> vector<16x64xf32>
    %c1_173 = arith.constant 1 : index
    %c0_174 = arith.constant 0 : index
    %c0_175 = arith.constant 0 : index
    %568 = vector.load %arg11[%c1_173, %c0_174, %c0_175] : memref<2x1x64xf32, #tpu.memory_space<vmem>>, vector<1x1x64xf32>
    %569 = vector.shape_cast %568 : vector<1x1x64xf32> to vector<1x64xf32>
    %570 = vector.broadcast %569 : vector<1x64xf32> to vector<16x64xf32>
    %571 = arith.addf %567, %570 : vector<16x64xf32>
    %cst_176 = arith.constant 5.000000e-01 : f32
    %572 = vector.broadcast %cst_176 : f32 to vector<16x64xf32>
    %573 = arith.mulf %572, %571 : vector<16x64xf32>
    %cst_177 = arith.constant 4.471500e-02 : f32
    %574 = vector.broadcast %cst_177 : f32 to vector<16x64xf32>
    %575 = arith.mulf %574, %571 : vector<16x64xf32>
    %576 = arith.mulf %575, %571 : vector<16x64xf32>
    %577 = arith.mulf %576, %571 : vector<16x64xf32>
    %578 = arith.addf %571, %577 : vector<16x64xf32>
    %cst_178 = arith.constant 0.797884583 : f32
    %579 = vector.broadcast %cst_178 : f32 to vector<16x64xf32>
    %580 = arith.mulf %579, %578 : vector<16x64xf32>
    %581 = math.tanh %580 : vector<16x64xf32>
    %cst_179 = arith.constant 1.000000e+00 : f32
    %582 = vector.broadcast %cst_179 : f32 to vector<16x64xf32>
    %583 = arith.addf %582, %581 : vector<16x64xf32>
    %584 = arith.mulf %573, %583 : vector<16x64xf32>
    %c1_180 = arith.constant 1 : index
    %c0_181 = arith.constant 0 : index
    %c0_182 = arith.constant 0 : index
    %585 = vector.load %arg12[%c1_180, %c0_181, %c0_182] : memref<2x64x32xbf16, #tpu.memory_space<vmem>>, vector<1x64x32xbf16>
    %586 = vector.shape_cast %585 : vector<1x64x32xbf16> to vector<64x32xbf16>
    %587 = arith.truncf %584 : vector<16x64xf32> to vector<16x64xbf16>
    %cst_183 = arith.constant dense<0.000000e+00> : vector<16x32xf32>
    %588 = tpu.matmul %587, %586, %cst_183 {dimension_numbers = #tpu.dot_dimension_numbers<[1], [0], [0], [1], [0, 0, 1, 1], [], []>} : vector<16x64xbf16>, vector<64x32xbf16>, vector<16x32xf32> -> vector<16x32xf32>
    %c1_184 = arith.constant 1 : index
    %c0_185 = arith.constant 0 : index
    %c0_186 = arith.constant 0 : index
    %589 = vector.load %arg13[%c1_184, %c0_185, %c0_186] : memref<2x1x32xf32, #tpu.memory_space<vmem>>, vector<1x1x32xf32>
    %590 = vector.shape_cast %589 : vector<1x1x32xf32> to vector<1x32xf32>
    %591 = vector.broadcast %590 : vector<1x32xf32> to vector<16x32xf32>
    %592 = arith.addf %588, %591 : vector<16x32xf32>
    %593 = arith.addf %592, %563 : vector<16x32xf32>
    %c1_187 = arith.constant 1 : index
    %c0_188 = arith.constant 0 : index
    %c0_189 = arith.constant 0 : index
    %594 = vector.load %arg14[%c1_187, %c0_188, %c0_189] : memref<2x1x32xf32, #tpu.memory_space<vmem>>, vector<1x1x32xf32>
    %595 = vector.shape_cast %594 : vector<1x1x32xf32> to vector<1x32xf32>
    %c1_190 = arith.constant 1 : index
    %c0_191 = arith.constant 0 : index
    %c0_192 = arith.constant 0 : index
    %596 = vector.load %arg15[%c1_190, %c0_191, %c0_192] : memref<2x1x32xf32, #tpu.memory_space<vmem>>, vector<1x1x32xf32>
    %597 = vector.shape_cast %596 : vector<1x1x32xf32> to vector<1x32xf32>
    %cst_193 = arith.constant dense<0.000000e+00> : vector<16xf32>
    %598 = vector.multi_reduction <add>, %593, %cst_193 [1] : vector<16x32xf32> to vector<16xf32>
    %599 = vector.shape_cast %598 : vector<16xf32> to vector<16x1xf32>
    %cst_194 = arith.constant 3.200000e+01 : f32
    %600 = vector.broadcast %cst_194 : f32 to vector<16x1xf32>
    %601 = arith.divf %599, %600 : vector<16x1xf32>
    %602 = vector.broadcast %601 : vector<16x1xf32> to vector<16x32xf32>
    %603 = arith.subf %593, %602 : vector<16x32xf32>
    %604 = arith.mulf %603, %603 : vector<16x32xf32>
    %cst_195 = arith.constant dense<0.000000e+00> : vector<16xf32>
    %605 = vector.multi_reduction <add>, %604, %cst_195 [1] : vector<16x32xf32> to vector<16xf32>
    %606 = vector.shape_cast %605 : vector<16xf32> to vector<16x1xf32>
    %cst_196 = arith.constant 3.200000e+01 : f32
    %607 = vector.broadcast %cst_196 : f32 to vector<16x1xf32>
    %608 = arith.divf %606, %607 : vector<16x1xf32>
    %609 = vector.broadcast %601 : vector<16x1xf32> to vector<16x32xf32>
    %610 = arith.subf %593, %609 : vector<16x32xf32>
    %cst_197 = arith.constant 9.99999996E-13 : f32
    %611 = vector.broadcast %cst_197 : f32 to vector<16x1xf32>
    %612 = arith.addf %608, %611 : vector<16x1xf32>
    %613 = math.rsqrt %612 : vector<16x1xf32>
    %614 = vector.broadcast %613 : vector<16x1xf32> to vector<16x32xf32>
    %615 = arith.mulf %610, %614 : vector<16x32xf32>
    %616 = vector.broadcast %595 : vector<1x32xf32> to vector<16x32xf32>
    %617 = arith.mulf %615, %616 : vector<16x32xf32>
    %618 = vector.broadcast %597 : vector<1x32xf32> to vector<16x32xf32>
    %619 = arith.addf %617, %618 : vector<16x32xf32>
    %620 = vector.extract_strided_slice %619 {offsets = [0, 0], sizes = [1, 32], strides = [1, 1]} : vector<16x32xf32> to vector<1x32xf32>
    %621 = vector.extract_strided_slice %619 {offsets = [8, 0], sizes = [1, 32], strides = [1, 1]} : vector<16x32xf32> to vector<1x32xf32>
    %622 = tpu.concatenate %620, %621 in 0 : vector<1x32xf32>, vector<1x32xf32> -> vector<2x32xf32>
    %c0_198 = arith.constant 0 : index
    %c0_199 = arith.constant 0 : index
    %623 = vector.load %arg16[%c0_198, %c0_199] : memref<32x32xbf16, #tpu.memory_space<vmem>>, vector<32x32xbf16>
    %624 = arith.truncf %622 : vector<2x32xf32> to vector<2x32xbf16>
    %cst_200 = arith.constant dense<0.000000e+00> : vector<2x32xf32>
    %625 = tpu.matmul %624, %623, %cst_200 {dimension_numbers = #tpu.dot_dimension_numbers<[1], [0], [0], [1], [0, 0, 1, 1], [], []>} : vector<2x32xbf16>, vector<32x32xbf16>, vector<2x32xf32> -> vector<2x32xf32>
    %c0_201 = arith.constant 0 : index
    %c0_202 = arith.constant 0 : index
    %626 = vector.load %arg17[%c0_201, %c0_202] : memref<1x32xf32, #tpu.memory_space<vmem>>, vector<1x32xf32>
    %627 = vector.broadcast %626 : vector<1x32xf32> to vector<2x32xf32>
    %628 = arith.addf %625, %627 : vector<2x32xf32>
    %629 = math.tanh %628 : vector<2x32xf32>
    %c0_203 = arith.constant 0 : index
    %c0_204 = arith.constant 0 : index
    %630 = vector.load %arg20[%c0_203, %c0_204] : memref<2x32xf32, #tpu.memory_space<vmem>>, vector<2x32xf32>
    tpu.vector_store %arg20[%c0_203, %c0_204], %629 {strides = array<i32>} : memref<2x32xf32, #tpu.memory_space<vmem>>, vector<2x32xf32>,
    %c0_205 = arith.constant 0 : index
    %c0_206 = arith.constant 0 : index
    %631 = vector.load %arg18[%c0_205, %c0_206] : memref<32x3xbf16, #tpu.memory_space<vmem>>, vector<32x3xbf16>
    %632 = arith.truncf %629 : vector<2x32xf32> to vector<2x32xbf16>
    %cst_207 = arith.constant dense<0.000000e+00> : vector<2x3xf32>
    %633 = tpu.matmul %632, %631, %cst_207 {dimension_numbers = #tpu.dot_dimension_numbers<[1], [0], [0], [1], [0, 0, 1, 1], [], []>} : vector<2x32xbf16>, vector<32x3xbf16>, vector<2x3xf32> -> vector<2x3xf32>
    %c0_208 = arith.constant 0 : index
    %c0_209 = arith.constant 0 : index
    %634 = vector.load %arg19[%c0_208, %c0_209] : memref<1x3xf32, #tpu.memory_space<vmem>>, vector<1x3xf32>
    %635 = vector.broadcast %634 : vector<1x3xf32> to vector<2x3xf32>
    %636 = arith.addf %633, %635 : vector<2x3xf32>
    %c0_210 = arith.constant 0 : index
    %c0_211 = arith.constant 0 : index
    %637 = vector.load %arg21[%c0_210, %c0_211] : memref<2x3xf32, #tpu.memory_space<vmem>>, vector<2x3xf32>
    tpu.vector_store %arg21[%c0_210, %c0_211], %636 {strides = array<i32>} : memref<2x3xf32, #tpu.memory_space<vmem>>, vector<2x3xf32>,
    return
  }
}

</mosaic_0001>

<llo_original>
// kernel: bert_palm_classifier_forward.1
$region0: #{bert_palm_classifier_forward.1}
  #allocation0 [shape = 'u32[]', space=smem, size = 0x4, offset = 0x4, fixed_abs, tag = 'smem constant byte address 0x4 - core index']
  #allocation1 [shape = 'u32[144,128]{1,0:T(1,128)}', space=vmem, size = 0x12000, scoped, tag = 'internal scratch']
  %s0 = inlined_call_operand.vmem [shape: f32[16,32], index: 0, kind: input, shape index: {}]
  %s1 = inlined_call_operand.vmem [shape: f32[2,8], index: 1, kind: input, shape index: {}]
  %s2 = inlined_call_operand.vmem [shape: f32[1,32], index: 2, kind: input, shape index: {}]
  %s3 = inlined_call_operand.vmem [shape: f32[1,32], index: 3, kind: input, shape index: {}]
  %s4 = inlined_call_operand.vmem [shape: bf16[2,32,96], index: 4, kind: input, shape index: {}]
  %s5 = inlined_call_operand.vmem [shape: f32[2,1,96], index: 5, kind: input, shape index: {}]
  %s6 = inlined_call_operand.vmem [shape: bf16[2,32,32], index: 6, kind: input, shape index: {}]
  %s7 = inlined_call_operand.vmem [shape: f32[2,1,32], index: 7, kind: input, shape index: {}]
  %s8 = inlined_call_operand.vmem [shape: f32[2,1,32], index: 8, kind: input, shape index: {}]
  %s9 = inlined_call_operand.vmem [shape: f32[2,1,32], index: 9, kind: input, shape index: {}]
  %s10 = inlined_call_operand.vmem [shape: bf16[2,32,64], index: 10, kind: input, shape index: {}]
  %s11 = inlined_call_operand.vmem [shape: f32[2,1,64], index: 11, kind: input, shape index: {}]
  %s12 = inlined_call_operand.vmem [shape: bf16[2,64,32], index: 12, kind: input, shape index: {}]
  %s13 = inlined_call_operand.vmem [shape: f32[2,1,32], index: 13, kind: input, shape index: {}]
  %s14 = inlined_call_operand.vmem [shape: f32[2,1,32], index: 14, kind: input, shape index: {}]
  %s15 = inlined_call_operand.vmem [shape: f32[2,1,32], index: 15, kind: input, shape index: {}]
  %s16 = inlined_call_operand.vmem [shape: bf16[32,32], index: 16, kind: input, shape index: {}]
  %s17 = inlined_call_operand.vmem [shape: f32[1,32], index: 17, kind: input, shape index: {}]
  %s18 = inlined_call_operand.vmem [shape: bf16[32,3], index: 18, kind: input, shape index: {}]
  %s19 = inlined_call_operand.vmem [shape: f32[1,3], index: 19, kind: input, shape index: {}]
  %s20 = inlined_call_operand.hbm [shape: f32[2,32], index: 20, kind: output, shape index: {0}]
  %s21 = inlined_call_operand.hbm [shape: f32[2,3], index: 21, kind: output, shape index: {1}]
  %22 = xla_tuple %s20, %s21
  %s23 = sld [smem:[#allocation0]]
  $region98: #{bert_palm_classifier_forward.1} parent=0
    _
  %s25 = ssub.s32 1, %s23
  %s26 = scalar_select 0, %s25, %s23
  $region1: #{bert_palm_classifier_forward.1} parent=0
    #allocation2 [shape = 'u8[1024]{0}', space=vmem, size = 0x400, scoped, tag = 'output window, operand 0, single buffered']
    #allocation3 [shape = 's32[1]{0}', space=sflag, size = 0x4, scoped, tag = 'scoped memory for bert_palm_classifier_forward.1']
    #allocation4 [shape = 'u8[1024]{0}', space=vmem, size = 0x400, scoped, tag = 'output window, operand 1, single buffered']
    #allocation5 [shape = 's32[1]{0}', space=sflag, size = 0x4, scoped, tag = 'scoped memory for bert_palm_classifier_forward.1']
    %27 = vsyncpa [#allocation3], 0
    %28 = vsyncpa [#allocation5], 0
    // Predicated region
    $region2: #{bert_palm_classifier_forward.1} parent=1 // pred_check
      _
    $region3: #{bert_palm_classifier_forward.1} parent=1 // pred_check_branch
      %30 = sbr.rel (0) target = $region5
    $region4: #{bert_palm_classifier_forward.1} parent=1 // pred_region
      _
    $region5: #{bert_palm_classifier_forward.1} parent=1 // pred_fallthru
      _
    // Predicated region
    $region6: #{bert_palm_classifier_forward.1} parent=1 // pred_check
      _
    $region7: #{bert_palm_classifier_forward.1} parent=1 // pred_check_branch
      %32 = sbr.rel (0) target = $region9
    $region8: #{bert_palm_classifier_forward.1} parent=1 // pred_region
      _
    $region9: #{bert_palm_classifier_forward.1} parent=1 // pred_fallthru
      _
    // Predicated region
    $region10: #{bert_palm_classifier_forward.1} parent=1 // pred_check
      _
    $region11: #{bert_palm_classifier_forward.1} parent=1 // pred_check_branch
      %34 = sbr.rel (0) target = $region13
    $region12: #{bert_palm_classifier_forward.1} parent=1 // pred_region
      _
    $region13: #{bert_palm_classifier_forward.1} parent=1 // pred_fallthru
      _
    // Predicated region
    $region14: #{bert_palm_classifier_forward.1} parent=1 // pred_check
      _
    $region15: #{bert_palm_classifier_forward.1} parent=1 // pred_check_branch
      %36 = sbr.rel (0) target = $region17
    $region16: #{bert_palm_classifier_forward.1} parent=1 // pred_region
      _
    $region17: #{bert_palm_classifier_forward.1} parent=1 // pred_fallthru
      _
    // Predicated region
    $region18: #{bert_palm_classifier_forward.1} parent=1 // pred_check
      _
    $region19: #{bert_palm_classifier_forward.1} parent=1 // pred_check_branch
      %38 = sbr.rel (0) target = $region21
    $region20: #{bert_palm_classifier_forward.1} parent=1 // pred_region
      _
    $region21: #{bert_palm_classifier_forward.1} parent=1 // pred_fallthru
      _
    // Predicated region
    $region22: #{bert_palm_classifier_forward.1} parent=1 // pred_check
      _
    $region23: #{bert_palm_classifier_forward.1} parent=1 // pred_check_branch
      %40 = sbr.rel (0) target = $region25
    $region24: #{bert_palm_classifier_forward.1} parent=1 // pred_region
      _
    $region25: #{bert_palm_classifier_forward.1} parent=1 // pred_fallthru
      _
    // Predicated region
    $region26: #{bert_palm_classifier_forward.1} parent=1 // pred_check
      _
    $region27: #{bert_palm_classifier_forward.1} parent=1 // pred_check_branch
      %42 = sbr.rel (0) target = $region29
    $region28: #{bert_palm_classifier_forward.1} parent=1 // pred_region
      _
    $region29: #{bert_palm_classifier_forward.1} parent=1 // pred_fallthru
      _
    // Predicated region
    $region30: #{bert_palm_classifier_forward.1} parent=1 // pred_check
      _
    $region31: #{bert_palm_classifier_forward.1} parent=1 // pred_check_branch
      %44 = sbr.rel (0) target = $region33
    $region32: #{bert_palm_classifier_forward.1} parent=1 // pred_region
      _
    $region33: #{bert_palm_classifier_forward.1} parent=1 // pred_fallthru
      _
    // Predicated region
    $region34: #{bert_palm_classifier_forward.1} parent=1 // pred_check
      _
    $region35: #{bert_palm_classifier_forward.1} parent=1 // pred_check_branch
      %46 = sbr.rel (0) target = $region37
    $region36: #{bert_palm_classifier_forward.1} parent=1 // pred_region
      _
    $region37: #{bert_palm_classifier_forward.1} parent=1 // pred_fallthru
      _
    // Predicated region
    $region38: #{bert_palm_classifier_forward.1} parent=1 // pred_check
      _
    $region39: #{bert_palm_classifier_forward.1} parent=1 // pred_check_branch
      %48 = sbr.rel (0) target = $region41
    $region40: #{bert_palm_classifier_forward.1} parent=1 // pred_region
      _
    $region41: #{bert_palm_classifier_forward.1} parent=1 // pred_fallthru
      _
    // Predicated region
    $region42: #{bert_palm_classifier_forward.1} parent=1 // pred_check
      _
    $region43: #{bert_palm_classifier_forward.1} parent=1 // pred_check_branch
      %50 = sbr.rel (0) target = $region45
    $region44: #{bert_palm_classifier_forward.1} parent=1 // pred_region
      _
    $region45: #{bert_palm_classifier_forward.1} parent=1 // pred_fallthru
      _
    // Predicated region
    $region46: #{bert_palm_classifier_forward.1} parent=1 // pred_check
      _
    $region47: #{bert_palm_classifier_forward.1} parent=1 // pred_check_branch
      %52 = sbr.rel (0) target = $region49
    $region48: #{bert_palm_classifier_forward.1} parent=1 // pred_region
      _
    $region49: #{bert_palm_classifier_forward.1} parent=1 // pred_fallthru
      _
    // Predicated region
    $region50: #{bert_palm_classifier_forward.1} parent=1 // pred_check
      _
    $region51: #{bert_palm_classifier_forward.1} parent=1 // pred_check_branch
      %54 = sbr.rel (0) target = $region53
    $region52: #{bert_palm_classifier_forward.1} parent=1 // pred_region
      _
    $region53: #{bert_palm_classifier_forward.1} parent=1 // pred_fallthru
      _
    // Predicated region
    $region54: #{bert_palm_classifier_forward.1} parent=1 // pred_check
      _
    $region55: #{bert_palm_classifier_forward.1} parent=1 // pred_check_branch
      %56 = sbr.rel (0) target = $region57
    $region56: #{bert_palm_classifier_forward.1} parent=1 // pred_region
      _
    $region57: #{bert_palm_classifier_forward.1} parent=1 // pred_fallthru
      _
    // Predicated region
    $region58: #{bert_palm_classifier_forward.1} parent=1 // pred_check
      _
    $region59: #{bert_palm_classifier_forward.1} parent=1 // pred_check_branch
      %58 = sbr.rel (0) target = $region61
    $region60: #{bert_palm_classifier_forward.1} parent=1 // pred_region
      _
    $region61: #{bert_palm_classifier_forward.1} parent=1 // pred_fallthru
      _
    // Predicated region
    $region62: #{bert_palm_classifier_forward.1} parent=1 // pred_check
      _
    $region63: #{bert_palm_classifier_forward.1} parent=1 // pred_check_branch
      %60 = sbr.rel (0) target = $region65
    $region64: #{bert_palm_classifier_forward.1} parent=1 // pred_region
      _
    $region65: #{bert_palm_classifier_forward.1} parent=1 // pred_fallthru
      _
    // Predicated region
    $region66: #{bert_palm_classifier_forward.1} parent=1 // pred_check
      _
    $region67: #{bert_palm_classifier_forward.1} parent=1 // pred_check_branch
      %62 = sbr.rel (0) target = $region69
    $region68: #{bert_palm_classifier_forward.1} parent=1 // pred_region
      _
    $region69: #{bert_palm_classifier_forward.1} parent=1 // pred_fallthru
      _
    // Predicated region
    $region70: #{bert_palm_classifier_forward.1} parent=1 // pred_check
      _
    $region71: #{bert_palm_classifier_forward.1} parent=1 // pred_check_branch
      %64 = sbr.rel (0) target = $region73
    $region72: #{bert_palm_classifier_forward.1} parent=1 // pred_region
      _
    $region73: #{bert_palm_classifier_forward.1} parent=1 // pred_fallthru
      _
    // Predicated region
    $region74: #{bert_palm_classifier_forward.1} parent=1 // pred_check
      _
    $region75: #{bert_palm_classifier_forward.1} parent=1 // pred_check_branch
      %66 = sbr.rel (0) target = $region77
    $region76: #{bert_palm_classifier_forward.1} parent=1 // pred_region
      _
    $region77: #{bert_palm_classifier_forward.1} parent=1 // pred_fallthru
      _
    // Predicated region
    $region78: #{bert_palm_classifier_forward.1} parent=1 // pred_check
      _
    $region79: #{bert_palm_classifier_forward.1} parent=1 // pred_check_branch
      %68 = sbr.rel (0) target = $region81
    $region80: #{bert_palm_classifier_forward.1} parent=1 // pred_region
      _
    $region81: #{bert_palm_classifier_forward.1} parent=1 // pred_fallthru
      _
    %v70 = vld [vmem:[%s1] sm:$0x3]
    %v71 = vld [vmem:[%s0] sm:$0xff]
    %v72 = vld [vmem:[%s0 + $0x8] sm:$0xff]
    %v73 = vld [vmem:[%s2] sm:$0x1]
    %v74 = vld [vmem:[%s3] sm:$0x1]
    %vm75 = vcmask 261120
    %v76 = vsel %vm75, %v71, 0.0
    %77 = vadd.xlane.f32.xlu0 %v76
    %v78 = vpop.xlane.xlu0 %77
    %v79 = vsel %vm75, %v72, 0.0
    %80 = vadd.xlane.f32.xlu0 %v79
    %v81 = vpop.xlane.xlu0 %80
    %v82 = vrcp.pop 32.0
    %v83 = vmul.f32 %v78, %v82
    %v84 = vmul.f32 %v81, %v82
    %v85 = vsub.f32 %v71, %v83
    %v86 = vsub.f32 %v72, %v84
    %v87 = vmul.f32 %v85, %v85
    %v88 = vmul.f32 %v86, %v86
    %v89 = vsel %vm75, %v87, 0.0
    %90 = vadd.xlane.f32.xlu0 %v89
    %v91 = vpop.xlane.xlu0 %90
    %v92 = vsel %vm75, %v88, 0.0
    %93 = vadd.xlane.f32.xlu0 %v92
    %v94 = vpop.xlane.xlu0 %93
    %v95 = vmul.f32 %v91, %v82
    %v96 = vmul.f32 %v94, %v82
    %v97 = vadd.f32 %v95, 1e-12
    %v98 = vadd.f32 %v96, 1e-12
    %v99 = vrsqrt.pop %v97
    %v100 = vrsqrt.pop %v98
    %v101 = vmul.f32 %v85, %v99
    %v102 = vmul.f32 %v86, %v100
    %v104 = vlaneseq
    %v105 = vshrl.u32 %v104, 7
    %v106 = vsub.s32 0, %v105
    %v107 = vrot.slane %v73, %v106
    %v109 = vmul.f32 %v101, %v107
    %v110 = vmul.f32 %v102, %v107
    %v112 = vlaneseq
    %v113 = vshrl.u32 %v112, 7
    %v114 = vsub.s32 0, %v113
    %v115 = vrot.slane %v74, %v114
    %v117 = vadd.f32 %v109, %v115
    %v118 = vadd.f32 %v110, %v115
    %v119 = vld [vmem:[%s4] sm:$0xf]
    %v120 = vld [vmem:[%s4 + $0x4] sm:$0xf]
    %v121 = vld [vmem:[%s4 + $0x8] sm:$0xf]
    %v122 = vld [vmem:[%s4 + $0xc] sm:$0xf]
    %v123 = vpack.c.bf16 %v118, %v117
    %v124 = vld [vmem:[%s5] sm:$0x1]
    %v126 = vlaneseq
    %v127 = vshrl.u32 %v126, 7
    %v128 = vsub.s32 0, %v127
    %v129 = vrot.slane %v124, %v128
    %v135 = vunpack.c.l.b16 %v119
    %v136 = vunpack.c.l.b16 %v120
    %v137 = vunpack.c.l.b16 %v121
    %v138 = vunpack.c.l.b16 %v122
    %v139 = vpack.c.b16 %v136, %v135
    %v140 = vpack.c.b16 %v138, %v137
    %v144 = vsel %vm75, %v123, 0
    %146 = vmatprep.subr.bf16.mxu0 0
    %147 = vmatpush1.bf16.msra.mxu0 %v139
    %148 = vmatprep.subr.bf16.mxu0 0
    %149 = vmatpush1.bf16.msra.mxu0 %v140
    %150 = vmatprep.subr.bf16.mxu0 0
    %151 = vmatpush1.bf16.msra.mxu0 0
    %152 = vmatprep.subr.bf16.mxu0 0
    %153 = vmatpush1.bf16.msra.mxu0 0
    %154 = vmatprep.subr.bf16.mxu0 0
    %155 = vmatpush1.bf16.msra.mxu0 0
    %156 = vmatprep.subr.bf16.mxu0 0
    %157 = vmatpush1.bf16.msra.mxu0 0
    %158 = vmatprep.subr.bf16.mxu0 0
    %159 = vmatpush1.bf16.msra.mxu0 0
    %160 = vmatprep.subr.bf16.mxu0 0
    %161 = vmatpush1.bf16.msra.mxu0 0
    %162 = vmatprep.subr.bf16.mxu0 0
    %163 = vmatpush1.bf16.msra.mxu0 0
    %164 = vmatprep.subr.bf16.mxu0 0
    %165 = vmatpush1.bf16.msra.mxu0 0
    %166 = vmatprep.subr.bf16.mxu0 0
    %167 = vmatpush1.bf16.msra.mxu0 0
    %168 = vmatprep.subr.bf16.mxu0 0
    %169 = vmatpush1.bf16.msra.mxu0 0
    %170 = vmatprep.subr.bf16.mxu0 0
    %171 = vmatpush1.bf16.msra.mxu0 0
    %172 = vmatprep.subr.bf16.mxu0 0
    %173 = vmatpush1.bf16.msra.mxu0 0
    %174 = vmatprep.subr.bf16.mxu0 0
    %175 = vmatpush1.bf16.msra.mxu0 0
    %176 = vmatprep.subr.bf16.mxu0 0
    %177 = vmatpush1.bf16.msra.mxu0 0
    %178 = vmatprep.mubr.bf16.mxu0 0
    %179 = vmatmul.mubr.bf16.gmra.mrb[0].mxu0 %v144
    %v180 = vpop.f32.mrb[0].mxu0
    %v181 = vadd.f32 %v129, %v180
    %v182 = vpop.f32.mrb[0].mxu0
    %v183 = vpop.f32.mrb[0].mxu0
    %v184 = vadd.f32 %v129, %v183
    %v185 = vpop.f32.mrb[0].mxu0
    %186 = vdwg.mxu0
    %v187 = vpack.c.bf16 %v181, %v181
    %189 = vrot.lane.b32.xlu0 %v187, 96
    %v190 = vpop.permute.xlu0 %189
    %vm191 = vcmask 64512
    %v193 = vsel %vm191, %v187, 0
    %v196 = vsel %vm191, %v190, 0
    %198 = vmatprep.subr.bf16.mxu0 0
    %199 = vmatpush1.bf16.xpose.msra.mxu0 %v196
    %200 = vmatprep.subr.bf16.mxu0 0
    %201 = vmatpush1.bf16.xpose.msra.mxu0 0
    %202 = vmatprep.subr.bf16.mxu0 0
    %203 = vmatpush1.bf16.xpose.msra.mxu0 0
    %204 = vmatprep.subr.bf16.mxu0 0
    %205 = vmatpush1.bf16.xpose.msra.mxu0 0
    %206 = vmatprep.subr.bf16.mxu0 0
    %207 = vmatpush1.bf16.xpose.msra.mxu0 0
    %208 = vmatprep.subr.bf16.mxu0 0
    %209 = vmatpush1.bf16.xpose.msra.mxu0 0
    %210 = vmatprep.subr.bf16.mxu0 0
    %211 = vmatpush1.bf16.xpose.msra.mxu0 0
    %212 = vmatprep.subr.bf16.mxu0 0
    %213 = vmatpush1.bf16.xpose.msra.mxu0 0
    %214 = vmatprep.subr.bf16.mxu0 0
    %215 = vmatpush1.bf16.xpose.msra.mxu0 0
    %216 = vmatprep.subr.bf16.mxu0 0
    %217 = vmatpush1.bf16.xpose.msra.mxu0 0
    %218 = vmatprep.subr.bf16.mxu0 0
    %219 = vmatpush1.bf16.xpose.msra.mxu0 0
    %220 = vmatprep.subr.bf16.mxu0 0
    %221 = vmatpush1.bf16.xpose.msra.mxu0 0
    %222 = vmatprep.subr.bf16.mxu0 0
    %223 = vmatpush1.bf16.xpose.msra.mxu0 0
    %224 = vmatprep.subr.bf16.mxu0 0
    %225 = vmatpush1.bf16.xpose.msra.mxu0 0
    %226 = vmatprep.subr.bf16.mxu0 0
    %227 = vmatpush1.bf16.xpose.msra.mxu0 0
    %228 = vmatprep.subr.bf16.mxu0 0
    %229 = vmatpush1.bf16.xpose.msra.mxu0 0
    %230 = vmatprep.mubr.bf16.mxu0 0
    %231 = vmatmul.mubr.bf16.gmra.mrb[0].mxu0 %v193
    %v232 = vpop.f32.mrb[0].mxu0
    %v233 = vadd.f32 0.0, %v232
    %v234 = vpop.f32.mrb[0].mxu0
    %v235 = vpop.f32.mrb[0].mxu0
    %v236 = vpop.f32.mrb[0].mxu0
    %237 = vdwg.mxu0
    %v238 = vmul.f32 %v233, 0.35355338
    %v239 = vlaneseq
    %v240 = vshrl.u32 %v239, 7
    %v241 = vsub.s32 0, %v240
    %v242 = vrot.slane %v70, %v241
    %v243 = vadd.f32 %v238, %v242
    %v244 = vsel %vm191, %v243, -inf
    %245 = vmax.xlane.f32.xlu0 %v244
    %v246 = vpop.xlane.xlu0 %245
    %v247 = vsub.f32 %v243, %v246
    %v248 = vmul.f32 %v247, 1.442695
    %v249 = vpow.pop %v248
    %v250 = vsel %vm191, %v249, 0.0
    %251 = vadd.xlane.f32.xlu0 %v250
    %v252 = vpop.xlane.xlu0 %251
    %v253 = vrcp.pop %v252
    %v254 = vmul.f32 %v249, %v253
    %v255 = vpack.c.bf16 %v254, %v254
    %256 = vrot.lane.b32.xlu0 %v187, 64
    %v257 = vpop.permute.xlu0 %256
    %v259 = vsel %vm191, %v255, 0
    %vm261 = vcmask 1043456
    %v263 = vsel %vm261, %v257, 0
    %265 = vmatprep.subr.bf16.mxu0 0
    %266 = vmatpush1.bf16.msra.mxu0 %v263
    %267 = vmatprep.subr.bf16.mxu0 0
    %268 = vmatpush1.bf16.msra.mxu0 0
    %269 = vmatprep.subr.bf16.mxu0 0
    %270 = vmatpush1.bf16.msra.mxu0 0
    %271 = vmatprep.subr.bf16.mxu0 0
    %272 = vmatpush1.bf16.msra.mxu0 0
    %273 = vmatprep.subr.bf16.mxu0 0
    %274 = vmatpush1.bf16.msra.mxu0 0
    %275 = vmatprep.subr.bf16.mxu0 0
    %276 = vmatpush1.bf16.msra.mxu0 0
    %277 = vmatprep.subr.bf16.mxu0 0
    %278 = vmatpush1.bf16.msra.mxu0 0
    %279 = vmatprep.subr.bf16.mxu0 0
    %280 = vmatpush1.bf16.msra.mxu0 0
    %281 = vmatprep.subr.bf16.mxu0 0
    %282 = vmatpush1.bf16.msra.mxu0 0
    %283 = vmatprep.subr.bf16.mxu0 0
    %284 = vmatpush1.bf16.msra.mxu0 0
    %285 = vmatprep.subr.bf16.mxu0 0
    %286 = vmatpush1.bf16.msra.mxu0 0
    %287 = vmatprep.subr.bf16.mxu0 0
    %288 = vmatpush1.bf16.msra.mxu0 0
    %289 = vmatprep.subr.bf16.mxu0 0
    %290 = vmatpush1.bf16.msra.mxu0 0
    %291 = vmatprep.subr.bf16.mxu0 0
    %292 = vmatpush1.bf16.msra.mxu0 0
    %293 = vmatprep.subr.bf16.mxu0 0
    %294 = vmatpush1.bf16.msra.mxu0 0
    %295 = vmatprep.subr.bf16.mxu0 0
    %296 = vmatpush1.bf16.msra.mxu0 0
    %297 = vmatprep.mubr.bf16.mxu0 0
    %298 = vmatmul.mubr.bf16.gmra.mrb[0].mxu0 %v259
    %v299 = vpop.f32.mrb[0].mxu0
    %v300 = vadd.f32 0.0, %v299
    %v301 = vpop.f32.mrb[0].mxu0
    %v302 = vpop.f32.mrb[0].mxu0
    %v303 = vpop.f32.mrb[0].mxu0
    %304 = vdwg.mxu0
    %305 = vrot.lane.b32.xlu0 %v187, 120
    %v306 = vpop.permute.xlu0 %305
    %307 = vrot.lane.b32.xlu0 %v187, 88
    %v308 = vpop.permute.xlu0 %307
    %v310 = vsel %vm191, %v306, 0
    %v313 = vsel %vm191, %v308, 0
    %315 = vmatprep.subr.bf16.mxu0 0
    %316 = vmatpush1.bf16.xpose.msra.mxu0 %v313
    %317 = vmatprep.subr.bf16.mxu0 0
    %318 = vmatpush1.bf16.xpose.msra.mxu0 0
    %319 = vmatprep.subr.bf16.mxu0 0
    %320 = vmatpush1.bf16.xpose.msra.mxu0 0
    %321 = vmatprep.subr.bf16.mxu0 0
    %322 = vmatpush1.bf16.xpose.msra.mxu0 0
    %323 = vmatprep.subr.bf16.mxu0 0
    %324 = vmatpush1.bf16.xpose.msra.mxu0 0
    %325 = vmatprep.subr.bf16.mxu0 0
    %326 = vmatpush1.bf16.xpose.msra.mxu0 0
    %327 = vmatprep.subr.bf16.mxu0 0
    %328 = vmatpush1.bf16.xpose.msra.mxu0 0
    %329 = vmatprep.subr.bf16.mxu0 0
    %330 = vmatpush1.bf16.xpose.msra.mxu0 0
    %331 = vmatprep.subr.bf16.mxu0 0
    %332 = vmatpush1.bf16.xpose.msra.mxu0 0
    %333 = vmatprep.subr.bf16.mxu0 0
    %334 = vmatpush1.bf16.xpose.msra.mxu0 0
    %335 = vmatprep.subr.bf16.mxu0 0
    %336 = vmatpush1.bf16.xpose.msra.mxu0 0
    %337 = vmatprep.subr.bf16.mxu0 0
    %338 = vmatpush1.bf16.xpose.msra.mxu0 0
    %339 = vmatprep.subr.bf16.mxu0 0
    %340 = vmatpush1.bf16.xpose.msra.mxu0 0
    %341 = vmatprep.subr.bf16.mxu0 0
    %342 = vmatpush1.bf16.xpose.msra.mxu0 0
    %343 = vmatprep.subr.bf16.mxu0 0
    %344 = vmatpush1.bf16.xpose.msra.mxu0 0
    %345 = vmatprep.subr.bf16.mxu0 0
    %346 = vmatpush1.bf16.xpose.msra.mxu0 0
    %347 = vmatprep.mubr.bf16.mxu0 0
    %348 = vmatmul.mubr.bf16.gmra.mrb[0].mxu0 %v310
    %v349 = vpop.f32.mrb[0].mxu0
    %v350 = vadd.f32 0.0, %v349
    %v351 = vpop.f32.mrb[0].mxu0
    %v352 = vpop.f32.mrb[0].mxu0
    %v353 = vpop.f32.mrb[0].mxu0
    %354 = vdwg.mxu0
    %v355 = vmul.f32 %v350, 0.35355338
    %v356 = vadd.f32 %v355, %v242
    %v357 = vsel %vm191, %v356, -inf
    %358 = vmax.xlane.f32.xlu0 %v357
    %v359 = vpop.xlane.xlu0 %358
    %v360 = vsub.f32 %v356, %v359
    %v361 = vmul.f32 %v360, 1.442695
    %v362 = vpow.pop %v361
    %v363 = vsel %vm191, %v362, 0.0
    %364 = vadd.xlane.f32.xlu0 %v363
    %v365 = vpop.xlane.xlu0 %364
    %v366 = vrcp.pop %v365
    %v367 = vmul.f32 %v362, %v366
    %v368 = vpack.c.bf16 %v367, %v367
    %369 = vrot.lane.b32.xlu0 %v187, 56
    %v370 = vpop.permute.xlu0 %369
    %v372 = vsel %vm191, %v368, 0
    %v375 = vsel %vm261, %v370, 0
    %377 = vmatprep.subr.bf16.mxu0 0
    %378 = vmatpush1.bf16.msra.mxu0 %v375
    %379 = vmatprep.subr.bf16.mxu0 0
    %380 = vmatpush1.bf16.msra.mxu0 0
    %381 = vmatprep.subr.bf16.mxu0 0
    %382 = vmatpush1.bf16.msra.mxu0 0
    %383 = vmatprep.subr.bf16.mxu0 0
    %384 = vmatpush1.bf16.msra.mxu0 0
    %385 = vmatprep.subr.bf16.mxu0 0
    %386 = vmatpush1.bf16.msra.mxu0 0
    %387 = vmatprep.subr.bf16.mxu0 0
    %388 = vmatpush1.bf16.msra.mxu0 0
    %389 = vmatprep.subr.bf16.mxu0 0
    %390 = vmatpush1.bf16.msra.mxu0 0
    %391 = vmatprep.subr.bf16.mxu0 0
    %392 = vmatpush1.bf16.msra.mxu0 0
    %393 = vmatprep.subr.bf16.mxu0 0
    %394 = vmatpush1.bf16.msra.mxu0 0
    %395 = vmatprep.subr.bf16.mxu0 0
    %396 = vmatpush1.bf16.msra.mxu0 0
    %397 = vmatprep.subr.bf16.mxu0 0
    %398 = vmatpush1.bf16.msra.mxu0 0
    %399 = vmatprep.subr.bf16.mxu0 0
    %400 = vmatpush1.bf16.msra.mxu0 0
    %401 = vmatprep.subr.bf16.mxu0 0
    %402 = vmatpush1.bf16.msra.mxu0 0
    %403 = vmatprep.subr.bf16.mxu0 0
    %404 = vmatpush1.bf16.msra.mxu0 0
    %405 = vmatprep.subr.bf16.mxu0 0
    %406 = vmatpush1.bf16.msra.mxu0 0
    %407 = vmatprep.subr.bf16.mxu0 0
    %408 = vmatpush1.bf16.msra.mxu0 0
    %409 = vmatprep.mubr.bf16.mxu0 0
    %410 = vmatmul.mubr.bf16.gmra.mrb[0].mxu0 %v372
    %v411 = vpop.f32.mrb[0].mxu0
    %v412 = vadd.f32 0.0, %v411
    %v413 = vpop.f32.mrb[0].mxu0
    %v414 = vpop.f32.mrb[0].mxu0
    %v415 = vpop.f32.mrb[0].mxu0
    %416 = vdwg.mxu0
    %417 = vrot.lane.b32.xlu0 %v187, 112
    %v418 = vpop.permute.xlu0 %417
    %419 = vrot.lane.b32.xlu0 %v187, 80
    %v420 = vpop.permute.xlu0 %419
    %v422 = vsel %vm191, %v418, 0
    %v425 = vsel %vm191, %v420, 0
    %427 = vmatprep.subr.bf16.mxu0 0
    %428 = vmatpush1.bf16.xpose.msra.mxu0 %v425
    %429 = vmatprep.subr.bf16.mxu0 0
    %430 = vmatpush1.bf16.xpose.msra.mxu0 0
    %431 = vmatprep.subr.bf16.mxu0 0
    %432 = vmatpush1.bf16.xpose.msra.mxu0 0
    %433 = vmatprep.subr.bf16.mxu0 0
    %434 = vmatpush1.bf16.xpose.msra.mxu0 0
    %435 = vmatprep.subr.bf16.mxu0 0
    %436 = vmatpush1.bf16.xpose.msra.mxu0 0
    %437 = vmatprep.subr.bf16.mxu0 0
    %438 = vmatpush1.bf16.xpose.msra.mxu0 0
    %439 = vmatprep.subr.bf16.mxu0 0
    %440 = vmatpush1.bf16.xpose.msra.mxu0 0
    %441 = vmatprep.subr.bf16.mxu0 0
    %442 = vmatpush1.bf16.xpose.msra.mxu0 0
    %443 = vmatprep.subr.bf16.mxu0 0
    %444 = vmatpush1.bf16.xpose.msra.mxu0 0
    %445 = vmatprep.subr.bf16.mxu0 0
    %446 = vmatpush1.bf16.xpose.msra.mxu0 0
    %447 = vmatprep.subr.bf16.mxu0 0
    %448 = vmatpush1.bf16.xpose.msra.mxu0 0
    %449 = vmatprep.subr.bf16.mxu0 0
    %450 = vmatpush1.bf16.xpose.msra.mxu0 0
    %451 = vmatprep.subr.bf16.mxu0 0
    %452 = vmatpush1.bf16.xpose.msra.mxu0 0
    %453 = vmatprep.subr.bf16.mxu0 0
    %454 = vmatpush1.bf16.xpose.msra.mxu0 0
    %455 = vmatprep.subr.bf16.mxu0 0
    %456 = vmatpush1.bf16.xpose.msra.mxu0 0
    %457 = vmatprep.subr.bf16.mxu0 0
    %458 = vmatpush1.bf16.xpose.msra.mxu0 0
    %459 = vmatprep.mubr.bf16.mxu0 0
    %460 = vmatmul.mubr.bf16.gmra.mrb[0].mxu0 %v422
    %v461 = vpop.f32.mrb[0].mxu0
    %v462 = vadd.f32 0.0, %v461
    %v463 = vpop.f32.mrb[0].mxu0
    %v464 = vpop.f32.mrb[0].mxu0
    %v465 = vpop.f32.mrb[0].mxu0
    %466 = vdwg.mxu0
    %v467 = vmul.f32 %v462, 0.35355338
    %v468 = vadd.f32 %v467, %v242
    %v469 = vsel %vm191, %v468, -inf
    %470 = vmax.xlane.f32.xlu0 %v469
    %v471 = vpop.xlane.xlu0 %470
    %v472 = vsub.f32 %v468, %v471
    %v473 = vmul.f32 %v472, 1.442695
    %v474 = vpow.pop %v473
    %v475 = vsel %vm191, %v474, 0.0
    %476 = vadd.xlane.f32.xlu0 %v475
    %v477 = vpop.xlane.xlu0 %476
    %v478 = vrcp.pop %v477
    %v479 = vmul.f32 %v474, %v478
    %v480 = vpack.c.bf16 %v479, %v479
    %481 = vrot.lane.b32.xlu0 %v187, 48
    %v482 = vpop.permute.xlu0 %481
    %v484 = vsel %vm191, %v480, 0
    %v487 = vsel %vm261, %v482, 0
    %489 = vmatprep.subr.bf16.mxu0 0
    %490 = vmatpush1.bf16.msra.mxu0 %v487
    %491 = vmatprep.subr.bf16.mxu0 0
    %492 = vmatpush1.bf16.msra.mxu0 0
    %493 = vmatprep.subr.bf16.mxu0 0
    %494 = vmatpush1.bf16.msra.mxu0 0
    %495 = vmatprep.subr.bf16.mxu0 0
    %496 = vmatpush1.bf16.msra.mxu0 0
    %497 = vmatprep.subr.bf16.mxu0 0
    %498 = vmatpush1.bf16.msra.mxu0 0
    %499 = vmatprep.subr.bf16.mxu0 0
    %500 = vmatpush1.bf16.msra.mxu0 0
    %501 = vmatprep.subr.bf16.mxu0 0
    %502 = vmatpush1.bf16.msra.mxu0 0
    %503 = vmatprep.subr.bf16.mxu0 0
    %504 = vmatpush1.bf16.msra.mxu0 0
    %505 = vmatprep.subr.bf16.mxu0 0
    %506 = vmatpush1.bf16.msra.mxu0 0
    %507 = vmatprep.subr.bf16.mxu0 0
    %508 = vmatpush1.bf16.msra.mxu0 0
    %509 = vmatprep.subr.bf16.mxu0 0
    %510 = vmatpush1.bf16.msra.mxu0 0
    %511 = vmatprep.subr.bf16.mxu0 0
    %512 = vmatpush1.bf16.msra.mxu0 0
    %513 = vmatprep.subr.bf16.mxu0 0
    %514 = vmatpush1.bf16.msra.mxu0 0
    %515 = vmatprep.subr.bf16.mxu0 0
    %516 = vmatpush1.bf16.msra.mxu0 0
    %517 = vmatprep.subr.bf16.mxu0 0
    %518 = vmatpush1.bf16.msra.mxu0 0
    %519 = vmatprep.subr.bf16.mxu0 0
    %520 = vmatpush1.bf16.msra.mxu0 0
    %521 = vmatprep.mubr.bf16.mxu0 0
    %522 = vmatmul.mubr.bf16.gmra.mrb[0].mxu0 %v484
    %v523 = vpop.f32.mrb[0].mxu0
    %v524 = vadd.f32 0.0, %v523
    %v525 = vpop.f32.mrb[0].mxu0
    %v526 = vpop.f32.mrb[0].mxu0
    %v527 = vpop.f32.mrb[0].mxu0
    %528 = vdwg.mxu0
    %529 = vrot.lane.b32.xlu0 %v187, 104
    %v530 = vpop.permute.xlu0 %529
    %531 = vrot.lane.b32.xlu0 %v187, 72
    %v532 = vpop.permute.xlu0 %531
    %v534 = vsel %vm191, %v530, 0
    %v537 = vsel %vm191, %v532, 0
    %539 = vmatprep.subr.bf16.mxu0 0
    %540 = vmatpush1.bf16.xpose.msra.mxu0 %v537
    %541 = vmatprep.subr.bf16.mxu0 0
    %542 = vmatpush1.bf16.xpose.msra.mxu0 0
    %543 = vmatprep.subr.bf16.mxu0 0
    %544 = vmatpush1.bf16.xpose.msra.mxu0 0
    %545 = vmatprep.subr.bf16.mxu0 0
    %546 = vmatpush1.bf16.xpose.msra.mxu0 0
    %547 = vmatprep.subr.bf16.mxu0 0
    %548 = vmatpush1.bf16.xpose.msra.mxu0 0
    %549 = vmatprep.subr.bf16.mxu0 0
    %550 = vmatpush1.bf16.xpose.msra.mxu0 0
    %551 = vmatprep.subr.bf16.mxu0 0
    %552 = vmatpush1.bf16.xpose.msra.mxu0 0
    %553 = vmatprep.subr.bf16.mxu0 0
    %554 = vmatpush1.bf16.xpose.msra.mxu0 0
    %555 = vmatprep.subr.bf16.mxu0 0
    %556 = vmatpush1.bf16.xpose.msra.mxu0 0
    %557 = vmatprep.subr.bf16.mxu0 0
    %558 = vmatpush1.bf16.xpose.msra.mxu0 0
    %559 = vmatprep.subr.bf16.mxu0 0
    %560 = vmatpush1.bf16.xpose.msra.mxu0 0
    %561 = vmatprep.subr.bf16.mxu0 0
    %562 = vmatpush1.bf16.xpose.msra.mxu0 0
    %563 = vmatprep.subr.bf16.mxu0 0
    %564 = vmatpush1.bf16.xpose.msra.mxu0 0
    %565 = vmatprep.subr.bf16.mxu0 0
    %566 = vmatpush1.bf16.xpose.msra.mxu0 0
    %567 = vmatprep.subr.bf16.mxu0 0
    %568 = vmatpush1.bf16.xpose.msra.mxu0 0
    %569 = vmatprep.subr.bf16.mxu0 0
    %570 = vmatpush1.bf16.xpose.msra.mxu0 0
    %571 = vmatprep.mubr.bf16.mxu0 0
    %572 = vmatmul.mubr.bf16.gmra.mrb[0].mxu0 %v534
    %v573 = vpop.f32.mrb[0].mxu0
    %v574 = vadd.f32 0.0, %v573
    %v575 = vpop.f32.mrb[0].mxu0
    %v576 = vpop.f32.mrb[0].mxu0
    %v577 = vpop.f32.mrb[0].mxu0
    %578 = vdwg.mxu0
    %v579 = vmul.f32 %v574, 0.35355338
    %v580 = vadd.f32 %v579, %v242
    %v581 = vsel %vm191, %v580, -inf
    %582 = vmax.xlane.f32.xlu0 %v581
    %v583 = vpop.xlane.xlu0 %582
    %v584 = vsub.f32 %v580, %v583
    %v585 = vmul.f32 %v584, 1.442695
    %v586 = vpow.pop %v585
    %v587 = vsel %vm191, %v586, 0.0
    %588 = vadd.xlane.f32.xlu0 %v587
    %v589 = vpop.xlane.xlu0 %588
    %v590 = vrcp.pop %v589
    %v591 = vmul.f32 %v586, %v590
    %v592 = vpack.c.bf16 %v591, %v591
    %593 = vrot.lane.b32.xlu0 %v187, 40
    %v594 = vpop.permute.xlu0 %593
    %v596 = vsel %vm191, %v592, 0
    %v599 = vsel %vm261, %v594, 0
    %601 = vmatprep.subr.bf16.mxu0 0
    %602 = vmatpush1.bf16.msra.mxu0 %v599
    %603 = vmatprep.subr.bf16.mxu0 0
    %604 = vmatpush1.bf16.msra.mxu0 0
    %605 = vmatprep.subr.bf16.mxu0 0
    %606 = vmatpush1.bf16.msra.mxu0 0
    %607 = vmatprep.subr.bf16.mxu0 0
    %608 = vmatpush1.bf16.msra.mxu0 0
    %609 = vmatprep.subr.bf16.mxu0 0
    %610 = vmatpush1.bf16.msra.mxu0 0
    %611 = vmatprep.subr.bf16.mxu0 0
    %612 = vmatpush1.bf16.msra.mxu0 0
    %613 = vmatprep.subr.bf16.mxu0 0
    %614 = vmatpush1.bf16.msra.mxu0 0
    %615 = vmatprep.subr.bf16.mxu0 0
    %616 = vmatpush1.bf16.msra.mxu0 0
    %617 = vmatprep.subr.bf16.mxu0 0
    %618 = vmatpush1.bf16.msra.mxu0 0
    %619 = vmatprep.subr.bf16.mxu0 0
    %620 = vmatpush1.bf16.msra.mxu0 0
    %621 = vmatprep.subr.bf16.mxu0 0
    %622 = vmatpush1.bf16.msra.mxu0 0
    %623 = vmatprep.subr.bf16.mxu0 0
    %624 = vmatpush1.bf16.msra.mxu0 0
    %625 = vmatprep.subr.bf16.mxu0 0
    %626 = vmatpush1.bf16.msra.mxu0 0
    %627 = vmatprep.subr.bf16.mxu0 0
    %628 = vmatpush1.bf16.msra.mxu0 0
    %629 = vmatprep.subr.bf16.mxu0 0
    %630 = vmatpush1.bf16.msra.mxu0 0
    %631 = vmatprep.subr.bf16.mxu0 0
    %632 = vmatpush1.bf16.msra.mxu0 0
    %633 = vmatprep.mubr.bf16.mxu0 0
    %634 = vmatmul.mubr.bf16.gmra.mrb[0].mxu0 %v596
    %v635 = vpop.f32.mrb[0].mxu0
    %v636 = vadd.f32 0.0, %v635
    %v637 = vpop.f32.mrb[0].mxu0
    %v638 = vpop.f32.mrb[0].mxu0
    %v639 = vpop.f32.mrb[0].mxu0
    %640 = vdwg.mxu0
    %642 = vrot.lane.b32.xlu0 %v412, 8
    %v643 = vpop.permute.xlu0 %642
    %646 = vrot.lane.b32.xlu0 %v524, 16
    %v647 = vpop.permute.xlu0 %646
    %650 = vrot.lane.b32.xlu0 %v636, 24
    %v651 = vpop.permute.xlu0 %650
    %v653 = vsel %vm191, %v300, %v643
    %vm654 = vcmask 130048
    %v655 = vsel %vm654, %v653, %v647
    %vm656 = vcmask 195584
    %v657 = vsel %vm656, %v655, %v651
    %v658 = vpack.c.bf16 %v184, %v184
    %660 = vrot.lane.b32.xlu0 %v658, 96
    %v661 = vpop.permute.xlu0 %660
    %v663 = vsel %vm191, %v658, 0
    %v666 = vsel %vm191, %v661, 0
    %668 = vmatprep.subr.bf16.mxu0 0
    %669 = vmatpush1.bf16.xpose.msra.mxu0 %v666
    %670 = vmatprep.subr.bf16.mxu0 0
    %671 = vmatpush1.bf16.xpose.msra.mxu0 0
    %672 = vmatprep.subr.bf16.mxu0 0
    %673 = vmatpush1.bf16.xpose.msra.mxu0 0
    %674 = vmatprep.subr.bf16.mxu0 0
    %675 = vmatpush1.bf16.xpose.msra.mxu0 0
    %676 = vmatprep.subr.bf16.mxu0 0
    %677 = vmatpush1.bf16.xpose.msra.mxu0 0
    %678 = vmatprep.subr.bf16.mxu0 0
    %679 = vmatpush1.bf16.xpose.msra.mxu0 0
    %680 = vmatprep.subr.bf16.mxu0 0
    %681 = vmatpush1.bf16.xpose.msra.mxu0 0
    %682 = vmatprep.subr.bf16.mxu0 0
    %683 = vmatpush1.bf16.xpose.msra.mxu0 0
    %684 = vmatprep.subr.bf16.mxu0 0
    %685 = vmatpush1.bf16.xpose.msra.mxu0 0
    %686 = vmatprep.subr.bf16.mxu0 0
    %687 = vmatpush1.bf16.xpose.msra.mxu0 0
    %688 = vmatprep.subr.bf16.mxu0 0
    %689 = vmatpush1.bf16.xpose.msra.mxu0 0
    %690 = vmatprep.subr.bf16.mxu0 0
    %691 = vmatpush1.bf16.xpose.msra.mxu0 0
    %692 = vmatprep.subr.bf16.mxu0 0
    %693 = vmatpush1.bf16.xpose.msra.mxu0 0
    %694 = vmatprep.subr.bf16.mxu0 0
    %695 = vmatpush1.bf16.xpose.msra.mxu0 0
    %696 = vmatprep.subr.bf16.mxu0 0
    %697 = vmatpush1.bf16.xpose.msra.mxu0 0
    %698 = vmatprep.subr.bf16.mxu0 0
    %699 = vmatpush1.bf16.xpose.msra.mxu0 0
    %700 = vmatprep.mubr.bf16.mxu0 0
    %701 = vmatmul.mubr.bf16.gmra.mrb[0].mxu0 %v663
    %v702 = vpop.f32.mrb[0].mxu0
    %v703 = vadd.f32 0.0, %v702
    %v704 = vpop.f32.mrb[0].mxu0
    %v705 = vpop.f32.mrb[0].mxu0
    %v706 = vpop.f32.mrb[0].mxu0
    %707 = vdwg.mxu0
    %v708 = vmul.f32 %v703, 0.35355338
    %v709 = vlaneseq
    %v710 = vshrl.u32 %v709, 7
    %v711 = vsub.s32 1, %v710
    %v712 = vrot.slane %v70, %v711
    %v713 = vadd.f32 %v708, %v712
    %v714 = vsel %vm191, %v713, -inf
    %715 = vmax.xlane.f32.xlu0 %v714
    %v716 = vpop.xlane.xlu0 %715
    %v717 = vsub.f32 %v713, %v716
    %v718 = vmul.f32 %v717, 1.442695
    %v719 = vpow.pop %v718
    %v720 = vsel %vm191, %v719, 0.0
    %721 = vadd.xlane.f32.xlu0 %v720
    %v722 = vpop.xlane.xlu0 %721
    %v723 = vrcp.pop %v722
    %v724 = vmul.f32 %v719, %v723
    %v725 = vpack.c.bf16 %v724, %v724
    %726 = vrot.lane.b32.xlu0 %v658, 64
    %v727 = vpop.permute.xlu0 %726
    %v729 = vsel %vm191, %v725, 0
    %v732 = vsel %vm261, %v727, 0
    %734 = vmatprep.subr.bf16.mxu0 0
    %735 = vmatpush1.bf16.msra.mxu0 %v732
    %736 = vmatprep.subr.bf16.mxu0 0
    %737 = vmatpush1.bf16.msra.mxu0 0
    %738 = vmatprep.subr.bf16.mxu0 0
    %739 = vmatpush1.bf16.msra.mxu0 0
    %740 = vmatprep.subr.bf16.mxu0 0
    %741 = vmatpush1.bf16.msra.mxu0 0
    %742 = vmatprep.subr.bf16.mxu0 0
    %743 = vmatpush1.bf16.msra.mxu0 0
    %744 = vmatprep.subr.bf16.mxu0 0
    %745 = vmatpush1.bf16.msra.mxu0 0
    %746 = vmatprep.subr.bf16.mxu0 0
    %747 = vmatpush1.bf16.msra.mxu0 0
    %748 = vmatprep.subr.bf16.mxu0 0
    %749 = vmatpush1.bf16.msra.mxu0 0
    %750 = vmatprep.subr.bf16.mxu0 0
    %751 = vmatpush1.bf16.msra.mxu0 0
    %752 = vmatprep.subr.bf16.mxu0 0
    %753 = vmatpush1.bf16.msra.mxu0 0
    %754 = vmatprep.subr.bf16.mxu0 0
    %755 = vmatpush1.bf16.msra.mxu0 0
    %756 = vmatprep.subr.bf16.mxu0 0
    %757 = vmatpush1.bf16.msra.mxu0 0
    %758 = vmatprep.subr.bf16.mxu0 0
    %759 = vmatpush1.bf16.msra.mxu0 0
    %760 = vmatprep.subr.bf16.mxu0 0
    %761 = vmatpush1.bf16.msra.mxu0 0
    %762 = vmatprep.subr.bf16.mxu0 0
    %763 = vmatpush1.bf16.msra.mxu0 0
    %764 = vmatprep.subr.bf16.mxu0 0
    %765 = vmatpush1.bf16.msra.mxu0 0
    %766 = vmatprep.mubr.bf16.mxu0 0
    %767 = vmatmul.mubr.bf16.gmra.mrb[0].mxu0 %v729
    %v768 = vpop.f32.mrb[0].mxu0
    %v769 = vadd.f32 0.0, %v768
    %v770 = vpop.f32.mrb[0].mxu0
    %v771 = vpop.f32.mrb[0].mxu0
    %v772 = vpop.f32.mrb[0].mxu0
    %773 = vdwg.mxu0
    %774 = vrot.lane.b32.xlu0 %v658, 120
    %v775 = vpop.permute.xlu0 %774
    %776 = vrot.lane.b32.xlu0 %v658, 88
    %v777 = vpop.permute.xlu0 %776
    %v779 = vsel %vm191, %v775, 0
    %v782 = vsel %vm191, %v777, 0
    %784 = vmatprep.subr.bf16.mxu0 0
    %785 = vmatpush1.bf16.xpose.msra.mxu0 %v782
    %786 = vmatprep.subr.bf16.mxu0 0
    %787 = vmatpush1.bf16.xpose.msra.mxu0 0
    %788 = vmatprep.subr.bf16.mxu0 0
    %789 = vmatpush1.bf16.xpose.msra.mxu0 0
    %790 = vmatprep.subr.bf16.mxu0 0
    %791 = vmatpush1.bf16.xpose.msra.mxu0 0
    %792 = vmatprep.subr.bf16.mxu0 0
    %793 = vmatpush1.bf16.xpose.msra.mxu0 0
    %794 = vmatprep.subr.bf16.mxu0 0
    %795 = vmatpush1.bf16.xpose.msra.mxu0 0
    %796 = vmatprep.subr.bf16.mxu0 0
    %797 = vmatpush1.bf16.xpose.msra.mxu0 0
    %798 = vmatprep.subr.bf16.mxu0 0
    %799 = vmatpush1.bf16.xpose.msra.mxu0 0
    %800 = vmatprep.subr.bf16.mxu0 0
    %801 = vmatpush1.bf16.xpose.msra.mxu0 0
    %802 = vmatprep.subr.bf16.mxu0 0
    %803 = vmatpush1.bf16.xpose.msra.mxu0 0
    %804 = vmatprep.subr.bf16.mxu0 0
    %805 = vmatpush1.bf16.xpose.msra.mxu0 0
    %806 = vmatprep.subr.bf16.mxu0 0
    %807 = vmatpush1.bf16.xpose.msra.mxu0 0
    %808 = vmatprep.subr.bf16.mxu0 0
    %809 = vmatpush1.bf16.xpose.msra.mxu0 0
    %810 = vmatprep.subr.bf16.mxu0 0
    %811 = vmatpush1.bf16.xpose.msra.mxu0 0
    %812 = vmatprep.subr.bf16.mxu0 0
    %813 = vmatpush1.bf16.xpose.msra.mxu0 0
    %814 = vmatprep.subr.bf16.mxu0 0
    %815 = vmatpush1.bf16.xpose.msra.mxu0 0
    %816 = vmatprep.mubr.bf16.mxu0 0
    %817 = vmatmul.mubr.bf16.gmra.mrb[0].mxu0 %v779
    %v818 = vpop.f32.mrb[0].mxu0
    %v819 = vadd.f32 0.0, %v818
    %v820 = vpop.f32.mrb[0].mxu0
    %v821 = vpop.f32.mrb[0].mxu0
    %v822 = vpop.f32.mrb[0].mxu0
    %823 = vdwg.mxu0
    %v824 = vmul.f32 %v819, 0.35355338
    %v825 = vadd.f32 %v824, %v712
    %v826 = vsel %vm191, %v825, -inf
    %827 = vmax.xlane.f32.xlu0 %v826
    %v828 = vpop.xlane.xlu0 %827
    %v829 = vsub.f32 %v825, %v828
    %v830 = vmul.f32 %v829, 1.442695
    %v831 = vpow.pop %v830
    %v832 = vsel %vm191, %v831, 0.0
    %833 = vadd.xlane.f32.xlu0 %v832
    %v834 = vpop.xlane.xlu0 %833
    %v835 = vrcp.pop %v834
    %v836 = vmul.f32 %v831, %v835
    %v837 = vpack.c.bf16 %v836, %v836
    %838 = vrot.lane.b32.xlu0 %v658, 56
    %v839 = vpop.permute.xlu0 %838
    %v841 = vsel %vm191, %v837, 0
    %v844 = vsel %vm261, %v839, 0
    %846 = vmatprep.subr.bf16.mxu0 0
    %847 = vmatpush1.bf16.msra.mxu0 %v844
    %848 = vmatprep.subr.bf16.mxu0 0
    %849 = vmatpush1.bf16.msra.mxu0 0
    %850 = vmatprep.subr.bf16.mxu0 0
    %851 = vmatpush1.bf16.msra.mxu0 0
    %852 = vmatprep.subr.bf16.mxu0 0
    %853 = vmatpush1.bf16.msra.mxu0 0
    %854 = vmatprep.subr.bf16.mxu0 0
    %855 = vmatpush1.bf16.msra.mxu0 0
    %856 = vmatprep.subr.bf16.mxu0 0
    %857 = vmatpush1.bf16.msra.mxu0 0
    %858 = vmatprep.subr.bf16.mxu0 0
    %859 = vmatpush1.bf16.msra.mxu0 0
    %860 = vmatprep.subr.bf16.mxu0 0
    %861 = vmatpush1.bf16.msra.mxu0 0
    %862 = vmatprep.subr.bf16.mxu0 0
    %863 = vmatpush1.bf16.msra.mxu0 0
    %864 = vmatprep.subr.bf16.mxu0 0
    %865 = vmatpush1.bf16.msra.mxu0 0
    %866 = vmatprep.subr.bf16.mxu0 0
    %867 = vmatpush1.bf16.msra.mxu0 0
    %868 = vmatprep.subr.bf16.mxu0 0
    %869 = vmatpush1.bf16.msra.mxu0 0
    %870 = vmatprep.subr.bf16.mxu0 0
    %871 = vmatpush1.bf16.msra.mxu0 0
    %872 = vmatprep.subr.bf16.mxu0 0
    %873 = vmatpush1.bf16.msra.mxu0 0
    %874 = vmatprep.subr.bf16.mxu0 0
    %875 = vmatpush1.bf16.msra.mxu0 0
    %876 = vmatprep.subr.bf16.mxu0 0
    %877 = vmatpush1.bf16.msra.mxu0 0
    %878 = vmatprep.mubr.bf16.mxu0 0
    %879 = vmatmul.mubr.bf16.gmra.mrb[0].mxu0 %v841
    %v880 = vpop.f32.mrb[0].mxu0
    %v881 = vadd.f32 0.0, %v880
    %v882 = vpop.f32.mrb[0].mxu0
    %v883 = vpop.f32.mrb[0].mxu0
    %v884 = vpop.f32.mrb[0].mxu0
    %885 = vdwg.mxu0
    %886 = vrot.lane.b32.xlu0 %v658, 112
    %v887 = vpop.permute.xlu0 %886
    %888 = vrot.lane.b32.xlu0 %v658, 80
    %v889 = vpop.permute.xlu0 %888
    %v891 = vsel %vm191, %v887, 0
    %v894 = vsel %vm191, %v889, 0
    %896 = vmatprep.subr.bf16.mxu0 0
    %897 = vmatpush1.bf16.xpose.msra.mxu0 %v894
    %898 = vmatprep.subr.bf16.mxu0 0
    %899 = vmatpush1.bf16.xpose.msra.mxu0 0
    %900 = vmatprep.subr.bf16.mxu0 0
    %901 = vmatpush1.bf16.xpose.msra.mxu0 0
    %902 = vmatprep.subr.bf16.mxu0 0
    %903 = vmatpush1.bf16.xpose.msra.mxu0 0
    %904 = vmatprep.subr.bf16.mxu0 0
    %905 = vmatpush1.bf16.xpose.msra.mxu0 0
    %906 = vmatprep.subr.bf16.mxu0 0
    %907 = vmatpush1.bf16.xpose.msra.mxu0 0
    %908 = vmatprep.subr.bf16.mxu0 0
    %909 = vmatpush1.bf16.xpose.msra.mxu0 0
    %910 = vmatprep.subr.bf16.mxu0 0
    %911 = vmatpush1.bf16.xpose.msra.mxu0 0
    %912 = vmatprep.subr.bf16.mxu0 0
    %913 = vmatpush1.bf16.xpose.msra.mxu0 0
    %914 = vmatprep.subr.bf16.mxu0 0
    %915 = vmatpush1.bf16.xpose.msra.mxu0 0
    %916 = vmatprep.subr.bf16.mxu0 0
    %917 = vmatpush1.bf16.xpose.msra.mxu0 0
    %918 = vmatprep.subr.bf16.mxu0 0
    %919 = vmatpush1.bf16.xpose.msra.mxu0 0
    %920 = vmatprep.subr.bf16.mxu0 0
    %921 = vmatpush1.bf16.xpose.msra.mxu0 0
    %922 = vmatprep.subr.bf16.mxu0 0
    %923 = vmatpush1.bf16.xpose.msra.mxu0 0
    %924 = vmatprep.subr.bf16.mxu0 0
    %925 = vmatpush1.bf16.xpose.msra.mxu0 0
    %926 = vmatprep.subr.bf16.mxu0 0
    %927 = vmatpush1.bf16.xpose.msra.mxu0 0
    %928 = vmatprep.mubr.bf16.mxu0 0
    %929 = vmatmul.mubr.bf16.gmra.mrb[0].mxu0 %v891
    %v930 = vpop.f32.mrb[0].mxu0
    %v931 = vadd.f32 0.0, %v930
    %v932 = vpop.f32.mrb[0].mxu0
    %v933 = vpop.f32.mrb[0].mxu0
    %v934 = vpop.f32.mrb[0].mxu0
    %935 = vdwg.mxu0
    %v936 = vmul.f32 %v931, 0.35355338
    %v937 = vadd.f32 %v936, %v712
    %v938 = vsel %vm191, %v937, -inf
    %939 = vmax.xlane.f32.xlu0 %v938
    %v940 = vpop.xlane.xlu0 %939
    %v941 = vsub.f32 %v937, %v940
    %v942 = vmul.f32 %v941, 1.442695
    %v943 = vpow.pop %v942
    %v944 = vsel %vm191, %v943, 0.0
    %945 = vadd.xlane.f32.xlu0 %v944
    %v946 = vpop.xlane.xlu0 %945
    %v947 = vrcp.pop %v946
    %v948 = vmul.f32 %v943, %v947
    %v949 = vpack.c.bf16 %v948, %v948
    %950 = vrot.lane.b32.xlu0 %v658, 48
    %v951 = vpop.permute.xlu0 %950
    %v953 = vsel %vm191, %v949, 0
    %v956 = vsel %vm261, %v951, 0
    %958 = vmatprep.subr.bf16.mxu0 0
    %959 = vmatpush1.bf16.msra.mxu0 %v956
    %960 = vmatprep.subr.bf16.mxu0 0
    %961 = vmatpush1.bf16.msra.mxu0 0
    %962 = vmatprep.subr.bf16.mxu0 0
    %963 = vmatpush1.bf16.msra.mxu0 0
    %964 = vmatprep.subr.bf16.mxu0 0
    %965 = vmatpush1.bf16.msra.mxu0 0
    %966 = vmatprep.subr.bf16.mxu0 0
    %967 = vmatpush1.bf16.msra.mxu0 0
    %968 = vmatprep.subr.bf16.mxu0 0
    %969 = vmatpush1.bf16.msra.mxu0 0
    %970 = vmatprep.subr.bf16.mxu0 0
    %971 = vmatpush1.bf16.msra.mxu0 0
    %972 = vmatprep.subr.bf16.mxu0 0
    %973 = vmatpush1.bf16.msra.mxu0 0
    %974 = vmatprep.subr.bf16.mxu0 0
    %975 = vmatpush1.bf16.msra.mxu0 0
    %976 = vmatprep.subr.bf16.mxu0 0
    %977 = vmatpush1.bf16.msra.mxu0 0
    %978 = vmatprep.subr.bf16.mxu0 0
    %979 = vmatpush1.bf16.msra.mxu0 0
    %980 = vmatprep.subr.bf16.mxu0 0
    %981 = vmatpush1.bf16.msra.mxu0 0
    %982 = vmatprep.subr.bf16.mxu0 0
    %983 = vmatpush1.bf16.msra.mxu0 0
    %984 = vmatprep.subr.bf16.mxu0 0
    %985 = vmatpush1.bf16.msra.mxu0 0
    %986 = vmatprep.subr.bf16.mxu0 0
    %987 = vmatpush1.bf16.msra.mxu0 0
    %988 = vmatprep.subr.bf16.mxu0 0
    %989 = vmatpush1.bf16.msra.mxu0 0
    %990 = vmatprep.mubr.bf16.mxu0 0
    %991 = vmatmul.mubr.bf16.gmra.mrb[0].mxu0 %v953
    %v992 = vpop.f32.mrb[0].mxu0
    %v993 = vadd.f32 0.0, %v992
    %v994 = vpop.f32.mrb[0].mxu0
    %v995 = vpop.f32.mrb[0].mxu0
    %v996 = vpop.f32.mrb[0].mxu0
    %997 = vdwg.mxu0
    %998 = vrot.lane.b32.xlu0 %v658, 104
    %v999 = vpop.permute.xlu0 %998
    %1000 = vrot.lane.b32.xlu0 %v658, 72
    %v1001 = vpop.permute.xlu0 %1000
    %v1003 = vsel %vm191, %v999, 0
    %v1006 = vsel %vm191, %v1001, 0
    %1008 = vmatprep.subr.bf16.mxu0 0
    %1009 = vmatpush1.bf16.xpose.msra.mxu0 %v1006
    %1010 = vmatprep.subr.bf16.mxu0 0
    %1011 = vmatpush1.bf16.xpose.msra.mxu0 0
    %1012 = vmatprep.subr.bf16.mxu0 0
    %1013 = vmatpush1.bf16.xpose.msra.mxu0 0
    %1014 = vmatprep.subr.bf16.mxu0 0
    %1015 = vmatpush1.bf16.xpose.msra.mxu0 0
    %1016 = vmatprep.subr.bf16.mxu0 0
    %1017 = vmatpush1.bf16.xpose.msra.mxu0 0
    %1018 = vmatprep.subr.bf16.mxu0 0
    %1019 = vmatpush1.bf16.xpose.msra.mxu0 0
    %1020 = vmatprep.subr.bf16.mxu0 0
    %1021 = vmatpush1.bf16.xpose.msra.mxu0 0
    %1022 = vmatprep.subr.bf16.mxu0 0
    %1023 = vmatpush1.bf16.xpose.msra.mxu0 0
    %1024 = vmatprep.subr.bf16.mxu0 0
    %1025 = vmatpush1.bf16.xpose.msra.mxu0 0
    %1026 = vmatprep.subr.bf16.mxu0 0
    %1027 = vmatpush1.bf16.xpose.msra.mxu0 0
    %1028 = vmatprep.subr.bf16.mxu0 0
    %1029 = vmatpush1.bf16.xpose.msra.mxu0 0
    %1030 = vmatprep.subr.bf16.mxu0 0
    %1031 = vmatpush1.bf16.xpose.msra.mxu0 0
    %1032 = vmatprep.subr.bf16.mxu0 0
    %1033 = vmatpush1.bf16.xpose.msra.mxu0 0
    %1034 = vmatprep.subr.bf16.mxu0 0
    %1035 = vmatpush1.bf16.xpose.msra.mxu0 0
    %1036 = vmatprep.subr.bf16.mxu0 0
    %1037 = vmatpush1.bf16.xpose.msra.mxu0 0
    %1038 = vmatprep.subr.bf16.mxu0 0
    %1039 = vmatpush1.bf16.xpose.msra.mxu0 0
    %1040 = vmatprep.mubr.bf16.mxu0 0
    %1041 = vmatmul.mubr.bf16.gmra.mrb[0].mxu0 %v1003
    %v1042 = vpop.f32.mrb[0].mxu0
    %v1043 = vadd.f32 0.0, %v1042
    %v1044 = vpop.f32.mrb[0].mxu0
    %v1045 = vpop.f32.mrb[0].mxu0
    %v1046 = vpop.f32.mrb[0].mxu0
    %1047 = vdwg.mxu0
    %v1048 = vmul.f32 %v1043, 0.35355338
    %v1049 = vadd.f32 %v1048, %v712
    %v1050 = vsel %vm191, %v1049, -inf
    %1051 = vmax.xlane.f32.xlu0 %v1050
    %v1052 = vpop.xlane.xlu0 %1051
    %v1053 = vsub.f32 %v1049, %v1052
    %v1054 = vmul.f32 %v1053, 1.442695
    %v1055 = vpow.pop %v1054
    %v1056 = vsel %vm191, %v1055, 0.0
    %1057 = vadd.xlane.f32.xlu0 %v1056
    %v1058 = vpop.xlane.xlu0 %1057
    %v1059 = vrcp.pop %v1058
    %v1060 = vmul.f32 %v1055, %v1059
    %v1061 = vpack.c.bf16 %v1060, %v1060
    %1062 = vrot.lane.b32.xlu0 %v658, 40
    %v1063 = vpop.permute.xlu0 %1062
    %v1065 = vsel %vm191, %v1061, 0
    %v1068 = vsel %vm261, %v1063, 0
    %1070 = vmatprep.subr.bf16.mxu0 0
    %1071 = vmatpush1.bf16.msra.mxu0 %v1068
    %1072 = vmatprep.subr.bf16.mxu0 0
    %1073 = vmatpush1.bf16.msra.mxu0 0
    %1074 = vmatprep.subr.bf16.mxu0 0
    %1075 = vmatpush1.bf16.msra.mxu0 0
    %1076 = vmatprep.subr.bf16.mxu0 0
    %1077 = vmatpush1.bf16.msra.mxu0 0
    %1078 = vmatprep.subr.bf16.mxu0 0
    %1079 = vmatpush1.bf16.msra.mxu0 0
    %1080 = vmatprep.subr.bf16.mxu0 0
    %1081 = vmatpush1.bf16.msra.mxu0 0
    %1082 = vmatprep.subr.bf16.mxu0 0
    %1083 = vmatpush1.bf16.msra.mxu0 0
    %1084 = vmatprep.subr.bf16.mxu0 0
    %1085 = vmatpush1.bf16.msra.mxu0 0
    %1086 = vmatprep.subr.bf16.mxu0 0
    %1087 = vmatpush1.bf16.msra.mxu0 0
    %1088 = vmatprep.subr.bf16.mxu0 0
    %1089 = vmatpush1.bf16.msra.mxu0 0
    %1090 = vmatprep.subr.bf16.mxu0 0
    %1091 = vmatpush1.bf16.msra.mxu0 0
    %1092 = vmatprep.subr.bf16.mxu0 0
    %1093 = vmatpush1.bf16.msra.mxu0 0
    %1094 = vmatprep.subr.bf16.mxu0 0
    %1095 = vmatpush1.bf16.msra.mxu0 0
    %1096 = vmatprep.subr.bf16.mxu0 0
    %1097 = vmatpush1.bf16.msra.mxu0 0
    %1098 = vmatprep.subr.bf16.mxu0 0
    %1099 = vmatpush1.bf16.msra.mxu0 0
    %1100 = vmatprep.subr.bf16.mxu0 0
    %1101 = vmatpush1.bf16.msra.mxu0 0
    %1102 = vmatprep.mubr.bf16.mxu0 0
    %1103 = vmatmul.mubr.bf16.gmra.mrb[0].mxu0 %v1065
    %v1104 = vpop.f32.mrb[0].mxu0
    %v1105 = vadd.f32 0.0, %v1104
    %v1106 = vpop.f32.mrb[0].mxu0
    %v1107 = vpop.f32.mrb[0].mxu0
    %v1108 = vpop.f32.mrb[0].mxu0
    %1109 = vdwg.mxu0
    %1111 = vrot.lane.b32.xlu0 %v881, 8
    %v1112 = vpop.permute.xlu0 %1111
    %1115 = vrot.lane.b32.xlu0 %v993, 16
    %v1116 = vpop.permute.xlu0 %1115
    %1119 = vrot.lane.b32.xlu0 %v1105, 24
    %v1120 = vpop.permute.xlu0 %1119
    %v1122 = vsel %vm191, %v769, %v1112
    %v1123 = vsel %vm654, %v1122, %v1116
    %v1124 = vsel %vm656, %v1123, %v1120
    %v1125 = vld [vmem:[%s6] sm:$0xf]
    %v1126 = vld [vmem:[%s6 + $0x4] sm:$0xf]
    %v1127 = vld [vmem:[%s6 + $0x8] sm:$0xf]
    %v1128 = vld [vmem:[%s6 + $0xc] sm:$0xf]
    %v1129 = vpack.c.bf16 %v1124, %v657
    %v1130 = vld [vmem:[%s7] sm:$0x1]
    %v1132 = vlaneseq
    %v1133 = vshrl.u32 %v1132, 7
    %v1134 = vsub.s32 0, %v1133
    %v1135 = vrot.slane %v1130, %v1134
    %v1141 = vunpack.c.l.b16 %v1125
    %v1142 = vunpack.c.l.b16 %v1126
    %v1143 = vunpack.c.l.b16 %v1127
    %v1144 = vunpack.c.l.b16 %v1128
    %v1145 = vpack.c.b16 %v1142, %v1141
    %v1146 = vpack.c.b16 %v1144, %v1143
    %v1150 = vsel %vm75, %v1129, 0
    %1152 = vmatprep.subr.bf16.mxu0 0
    %1153 = vmatpush1.bf16.msra.mxu0 %v1145
    %1154 = vmatprep.subr.bf16.mxu0 0
    %1155 = vmatpush1.bf16.msra.mxu0 %v1146
    %1156 = vmatprep.subr.bf16.mxu0 0
    %1157 = vmatpush1.bf16.msra.mxu0 0
    %1158 = vmatprep.subr.bf16.mxu0 0
    %1159 = vmatpush1.bf16.msra.mxu0 0
    %1160 = vmatprep.subr.bf16.mxu0 0
    %1161 = vmatpush1.bf16.msra.mxu0 0
    %1162 = vmatprep.subr.bf16.mxu0 0
    %1163 = vmatpush1.bf16.msra.mxu0 0
    %1164 = vmatprep.subr.bf16.mxu0 0
    %1165 = vmatpush1.bf16.msra.mxu0 0
    %1166 = vmatprep.subr.bf16.mxu0 0
    %1167 = vmatpush1.bf16.msra.mxu0 0
    %1168 = vmatprep.subr.bf16.mxu0 0
    %1169 = vmatpush1.bf16.msra.mxu0 0
    %1170 = vmatprep.subr.bf16.mxu0 0
    %1171 = vmatpush1.bf16.msra.mxu0 0
    %1172 = vmatprep.subr.bf16.mxu0 0
    %1173 = vmatpush1.bf16.msra.mxu0 0
    %1174 = vmatprep.subr.bf16.mxu0 0
    %1175 = vmatpush1.bf16.msra.mxu0 0
    %1176 = vmatprep.subr.bf16.mxu0 0
    %1177 = vmatpush1.bf16.msra.mxu0 0
    %1178 = vmatprep.subr.bf16.mxu0 0
    %1179 = vmatpush1.bf16.msra.mxu0 0
    %1180 = vmatprep.subr.bf16.mxu0 0
    %1181 = vmatpush1.bf16.msra.mxu0 0
    %1182 = vmatprep.subr.bf16.mxu0 0
    %1183 = vmatpush1.bf16.msra.mxu0 0
    %1184 = vmatprep.mubr.bf16.mxu0 0
    %1185 = vmatmul.mubr.bf16.gmra.mrb[0].mxu0 %v1150
    %v1186 = vpop.f32.mrb[0].mxu0
    %v1187 = vadd.f32 %v1135, %v1186
    %v1188 = vpop.f32.mrb[0].mxu0
    %v1189 = vpop.f32.mrb[0].mxu0
    %v1190 = vadd.f32 %v1135, %v1189
    %v1191 = vpop.f32.mrb[0].mxu0
    %1192 = vdwg.mxu0
    %v1193 = vadd.f32 %v1187, %v117
    %v1194 = vadd.f32 %v1190, %v118
    %v1195 = vld [vmem:[%s8] sm:$0x1]
    %v1196 = vld [vmem:[%s9] sm:$0x1]
    %v1197 = vsel %vm75, %v1193, 0.0
    %1198 = vadd.xlane.f32.xlu0 %v1197
    %v1199 = vpop.xlane.xlu0 %1198
    %v1200 = vsel %vm75, %v1194, 0.0
    %1201 = vadd.xlane.f32.xlu0 %v1200
    %v1202 = vpop.xlane.xlu0 %1201
    %v1203 = vmul.f32 %v1199, %v82
    %v1204 = vmul.f32 %v1202, %v82
    %v1205 = vsub.f32 %v1193, %v1203
    %v1206 = vsub.f32 %v1194, %v1204
    %v1207 = vmul.f32 %v1205, %v1205
    %v1208 = vmul.f32 %v1206, %v1206
    %v1209 = vsel %vm75, %v1207, 0.0
    %1210 = vadd.xlane.f32.xlu0 %v1209
    %v1211 = vpop.xlane.xlu0 %1210
    %v1212 = vsel %vm75, %v1208, 0.0
    %1213 = vadd.xlane.f32.xlu0 %v1212
    %v1214 = vpop.xlane.xlu0 %1213
    %v1215 = vmul.f32 %v1211, %v82
    %v1216 = vmul.f32 %v1214, %v82
    %v1217 = vadd.f32 %v1215, 1e-12
    %v1218 = vadd.f32 %v1216, 1e-12
    %v1219 = vrsqrt.pop %v1217
    %v1220 = vrsqrt.pop %v1218
    %v1221 = vmul.f32 %v1205, %v1219
    %v1222 = vmul.f32 %v1206, %v1220
    %v1224 = vlaneseq
    %v1225 = vshrl.u32 %v1224, 7
    %v1226 = vsub.s32 0, %v1225
    %v1227 = vrot.slane %v1195, %v1226
    %v1229 = vmul.f32 %v1221, %v1227
    %v1230 = vmul.f32 %v1222, %v1227
    %v1232 = vlaneseq
    %v1233 = vshrl.u32 %v1232, 7
    %v1234 = vsub.s32 0, %v1233
    %v1235 = vrot.slane %v1196, %v1234
    %v1237 = vadd.f32 %v1229, %v1235
    %v1238 = vadd.f32 %v1230, %v1235
    %v1239 = vld [vmem:[%s10] sm:$0xf]
    %v1240 = vld [vmem:[%s10 + $0x4] sm:$0xf]
    %v1241 = vld [vmem:[%s10 + $0x8] sm:$0xf]
    %v1242 = vld [vmem:[%s10 + $0xc] sm:$0xf]
    %v1243 = vpack.c.bf16 %v1238, %v1237
    %v1244 = vld [vmem:[%s11] sm:$0x1]
    %v1246 = vlaneseq
    %v1247 = vshrl.u32 %v1246, 7
    %v1248 = vsub.s32 0, %v1247
    %v1249 = vrot.slane %v1244, %v1248
    %v1255 = vunpack.c.l.b16 %v1239
    %v1256 = vunpack.c.l.b16 %v1240
    %v1257 = vunpack.c.l.b16 %v1241
    %v1258 = vunpack.c.l.b16 %v1242
    %v1259 = vpack.c.b16 %v1256, %v1255
    %v1260 = vpack.c.b16 %v1258, %v1257
    %v1264 = vsel %vm75, %v1243, 0
    %1266 = vmatprep.subr.bf16.mxu0 0
    %1267 = vmatpush1.bf16.msra.mxu0 %v1259
    %1268 = vmatprep.subr.bf16.mxu0 0
    %1269 = vmatpush1.bf16.msra.mxu0 %v1260
    %1270 = vmatprep.subr.bf16.mxu0 0
    %1271 = vmatpush1.bf16.msra.mxu0 0
    %1272 = vmatprep.subr.bf16.mxu0 0
    %1273 = vmatpush1.bf16.msra.mxu0 0
    %1274 = vmatprep.subr.bf16.mxu0 0
    %1275 = vmatpush1.bf16.msra.mxu0 0
    %1276 = vmatprep.subr.bf16.mxu0 0
    %1277 = vmatpush1.bf16.msra.mxu0 0
    %1278 = vmatprep.subr.bf16.mxu0 0
    %1279 = vmatpush1.bf16.msra.mxu0 0
    %1280 = vmatprep.subr.bf16.mxu0 0
    %1281 = vmatpush1.bf16.msra.mxu0 0
    %1282 = vmatprep.subr.bf16.mxu0 0
    %1283 = vmatpush1.bf16.msra.mxu0 0
    %1284 = vmatprep.subr.bf16.mxu0 0
    %1285 = vmatpush1.bf16.msra.mxu0 0
    %1286 = vmatprep.subr.bf16.mxu0 0
    %1287 = vmatpush1.bf16.msra.mxu0 0
    %1288 = vmatprep.subr.bf16.mxu0 0
    %1289 = vmatpush1.bf16.msra.mxu0 0
    %1290 = vmatprep.subr.bf16.mxu0 0
    %1291 = vmatpush1.bf16.msra.mxu0 0
    %1292 = vmatprep.subr.bf16.mxu0 0
    %1293 = vmatpush1.bf16.msra.mxu0 0
    %1294 = vmatprep.subr.bf16.mxu0 0
    %1295 = vmatpush1.bf16.msra.mxu0 0
    %1296 = vmatprep.subr.bf16.mxu0 0
    %1297 = vmatpush1.bf16.msra.mxu0 0
    %1298 = vmatprep.mubr.bf16.mxu0 0
    %1299 = vmatmul.mubr.bf16.gmra.mrb[0].mxu0 %v1264
    %v1300 = vpop.f32.mrb[0].mxu0
    %v1301 = vadd.f32 %v1249, %v1300
    %v1302 = vpop.f32.mrb[0].mxu0
    %v1303 = vpop.f32.mrb[0].mxu0
    %v1304 = vadd.f32 %v1249, %v1303
    %v1305 = vpop.f32.mrb[0].mxu0
    %1306 = vdwg.mxu0
    %v1307 = vmul.f32 %v1301, 0.5
    %v1308 = vmul.f32 %v1304, 0.5
    %v1309 = vmul.f32 %v1301, 0.044715
    %v1310 = vmul.f32 %v1304, 0.044715
    %v1311 = vmul.f32 %v1309, %v1301
    %v1312 = vmul.f32 %v1310, %v1304
    %v1313 = vmul.f32 %v1311, %v1301
    %v1314 = vmul.f32 %v1312, %v1304
    %v1315 = vadd.f32 %v1301, %v1313
    %v1316 = vadd.f32 %v1304, %v1314
    %v1317 = vmul.f32 %v1315, 0.7978846
    %v1318 = vmul.f32 %v1316, 0.7978846
    %v1319 = vtanh.pop %v1317
    %v1320 = vtanh.pop %v1318
    %v1321 = vadd.f32 %v1319, 1.0
    %v1322 = vadd.f32 %v1320, 1.0
    %v1323 = vmul.f32 %v1307, %v1321
    %v1324 = vmul.f32 %v1308, %v1322
    %v1325 = vld [vmem:[%s12] sm:$0xf]
    %v1326 = vld [vmem:[%s12 + $0x4] sm:$0xf]
    %v1327 = vld [vmem:[%s12 + $0x8] sm:$0xf]
    %v1328 = vld [vmem:[%s12 + $0xc] sm:$0xf]
    %v1329 = vld [vmem:[%s12 + $0x10] sm:$0xf]
    %v1330 = vld [vmem:[%s12 + $0x14] sm:$0xf]
    %v1331 = vld [vmem:[%s12 + $0x18] sm:$0xf]
    %v1332 = vld [vmem:[%s12 + $0x1c] sm:$0xf]
    %v1333 = vpack.c.bf16 %v1324, %v1323
    %v1334 = vld [vmem:[%s13] sm:$0x1]
    %v1336 = vlaneseq
    %v1337 = vshrl.u32 %v1336, 7
    %v1338 = vsub.s32 0, %v1337
    %v1339 = vrot.slane %v1334, %v1338
    %v1349 = vunpack.c.l.b16 %v1325
    %v1350 = vunpack.c.l.b16 %v1326
    %v1351 = vunpack.c.l.b16 %v1327
    %v1352 = vunpack.c.l.b16 %v1328
    %v1353 = vunpack.c.l.b16 %v1329
    %v1354 = vunpack.c.l.b16 %v1330
    %v1355 = vunpack.c.l.b16 %v1331
    %v1356 = vunpack.c.l.b16 %v1332
    %v1357 = vpack.c.b16 %v1350, %v1349
    %v1358 = vpack.c.b16 %v1352, %v1351
    %v1359 = vpack.c.b16 %v1354, %v1353
    %v1360 = vpack.c.b16 %v1356, %v1355
    %vm1365 = vcmask 523264
    %v1367 = vsel %vm1365, %v1333, 0
    %1369 = vmatprep.subr.bf16.mxu0 0
    %1370 = vmatpush1.bf16.msra.mxu0 %v1357
    %1371 = vmatprep.subr.bf16.mxu0 0
    %1372 = vmatpush1.bf16.msra.mxu0 %v1358
    %1373 = vmatprep.subr.bf16.mxu0 0
    %1374 = vmatpush1.bf16.msra.mxu0 %v1359
    %1375 = vmatprep.subr.bf16.mxu0 0
    %1376 = vmatpush1.bf16.msra.mxu0 %v1360
    %1377 = vmatprep.subr.bf16.mxu0 0
    %1378 = vmatpush1.bf16.msra.mxu0 0
    %1379 = vmatprep.subr.bf16.mxu0 0
    %1380 = vmatpush1.bf16.msra.mxu0 0
    %1381 = vmatprep.subr.bf16.mxu0 0
    %1382 = vmatpush1.bf16.msra.mxu0 0
    %1383 = vmatprep.subr.bf16.mxu0 0
    %1384 = vmatpush1.bf16.msra.mxu0 0
    %1385 = vmatprep.subr.bf16.mxu0 0
    %1386 = vmatpush1.bf16.msra.mxu0 0
    %1387 = vmatprep.subr.bf16.mxu0 0
    %1388 = vmatpush1.bf16.msra.mxu0 0
    %1389 = vmatprep.subr.bf16.mxu0 0
    %1390 = vmatpush1.bf16.msra.mxu0 0
    %1391 = vmatprep.subr.bf16.mxu0 0
    %1392 = vmatpush1.bf16.msra.mxu0 0
    %1393 = vmatprep.subr.bf16.mxu0 0
    %1394 = vmatpush1.bf16.msra.mxu0 0
    %1395 = vmatprep.subr.bf16.mxu0 0
    %1396 = vmatpush1.bf16.msra.mxu0 0
    %1397 = vmatprep.subr.bf16.mxu0 0
    %1398 = vmatpush1.bf16.msra.mxu0 0
    %1399 = vmatprep.subr.bf16.mxu0 0
    %1400 = vmatpush1.bf16.msra.mxu0 0
    %1401 = vmatprep.mubr.bf16.mxu0 0
    %1402 = vmatmul.mubr.bf16.gmra.mrb[0].mxu0 %v1367
    %v1403 = vpop.f32.mrb[0].mxu0
    %v1404 = vadd.f32 %v1339, %v1403
    %v1405 = vpop.f32.mrb[0].mxu0
    %v1406 = vpop.f32.mrb[0].mxu0
    %v1407 = vadd.f32 %v1339, %v1406
    %v1408 = vpop.f32.mrb[0].mxu0
    %1409 = vdwg.mxu0
    %v1410 = vadd.f32 %v1404, %v1237
    %v1411 = vadd.f32 %v1407, %v1238
    %v1412 = vld [vmem:[%s14] sm:$0x1]
    %v1413 = vld [vmem:[%s15] sm:$0x1]
    %v1414 = vsel %vm75, %v1410, 0.0
    %1415 = vadd.xlane.f32.xlu0 %v1414
    %v1416 = vpop.xlane.xlu0 %1415
    %v1417 = vsel %vm75, %v1411, 0.0
    %1418 = vadd.xlane.f32.xlu0 %v1417
    %v1419 = vpop.xlane.xlu0 %1418
    %v1420 = vmul.f32 %v1416, %v82
    %v1421 = vmul.f32 %v1419, %v82
    %v1422 = vsub.f32 %v1410, %v1420
    %v1423 = vsub.f32 %v1411, %v1421
    %v1424 = vmul.f32 %v1422, %v1422
    %v1425 = vmul.f32 %v1423, %v1423
    %v1426 = vsel %vm75, %v1424, 0.0
    %1427 = vadd.xlane.f32.xlu0 %v1426
    %v1428 = vpop.xlane.xlu0 %1427
    %v1429 = vsel %vm75, %v1425, 0.0
    %1430 = vadd.xlane.f32.xlu0 %v1429
    %v1431 = vpop.xlane.xlu0 %1430
    %v1432 = vmul.f32 %v1428, %v82
    %v1433 = vmul.f32 %v1431, %v82
    %v1434 = vadd.f32 %v1432, 1e-12
    %v1435 = vadd.f32 %v1433, 1e-12
    %v1436 = vrsqrt.pop %v1434
    %v1437 = vrsqrt.pop %v1435
    %v1438 = vmul.f32 %v1422, %v1436
    %v1439 = vmul.f32 %v1423, %v1437
    %v1441 = vlaneseq
    %v1442 = vshrl.u32 %v1441, 7
    %v1443 = vsub.s32 0, %v1442
    %v1444 = vrot.slane %v1412, %v1443
    %v1446 = vmul.f32 %v1438, %v1444
    %v1447 = vmul.f32 %v1439, %v1444
    %v1449 = vlaneseq
    %v1450 = vshrl.u32 %v1449, 7
    %v1451 = vsub.s32 0, %v1450
    %v1452 = vrot.slane %v1413, %v1451
    %v1454 = vadd.f32 %v1446, %v1452
    %v1455 = vadd.f32 %v1447, %v1452
    %s1456 = scalar_lea.vmem %s4, 16
    %v1457 = vld [vmem:[%s1456] sm:$0xf]
    %v1458 = vld [vmem:[%s1456 + $0x4] sm:$0xf]
    %v1459 = vld [vmem:[%s1456 + $0x8] sm:$0xf]
    %v1460 = vld [vmem:[%s1456 + $0xc] sm:$0xf]
    %v1461 = vpack.c.bf16 %v1455, %v1454
    %s1462 = scalar_lea.vmem %s5, 1
    %v1463 = vld [vmem:[%s1462] sm:$0x1]
    %v1465 = vlaneseq
    %v1466 = vshrl.u32 %v1465, 7
    %v1467 = vsub.s32 0, %v1466
    %v1468 = vrot.slane %v1463, %v1467
    %v1474 = vunpack.c.l.b16 %v1457
    %v1475 = vunpack.c.l.b16 %v1458
    %v1476 = vunpack.c.l.b16 %v1459
    %v1477 = vunpack.c.l.b16 %v1460
    %v1478 = vpack.c.b16 %v1475, %v1474
    %v1479 = vpack.c.b16 %v1477, %v1476
    %v1483 = vsel %vm75, %v1461, 0
    %1485 = vmatprep.subr.bf16.mxu0 0
    %1486 = vmatpush1.bf16.msra.mxu0 %v1478
    %1487 = vmatprep.subr.bf16.mxu0 0
    %1488 = vmatpush1.bf16.msra.mxu0 %v1479
    %1489 = vmatprep.subr.bf16.mxu0 0
    %1490 = vmatpush1.bf16.msra.mxu0 0
    %1491 = vmatprep.subr.bf16.mxu0 0
    %1492 = vmatpush1.bf16.msra.mxu0 0
    %1493 = vmatprep.subr.bf16.mxu0 0
    %1494 = vmatpush1.bf16.msra.mxu0 0
    %1495 = vmatprep.subr.bf16.mxu0 0
    %1496 = vmatpush1.bf16.msra.mxu0 0
    %1497 = vmatprep.subr.bf16.mxu0 0
    %1498 = vmatpush1.bf16.msra.mxu0 0
    %1499 = vmatprep.subr.bf16.mxu0 0
    %1500 = vmatpush1.bf16.msra.mxu0 0
    %1501 = vmatprep.subr.bf16.mxu0 0
    %1502 = vmatpush1.bf16.msra.mxu0 0
    %1503 = vmatprep.subr.bf16.mxu0 0
    %1504 = vmatpush1.bf16.msra.mxu0 0
    %1505 = vmatprep.subr.bf16.mxu0 0
    %1506 = vmatpush1.bf16.msra.mxu0 0
    %1507 = vmatprep.subr.bf16.mxu0 0
    %1508 = vmatpush1.bf16.msra.mxu0 0
    %1509 = vmatprep.subr.bf16.mxu0 0
    %1510 = vmatpush1.bf16.msra.mxu0 0
    %1511 = vmatprep.subr.bf16.mxu0 0
    %1512 = vmatpush1.bf16.msra.mxu0 0
    %1513 = vmatprep.subr.bf16.mxu0 0
    %1514 = vmatpush1.bf16.msra.mxu0 0
    %1515 = vmatprep.subr.bf16.mxu0 0
    %1516 = vmatpush1.bf16.msra.mxu0 0
    %1517 = vmatprep.mubr.bf16.mxu0 0
    %1518 = vmatmul.mubr.bf16.gmra.mrb[0].mxu0 %v1483
    %v1519 = vpop.f32.mrb[0].mxu0
    %v1520 = vadd.f32 %v1468, %v1519
    %v1521 = vpop.f32.mrb[0].mxu0
    %v1522 = vpop.f32.mrb[0].mxu0
    %v1523 = vadd.f32 %v1468, %v1522
    %v1524 = vpop.f32.mrb[0].mxu0
    %1525 = vdwg.mxu0
    %v1526 = vpack.c.bf16 %v1520, %v1520
    %1528 = vrot.lane.b32.xlu0 %v1526, 96
    %v1529 = vpop.permute.xlu0 %1528
    %v1531 = vsel %vm191, %v1526, 0
    %v1534 = vsel %vm191, %v1529, 0
    %1536 = vmatprep.subr.bf16.mxu0 0
    %1537 = vmatpush1.bf16.xpose.msra.mxu0 %v1534
    %1538 = vmatprep.subr.bf16.mxu0 0
    %1539 = vmatpush1.bf16.xpose.msra.mxu0 0
    %1540 = vmatprep.subr.bf16.mxu0 0
    %1541 = vmatpush1.bf16.xpose.msra.mxu0 0
    %1542 = vmatprep.subr.bf16.mxu0 0
    %1543 = vmatpush1.bf16.xpose.msra.mxu0 0
    %1544 = vmatprep.subr.bf16.mxu0 0
    %1545 = vmatpush1.bf16.xpose.msra.mxu0 0
    %1546 = vmatprep.subr.bf16.mxu0 0
    %1547 = vmatpush1.bf16.xpose.msra.mxu0 0
    %1548 = vmatprep.subr.bf16.mxu0 0
    %1549 = vmatpush1.bf16.xpose.msra.mxu0 0
    %1550 = vmatprep.subr.bf16.mxu0 0
    %1551 = vmatpush1.bf16.xpose.msra.mxu0 0
    %1552 = vmatprep.subr.bf16.mxu0 0
    %1553 = vmatpush1.bf16.xpose.msra.mxu0 0
    %1554 = vmatprep.subr.bf16.mxu0 0
    %1555 = vmatpush1.bf16.xpose.msra.mxu0 0
    %1556 = vmatprep.subr.bf16.mxu0 0
    %1557 = vmatpush1.bf16.xpose.msra.mxu0 0
    %1558 = vmatprep.subr.bf16.mxu0 0
    %1559 = vmatpush1.bf16.xpose.msra.mxu0 0
    %1560 = vmatprep.subr.bf16.mxu0 0
    %1561 = vmatpush1.bf16.xpose.msra.mxu0 0
    %1562 = vmatprep.subr.bf16.mxu0 0
    %1563 = vmatpush1.bf16.xpose.msra.mxu0 0
    %1564 = vmatprep.subr.bf16.mxu0 0
    %1565 = vmatpush1.bf16.xpose.msra.mxu0 0
    %1566 = vmatprep.subr.bf16.mxu0 0
    %1567 = vmatpush1.bf16.xpose.msra.mxu0 0
    %1568 = vmatprep.mubr.bf16.mxu0 0
    %1569 = vmatmul.mubr.bf16.gmra.mrb[0].mxu0 %v1531
    %v1570 = vpop.f32.mrb[0].mxu0
    %v1571 = vadd.f32 0.0, %v1570
    %v1572 = vpop.f32.mrb[0].mxu0
    %v1573 = vpop.f32.mrb[0].mxu0
    %v1574 = vpop.f32.mrb[0].mxu0
    %1575 = vdwg.mxu0
    %v1576 = vmul.f32 %v1571, 0.35355338
    %v1577 = vadd.f32 %v1576, %v242
    %v1578 = vsel %vm191, %v1577, -inf
    %1579 = vmax.xlane.f32.xlu0 %v1578
    %v1580 = vpop.xlane.xlu0 %1579
    %v1581 = vsub.f32 %v1577, %v1580
    %v1582 = vmul.f32 %v1581, 1.442695
    %v1583 = vpow.pop %v1582
    %v1584 = vsel %vm191, %v1583, 0.0
    %1585 = vadd.xlane.f32.xlu0 %v1584
    %v1586 = vpop.xlane.xlu0 %1585
    %v1587 = vrcp.pop %v1586
    %v1588 = vmul.f32 %v1583, %v1587
    %v1589 = vpack.c.bf16 %v1588, %v1588
    %1590 = vrot.lane.b32.xlu0 %v1526, 64
    %v1591 = vpop.permute.xlu0 %1590
    %v1593 = vsel %vm191, %v1589, 0
    %v1596 = vsel %vm261, %v1591, 0
    %1598 = vmatprep.subr.bf16.mxu0 0
    %1599 = vmatpush1.bf16.msra.mxu0 %v1596
    %1600 = vmatprep.subr.bf16.mxu0 0
    %1601 = vmatpush1.bf16.msra.mxu0 0
    %1602 = vmatprep.subr.bf16.mxu0 0
    %1603 = vmatpush1.bf16.msra.mxu0 0
    %1604 = vmatprep.subr.bf16.mxu0 0
    %1605 = vmatpush1.bf16.msra.mxu0 0
    %1606 = vmatprep.subr.bf16.mxu0 0
    %1607 = vmatpush1.bf16.msra.mxu0 0
    %1608 = vmatprep.subr.bf16.mxu0 0
    %1609 = vmatpush1.bf16.msra.mxu0 0
    %1610 = vmatprep.subr.bf16.mxu0 0
    %1611 = vmatpush1.bf16.msra.mxu0 0
    %1612 = vmatprep.subr.bf16.mxu0 0
    %1613 = vmatpush1.bf16.msra.mxu0 0
    %1614 = vmatprep.subr.bf16.mxu0 0
    %1615 = vmatpush1.bf16.msra.mxu0 0
    %1616 = vmatprep.subr.bf16.mxu0 0
    %1617 = vmatpush1.bf16.msra.mxu0 0
    %1618 = vmatprep.subr.bf16.mxu0 0
    %1619 = vmatpush1.bf16.msra.mxu0 0
    %1620 = vmatprep.subr.bf16.mxu0 0
    %1621 = vmatpush1.bf16.msra.mxu0 0
    %1622 = vmatprep.subr.bf16.mxu0 0
    %1623 = vmatpush1.bf16.msra.mxu0 0
    %1624 = vmatprep.subr.bf16.mxu0 0
    %1625 = vmatpush1.bf16.msra.mxu0 0
    %1626 = vmatprep.subr.bf16.mxu0 0
    %1627 = vmatpush1.bf16.msra.mxu0 0
    %1628 = vmatprep.subr.bf16.mxu0 0
    %1629 = vmatpush1.bf16.msra.mxu0 0
    %1630 = vmatprep.mubr.bf16.mxu0 0
    %1631 = vmatmul.mubr.bf16.gmra.mrb[0].mxu0 %v1593
    %v1632 = vpop.f32.mrb[0].mxu0
    %v1633 = vadd.f32 0.0, %v1632
    %v1634 = vpop.f32.mrb[0].mxu0
    %v1635 = vpop.f32.mrb[0].mxu0
    %v1636 = vpop.f32.mrb[0].mxu0
    %1637 = vdwg.mxu0
    %1638 = vrot.lane.b32.xlu0 %v1526, 120
    %v1639 = vpop.permute.xlu0 %1638
    %1640 = vrot.lane.b32.xlu0 %v1526, 88
    %v1641 = vpop.permute.xlu0 %1640
    %v1643 = vsel %vm191, %v1639, 0
    %v1646 = vsel %vm191, %v1641, 0
    %1648 = vmatprep.subr.bf16.mxu0 0
    %1649 = vmatpush1.bf16.xpose.msra.mxu0 %v1646
    %1650 = vmatprep.subr.bf16.mxu0 0
    %1651 = vmatpush1.bf16.xpose.msra.mxu0 0
    %1652 = vmatprep.subr.bf16.mxu0 0
    %1653 = vmatpush1.bf16.xpose.msra.mxu0 0
    %1654 = vmatprep.subr.bf16.mxu0 0
    %1655 = vmatpush1.bf16.xpose.msra.mxu0 0
    %1656 = vmatprep.subr.bf16.mxu0 0
    %1657 = vmatpush1.bf16.xpose.msra.mxu0 0
    %1658 = vmatprep.subr.bf16.mxu0 0
    %1659 = vmatpush1.bf16.xpose.msra.mxu0 0
    %1660 = vmatprep.subr.bf16.mxu0 0
    %1661 = vmatpush1.bf16.xpose.msra.mxu0 0
    %1662 = vmatprep.subr.bf16.mxu0 0
    %1663 = vmatpush1.bf16.xpose.msra.mxu0 0
    %1664 = vmatprep.subr.bf16.mxu0 0
    %1665 = vmatpush1.bf16.xpose.msra.mxu0 0
    %1666 = vmatprep.subr.bf16.mxu0 0
    %1667 = vmatpush1.bf16.xpose.msra.mxu0 0
    %1668 = vmatprep.subr.bf16.mxu0 0
    %1669 = vmatpush1.bf16.xpose.msra.mxu0 0
    %1670 = vmatprep.subr.bf16.mxu0 0
    %1671 = vmatpush1.bf16.xpose.msra.mxu0 0
    %1672 = vmatprep.subr.bf16.mxu0 0
    %1673 = vmatpush1.bf16.xpose.msra.mxu0 0
    %1674 = vmatprep.subr.bf16.mxu0 0
    %1675 = vmatpush1.bf16.xpose.msra.mxu0 0
    %1676 = vmatprep.subr.bf16.mxu0 0
    %1677 = vmatpush1.bf16.xpose.msra.mxu0 0
    %1678 = vmatprep.subr.bf16.mxu0 0
    %1679 = vmatpush1.bf16.xpose.msra.mxu0 0
    %1680 = vmatprep.mubr.bf16.mxu0 0
    %1681 = vmatmul.mubr.bf16.gmra.mrb[0].mxu0 %v1643
    %v1682 = vpop.f32.mrb[0].mxu0
    %v1683 = vadd.f32 0.0, %v1682
    %v1684 = vpop.f32.mrb[0].mxu0
    %v1685 = vpop.f32.mrb[0].mxu0
    %v1686 = vpop.f32.mrb[0].mxu0
    %1687 = vdwg.mxu0
    %v1688 = vmul.f32 %v1683, 0.35355338
    %v1689 = vadd.f32 %v1688, %v242
    %v1690 = vsel %vm191, %v1689, -inf
    %1691 = vmax.xlane.f32.xlu0 %v1690
    %v1692 = vpop.xlane.xlu0 %1691
    %v1693 = vsub.f32 %v1689, %v1692
    %v1694 = vmul.f32 %v1693, 1.442695
    %v1695 = vpow.pop %v1694
    %v1696 = vsel %vm191, %v1695, 0.0
    %1697 = vadd.xlane.f32.xlu0 %v1696
    %v1698 = vpop.xlane.xlu0 %1697
    %v1699 = vrcp.pop %v1698
    %v1700 = vmul.f32 %v1695, %v1699
    %v1701 = vpack.c.bf16 %v1700, %v1700
    %1702 = vrot.lane.b32.xlu0 %v1526, 56
    %v1703 = vpop.permute.xlu0 %1702
    %v1705 = vsel %vm191, %v1701, 0
    %v1708 = vsel %vm261, %v1703, 0
    %1710 = vmatprep.subr.bf16.mxu0 0
    %1711 = vmatpush1.bf16.msra.mxu0 %v1708
    %1712 = vmatprep.subr.bf16.mxu0 0
    %1713 = vmatpush1.bf16.msra.mxu0 0
    %1714 = vmatprep.subr.bf16.mxu0 0
    %1715 = vmatpush1.bf16.msra.mxu0 0
    %1716 = vmatprep.subr.bf16.mxu0 0
    %1717 = vmatpush1.bf16.msra.mxu0 0
    %1718 = vmatprep.subr.bf16.mxu0 0
    %1719 = vmatpush1.bf16.msra.mxu0 0
    %1720 = vmatprep.subr.bf16.mxu0 0
    %1721 = vmatpush1.bf16.msra.mxu0 0
    %1722 = vmatprep.subr.bf16.mxu0 0
    %1723 = vmatpush1.bf16.msra.mxu0 0
    %1724 = vmatprep.subr.bf16.mxu0 0
    %1725 = vmatpush1.bf16.msra.mxu0 0
    %1726 = vmatprep.subr.bf16.mxu0 0
    %1727 = vmatpush1.bf16.msra.mxu0 0
    %1728 = vmatprep.subr.bf16.mxu0 0
    %1729 = vmatpush1.bf16.msra.mxu0 0
    %1730 = vmatprep.subr.bf16.mxu0 0
    %1731 = vmatpush1.bf16.msra.mxu0 0
    %1732 = vmatprep.subr.bf16.mxu0 0
    %1733 = vmatpush1.bf16.msra.mxu0 0
    %1734 = vmatprep.subr.bf16.mxu0 0
    %1735 = vmatpush1.bf16.msra.mxu0 0
    %1736 = vmatprep.subr.bf16.mxu0 0
    %1737 = vmatpush1.bf16.msra.mxu0 0
    %1738 = vmatprep.subr.bf16.mxu0 0
    %1739 = vmatpush1.bf16.msra.mxu0 0
    %1740 = vmatprep.subr.bf16.mxu0 0
    %1741 = vmatpush1.bf16.msra.mxu0 0
    %1742 = vmatprep.mubr.bf16.mxu0 0
    %1743 = vmatmul.mubr.bf16.gmra.mrb[0].mxu0 %v1705
    %v1744 = vpop.f32.mrb[0].mxu0
    %v1745 = vadd.f32 0.0, %v1744
    %v1746 = vpop.f32.mrb[0].mxu0
    %v1747 = vpop.f32.mrb[0].mxu0
    %v1748 = vpop.f32.mrb[0].mxu0
    %1749 = vdwg.mxu0
    %1750 = vrot.lane.b32.xlu0 %v1526, 112
    %v1751 = vpop.permute.xlu0 %1750
    %1752 = vrot.lane.b32.xlu0 %v1526, 80
    %v1753 = vpop.permute.xlu0 %1752
    %v1755 = vsel %vm191, %v1751, 0
    %v1758 = vsel %vm191, %v1753, 0
    %1760 = vmatprep.subr.bf16.mxu0 0
    %1761 = vmatpush1.bf16.xpose.msra.mxu0 %v1758
    %1762 = vmatprep.subr.bf16.mxu0 0
    %1763 = vmatpush1.bf16.xpose.msra.mxu0 0
    %1764 = vmatprep.subr.bf16.mxu0 0
    %1765 = vmatpush1.bf16.xpose.msra.mxu0 0
    %1766 = vmatprep.subr.bf16.mxu0 0
    %1767 = vmatpush1.bf16.xpose.msra.mxu0 0
    %1768 = vmatprep.subr.bf16.mxu0 0
    %1769 = vmatpush1.bf16.xpose.msra.mxu0 0
    %1770 = vmatprep.subr.bf16.mxu0 0
    %1771 = vmatpush1.bf16.xpose.msra.mxu0 0
    %1772 = vmatprep.subr.bf16.mxu0 0
    %1773 = vmatpush1.bf16.xpose.msra.mxu0 0
    %1774 = vmatprep.subr.bf16.mxu0 0
    %1775 = vmatpush1.bf16.xpose.msra.mxu0 0
    %1776 = vmatprep.subr.bf16.mxu0 0
    %1777 = vmatpush1.bf16.xpose.msra.mxu0 0
    %1778 = vmatprep.subr.bf16.mxu0 0
    %1779 = vmatpush1.bf16.xpose.msra.mxu0 0
    %1780 = vmatprep.subr.bf16.mxu0 0
    %1781 = vmatpush1.bf16.xpose.msra.mxu0 0
    %1782 = vmatprep.subr.bf16.mxu0 0
    %1783 = vmatpush1.bf16.xpose.msra.mxu0 0
    %1784 = vmatprep.subr.bf16.mxu0 0
    %1785 = vmatpush1.bf16.xpose.msra.mxu0 0
    %1786 = vmatprep.subr.bf16.mxu0 0
    %1787 = vmatpush1.bf16.xpose.msra.mxu0 0
    %1788 = vmatprep.subr.bf16.mxu0 0
    %1789 = vmatpush1.bf16.xpose.msra.mxu0 0
    %1790 = vmatprep.subr.bf16.mxu0 0
    %1791 = vmatpush1.bf16.xpose.msra.mxu0 0
    %1792 = vmatprep.mubr.bf16.mxu0 0
    %1793 = vmatmul.mubr.bf16.gmra.mrb[0].mxu0 %v1755
    %v1794 = vpop.f32.mrb[0].mxu0
    %v1795 = vadd.f32 0.0, %v1794
    %v1796 = vpop.f32.mrb[0].mxu0
    %v1797 = vpop.f32.mrb[0].mxu0
    %v1798 = vpop.f32.mrb[0].mxu0
    %1799 = vdwg.mxu0
    %v1800 = vmul.f32 %v1795, 0.35355338
    %v1801 = vadd.f32 %v1800, %v242
    %v1802 = vsel %vm191, %v1801, -inf
    %1803 = vmax.xlane.f32.xlu0 %v1802
    %v1804 = vpop.xlane.xlu0 %1803
    %v1805 = vsub.f32 %v1801, %v1804
    %v1806 = vmul.f32 %v1805, 1.442695
    %v1807 = vpow.pop %v1806
    %v1808 = vsel %vm191, %v1807, 0.0
    %1809 = vadd.xlane.f32.xlu0 %v1808
    %v1810 = vpop.xlane.xlu0 %1809
    %v1811 = vrcp.pop %v1810
    %v1812 = vmul.f32 %v1807, %v1811
    %v1813 = vpack.c.bf16 %v1812, %v1812
    %1814 = vrot.lane.b32.xlu0 %v1526, 48
    %v1815 = vpop.permute.xlu0 %1814
    %v1817 = vsel %vm191, %v1813, 0
    %v1820 = vsel %vm261, %v1815, 0
    %1822 = vmatprep.subr.bf16.mxu0 0
    %1823 = vmatpush1.bf16.msra.mxu0 %v1820
    %1824 = vmatprep.subr.bf16.mxu0 0
    %1825 = vmatpush1.bf16.msra.mxu0 0
    %1826 = vmatprep.subr.bf16.mxu0 0
    %1827 = vmatpush1.bf16.msra.mxu0 0
    %1828 = vmatprep.subr.bf16.mxu0 0
    %1829 = vmatpush1.bf16.msra.mxu0 0
    %1830 = vmatprep.subr.bf16.mxu0 0
    %1831 = vmatpush1.bf16.msra.mxu0 0
    %1832 = vmatprep.subr.bf16.mxu0 0
    %1833 = vmatpush1.bf16.msra.mxu0 0
    %1834 = vmatprep.subr.bf16.mxu0 0
    %1835 = vmatpush1.bf16.msra.mxu0 0
    %1836 = vmatprep.subr.bf16.mxu0 0
    %1837 = vmatpush1.bf16.msra.mxu0 0
    %1838 = vmatprep.subr.bf16.mxu0 0
    %1839 = vmatpush1.bf16.msra.mxu0 0
    %1840 = vmatprep.subr.bf16.mxu0 0
    %1841 = vmatpush1.bf16.msra.mxu0 0
    %1842 = vmatprep.subr.bf16.mxu0 0
    %1843 = vmatpush1.bf16.msra.mxu0 0
    %1844 = vmatprep.subr.bf16.mxu0 0
    %1845 = vmatpush1.bf16.msra.mxu0 0
    %1846 = vmatprep.subr.bf16.mxu0 0
    %1847 = vmatpush1.bf16.msra.mxu0 0
    %1848 = vmatprep.subr.bf16.mxu0 0
    %1849 = vmatpush1.bf16.msra.mxu0 0
    %1850 = vmatprep.subr.bf16.mxu0 0
    %1851 = vmatpush1.bf16.msra.mxu0 0
    %1852 = vmatprep.subr.bf16.mxu0 0
    %1853 = vmatpush1.bf16.msra.mxu0 0
    %1854 = vmatprep.mubr.bf16.mxu0 0
    %1855 = vmatmul.mubr.bf16.gmra.mrb[0].mxu0 %v1817
    %v1856 = vpop.f32.mrb[0].mxu0
    %v1857 = vadd.f32 0.0, %v1856
    %v1858 = vpop.f32.mrb[0].mxu0
    %v1859 = vpop.f32.mrb[0].mxu0
    %v1860 = vpop.f32.mrb[0].mxu0
    %1861 = vdwg.mxu0
    %1862 = vrot.lane.b32.xlu0 %v1526, 104
    %v1863 = vpop.permute.xlu0 %1862
    %1864 = vrot.lane.b32.xlu0 %v1526, 72
    %v1865 = vpop.permute.xlu0 %1864
    %v1867 = vsel %vm191, %v1863, 0
    %v1870 = vsel %vm191, %v1865, 0
    %1872 = vmatprep.subr.bf16.mxu0 0
    %1873 = vmatpush1.bf16.xpose.msra.mxu0 %v1870
    %1874 = vmatprep.subr.bf16.mxu0 0
    %1875 = vmatpush1.bf16.xpose.msra.mxu0 0
    %1876 = vmatprep.subr.bf16.mxu0 0
    %1877 = vmatpush1.bf16.xpose.msra.mxu0 0
    %1878 = vmatprep.subr.bf16.mxu0 0
    %1879 = vmatpush1.bf16.xpose.msra.mxu0 0
    %1880 = vmatprep.subr.bf16.mxu0 0
    %1881 = vmatpush1.bf16.xpose.msra.mxu0 0
    %1882 = vmatprep.subr.bf16.mxu0 0
    %1883 = vmatpush1.bf16.xpose.msra.mxu0 0
    %1884 = vmatprep.subr.bf16.mxu0 0
    %1885 = vmatpush1.bf16.xpose.msra.mxu0 0
    %1886 = vmatprep.subr.bf16.mxu0 0
    %1887 = vmatpush1.bf16.xpose.msra.mxu0 0
    %1888 = vmatprep.subr.bf16.mxu0 0
    %1889 = vmatpush1.bf16.xpose.msra.mxu0 0
    %1890 = vmatprep.subr.bf16.mxu0 0
    %1891 = vmatpush1.bf16.xpose.msra.mxu0 0
    %1892 = vmatprep.subr.bf16.mxu0 0
    %1893 = vmatpush1.bf16.xpose.msra.mxu0 0
    %1894 = vmatprep.subr.bf16.mxu0 0
    %1895 = vmatpush1.bf16.xpose.msra.mxu0 0
    %1896 = vmatprep.subr.bf16.mxu0 0
    %1897 = vmatpush1.bf16.xpose.msra.mxu0 0
    %1898 = vmatprep.subr.bf16.mxu0 0
    %1899 = vmatpush1.bf16.xpose.msra.mxu0 0
    %1900 = vmatprep.subr.bf16.mxu0 0
    %1901 = vmatpush1.bf16.xpose.msra.mxu0 0
    %1902 = vmatprep.subr.bf16.mxu0 0
    %1903 = vmatpush1.bf16.xpose.msra.mxu0 0
    %1904 = vmatprep.mubr.bf16.mxu0 0
    %1905 = vmatmul.mubr.bf16.gmra.mrb[0].mxu0 %v1867
    %v1906 = vpop.f32.mrb[0].mxu0
    %v1907 = vadd.f32 0.0, %v1906
    %v1908 = vpop.f32.mrb[0].mxu0
    %v1909 = vpop.f32.mrb[0].mxu0
    %v1910 = vpop.f32.mrb[0].mxu0
    %1911 = vdwg.mxu0
    %v1912 = vmul.f32 %v1907, 0.35355338
    %v1913 = vadd.f32 %v1912, %v242
    %v1914 = vsel %vm191, %v1913, -inf
    %1915 = vmax.xlane.f32.xlu0 %v1914
    %v1916 = vpop.xlane.xlu0 %1915
    %v1917 = vsub.f32 %v1913, %v1916
    %v1918 = vmul.f32 %v1917, 1.442695
    %v1919 = vpow.pop %v1918
    %v1920 = vsel %vm191, %v1919, 0.0
    %1921 = vadd.xlane.f32.xlu0 %v1920
    %v1922 = vpop.xlane.xlu0 %1921
    %v1923 = vrcp.pop %v1922
    %v1924 = vmul.f32 %v1919, %v1923
    %v1925 = vpack.c.bf16 %v1924, %v1924
    %1926 = vrot.lane.b32.xlu0 %v1526, 40
    %v1927 = vpop.permute.xlu0 %1926
    %v1929 = vsel %vm191, %v1925, 0
    %v1932 = vsel %vm261, %v1927, 0
    %1934 = vmatprep.subr.bf16.mxu0 0
    %1935 = vmatpush1.bf16.msra.mxu0 %v1932
    %1936 = vmatprep.subr.bf16.mxu0 0
    %1937 = vmatpush1.bf16.msra.mxu0 0
    %1938 = vmatprep.subr.bf16.mxu0 0
    %1939 = vmatpush1.bf16.msra.mxu0 0
    %1940 = vmatprep.subr.bf16.mxu0 0
    %1941 = vmatpush1.bf16.msra.mxu0 0
    %1942 = vmatprep.subr.bf16.mxu0 0
    %1943 = vmatpush1.bf16.msra.mxu0 0
    %1944 = vmatprep.subr.bf16.mxu0 0
    %1945 = vmatpush1.bf16.msra.mxu0 0
    %1946 = vmatprep.subr.bf16.mxu0 0
    %1947 = vmatpush1.bf16.msra.mxu0 0
    %1948 = vmatprep.subr.bf16.mxu0 0
    %1949 = vmatpush1.bf16.msra.mxu0 0
    %1950 = vmatprep.subr.bf16.mxu0 0
    %1951 = vmatpush1.bf16.msra.mxu0 0
    %1952 = vmatprep.subr.bf16.mxu0 0
    %1953 = vmatpush1.bf16.msra.mxu0 0
    %1954 = vmatprep.subr.bf16.mxu0 0
    %1955 = vmatpush1.bf16.msra.mxu0 0
    %1956 = vmatprep.subr.bf16.mxu0 0
    %1957 = vmatpush1.bf16.msra.mxu0 0
    %1958 = vmatprep.subr.bf16.mxu0 0
    %1959 = vmatpush1.bf16.msra.mxu0 0
    %1960 = vmatprep.subr.bf16.mxu0 0
    %1961 = vmatpush1.bf16.msra.mxu0 0
    %1962 = vmatprep.subr.bf16.mxu0 0
    %1963 = vmatpush1.bf16.msra.mxu0 0
    %1964 = vmatprep.subr.bf16.mxu0 0
    %1965 = vmatpush1.bf16.msra.mxu0 0
    %1966 = vmatprep.mubr.bf16.mxu0 0
    %1967 = vmatmul.mubr.bf16.gmra.mrb[0].mxu0 %v1929
    %v1968 = vpop.f32.mrb[0].mxu0
    %v1969 = vadd.f32 0.0, %v1968
    %v1970 = vpop.f32.mrb[0].mxu0
    %v1971 = vpop.f32.mrb[0].mxu0
    %v1972 = vpop.f32.mrb[0].mxu0
    %1973 = vdwg.mxu0
    %1975 = vrot.lane.b32.xlu0 %v1745, 8
    %v1976 = vpop.permute.xlu0 %1975
    %1979 = vrot.lane.b32.xlu0 %v1857, 16
    %v1980 = vpop.permute.xlu0 %1979
    %1983 = vrot.lane.b32.xlu0 %v1969, 24
    %v1984 = vpop.permute.xlu0 %1983
    %v1986 = vsel %vm191, %v1633, %v1976
    %v1987 = vsel %vm654, %v1986, %v1980
    %v1988 = vsel %vm656, %v1987, %v1984
    %v1989 = vpack.c.bf16 %v1523, %v1523
    %1991 = vrot.lane.b32.xlu0 %v1989, 96
    %v1992 = vpop.permute.xlu0 %1991
    %v1994 = vsel %vm191, %v1989, 0
    %v1997 = vsel %vm191, %v1992, 0
    %1999 = vmatprep.subr.bf16.mxu0 0
    %2000 = vmatpush1.bf16.xpose.msra.mxu0 %v1997
    %2001 = vmatprep.subr.bf16.mxu0 0
    %2002 = vmatpush1.bf16.xpose.msra.mxu0 0
    %2003 = vmatprep.subr.bf16.mxu0 0
    %2004 = vmatpush1.bf16.xpose.msra.mxu0 0
    %2005 = vmatprep.subr.bf16.mxu0 0
    %2006 = vmatpush1.bf16.xpose.msra.mxu0 0
    %2007 = vmatprep.subr.bf16.mxu0 0
    %2008 = vmatpush1.bf16.xpose.msra.mxu0 0
    %2009 = vmatprep.subr.bf16.mxu0 0
    %2010 = vmatpush1.bf16.xpose.msra.mxu0 0
    %2011 = vmatprep.subr.bf16.mxu0 0
    %2012 = vmatpush1.bf16.xpose.msra.mxu0 0
    %2013 = vmatprep.subr.bf16.mxu0 0
    %2014 = vmatpush1.bf16.xpose.msra.mxu0 0
    %2015 = vmatprep.subr.bf16.mxu0 0
    %2016 = vmatpush1.bf16.xpose.msra.mxu0 0
    %2017 = vmatprep.subr.bf16.mxu0 0
    %2018 = vmatpush1.bf16.xpose.msra.mxu0 0
    %2019 = vmatprep.subr.bf16.mxu0 0
    %2020 = vmatpush1.bf16.xpose.msra.mxu0 0
    %2021 = vmatprep.subr.bf16.mxu0 0
    %2022 = vmatpush1.bf16.xpose.msra.mxu0 0
    %2023 = vmatprep.subr.bf16.mxu0 0
    %2024 = vmatpush1.bf16.xpose.msra.mxu0 0
    %2025 = vmatprep.subr.bf16.mxu0 0
    %2026 = vmatpush1.bf16.xpose.msra.mxu0 0
    %2027 = vmatprep.subr.bf16.mxu0 0
    %2028 = vmatpush1.bf16.xpose.msra.mxu0 0
    %2029 = vmatprep.subr.bf16.mxu0 0
    %2030 = vmatpush1.bf16.xpose.msra.mxu0 0
    %2031 = vmatprep.mubr.bf16.mxu0 0
    %2032 = vmatmul.mubr.bf16.gmra.mrb[0].mxu0 %v1994
    %v2033 = vpop.f32.mrb[0].mxu0
    %v2034 = vadd.f32 0.0, %v2033
    %v2035 = vpop.f32.mrb[0].mxu0
    %v2036 = vpop.f32.mrb[0].mxu0
    %v2037 = vpop.f32.mrb[0].mxu0
    %2038 = vdwg.mxu0
    %v2039 = vmul.f32 %v2034, 0.35355338
    %v2040 = vadd.f32 %v2039, %v712
    %v2041 = vsel %vm191, %v2040, -inf
    %2042 = vmax.xlane.f32.xlu0 %v2041
    %v2043 = vpop.xlane.xlu0 %2042
    %v2044 = vsub.f32 %v2040, %v2043
    %v2045 = vmul.f32 %v2044, 1.442695
    %v2046 = vpow.pop %v2045
    %v2047 = vsel %vm191, %v2046, 0.0
    %2048 = vadd.xlane.f32.xlu0 %v2047
    %v2049 = vpop.xlane.xlu0 %2048
    %v2050 = vrcp.pop %v2049
    %v2051 = vmul.f32 %v2046, %v2050
    %v2052 = vpack.c.bf16 %v2051, %v2051
    %2053 = vrot.lane.b32.xlu0 %v1989, 64
    %v2054 = vpop.permute.xlu0 %2053
    %v2056 = vsel %vm191, %v2052, 0
    %v2059 = vsel %vm261, %v2054, 0
    %2061 = vmatprep.subr.bf16.mxu0 0
    %2062 = vmatpush1.bf16.msra.mxu0 %v2059
    %2063 = vmatprep.subr.bf16.mxu0 0
    %2064 = vmatpush1.bf16.msra.mxu0 0
    %2065 = vmatprep.subr.bf16.mxu0 0
    %2066 = vmatpush1.bf16.msra.mxu0 0
    %2067 = vmatprep.subr.bf16.mxu0 0
    %2068 = vmatpush1.bf16.msra.mxu0 0
    %2069 = vmatprep.subr.bf16.mxu0 0
    %2070 = vmatpush1.bf16.msra.mxu0 0
    %2071 = vmatprep.subr.bf16.mxu0 0
    %2072 = vmatpush1.bf16.msra.mxu0 0
    %2073 = vmatprep.subr.bf16.mxu0 0
    %2074 = vmatpush1.bf16.msra.mxu0 0
    %2075 = vmatprep.subr.bf16.mxu0 0
    %2076 = vmatpush1.bf16.msra.mxu0 0
    %2077 = vmatprep.subr.bf16.mxu0 0
    %2078 = vmatpush1.bf16.msra.mxu0 0
    %2079 = vmatprep.subr.bf16.mxu0 0
    %2080 = vmatpush1.bf16.msra.mxu0 0
    %2081 = vmatprep.subr.bf16.mxu0 0
    %2082 = vmatpush1.bf16.msra.mxu0 0
    %2083 = vmatprep.subr.bf16.mxu0 0
    %2084 = vmatpush1.bf16.msra.mxu0 0
    %2085 = vmatprep.subr.bf16.mxu0 0
    %2086 = vmatpush1.bf16.msra.mxu0 0
    %2087 = vmatprep.subr.bf16.mxu0 0
    %2088 = vmatpush1.bf16.msra.mxu0 0
    %2089 = vmatprep.subr.bf16.mxu0 0
    %2090 = vmatpush1.bf16.msra.mxu0 0
    %2091 = vmatprep.subr.bf16.mxu0 0
    %2092 = vmatpush1.bf16.msra.mxu0 0
    %2093 = vmatprep.mubr.bf16.mxu0 0
    %2094 = vmatmul.mubr.bf16.gmra.mrb[0].mxu0 %v2056
    %v2095 = vpop.f32.mrb[0].mxu0
    %v2096 = vadd.f32 0.0, %v2095
    %v2097 = vpop.f32.mrb[0].mxu0
    %v2098 = vpop.f32.mrb[0].mxu0
    %v2099 = vpop.f32.mrb[0].mxu0
    %2100 = vdwg.mxu0
    %2101 = vrot.lane.b32.xlu0 %v1989, 120
    %v2102 = vpop.permute.xlu0 %2101
    %2103 = vrot.lane.b32.xlu0 %v1989, 88
    %v2104 = vpop.permute.xlu0 %2103
    %v2106 = vsel %vm191, %v2102, 0
    %v2109 = vsel %vm191, %v2104, 0
    %2111 = vmatprep.subr.bf16.mxu0 0
    %2112 = vmatpush1.bf16.xpose.msra.mxu0 %v2109
    %2113 = vmatprep.subr.bf16.mxu0 0
    %2114 = vmatpush1.bf16.xpose.msra.mxu0 0
    %2115 = vmatprep.subr.bf16.mxu0 0
    %2116 = vmatpush1.bf16.xpose.msra.mxu0 0
    %2117 = vmatprep.subr.bf16.mxu0 0
    %2118 = vmatpush1.bf16.xpose.msra.mxu0 0
    %2119 = vmatprep.subr.bf16.mxu0 0
    %2120 = vmatpush1.bf16.xpose.msra.mxu0 0
    %2121 = vmatprep.subr.bf16.mxu0 0
    %2122 = vmatpush1.bf16.xpose.msra.mxu0 0
    %2123 = vmatprep.subr.bf16.mxu0 0
    %2124 = vmatpush1.bf16.xpose.msra.mxu0 0
    %2125 = vmatprep.subr.bf16.mxu0 0
    %2126 = vmatpush1.bf16.xpose.msra.mxu0 0
    %2127 = vmatprep.subr.bf16.mxu0 0
    %2128 = vmatpush1.bf16.xpose.msra.mxu0 0
    %2129 = vmatprep.subr.bf16.mxu0 0
    %2130 = vmatpush1.bf16.xpose.msra.mxu0 0
    %2131 = vmatprep.subr.bf16.mxu0 0
    %2132 = vmatpush1.bf16.xpose.msra.mxu0 0
    %2133 = vmatprep.subr.bf16.mxu0 0
    %2134 = vmatpush1.bf16.xpose.msra.mxu0 0
    %2135 = vmatprep.subr.bf16.mxu0 0
    %2136 = vmatpush1.bf16.xpose.msra.mxu0 0
    %2137 = vmatprep.subr.bf16.mxu0 0
    %2138 = vmatpush1.bf16.xpose.msra.mxu0 0
    %2139 = vmatprep.subr.bf16.mxu0 0
    %2140 = vmatpush1.bf16.xpose.msra.mxu0 0
    %2141 = vmatprep.subr.bf16.mxu0 0
    %2142 = vmatpush1.bf16.xpose.msra.mxu0 0
    %2143 = vmatprep.mubr.bf16.mxu0 0
    %2144 = vmatmul.mubr.bf16.gmra.mrb[0].mxu0 %v2106
    %v2145 = vpop.f32.mrb[0].mxu0
    %v2146 = vadd.f32 0.0, %v2145
    %v2147 = vpop.f32.mrb[0].mxu0
    %v2148 = vpop.f32.mrb[0].mxu0
    %v2149 = vpop.f32.mrb[0].mxu0
    %2150 = vdwg.mxu0
    %v2151 = vmul.f32 %v2146, 0.35355338
    %v2152 = vadd.f32 %v2151, %v712
    %v2153 = vsel %vm191, %v2152, -inf
    %2154 = vmax.xlane.f32.xlu0 %v2153
    %v2155 = vpop.xlane.xlu0 %2154
    %v2156 = vsub.f32 %v2152, %v2155
    %v2157 = vmul.f32 %v2156, 1.442695
    %v2158 = vpow.pop %v2157
    %v2159 = vsel %vm191, %v2158, 0.0
    %2160 = vadd.xlane.f32.xlu0 %v2159
    %v2161 = vpop.xlane.xlu0 %2160
    %v2162 = vrcp.pop %v2161
    %v2163 = vmul.f32 %v2158, %v2162
    %v2164 = vpack.c.bf16 %v2163, %v2163
    %2165 = vrot.lane.b32.xlu0 %v1989, 56
    %v2166 = vpop.permute.xlu0 %2165
    %v2168 = vsel %vm191, %v2164, 0
    %v2171 = vsel %vm261, %v2166, 0
    %2173 = vmatprep.subr.bf16.mxu0 0
    %2174 = vmatpush1.bf16.msra.mxu0 %v2171
    %2175 = vmatprep.subr.bf16.mxu0 0
    %2176 = vmatpush1.bf16.msra.mxu0 0
    %2177 = vmatprep.subr.bf16.mxu0 0
    %2178 = vmatpush1.bf16.msra.mxu0 0
    %2179 = vmatprep.subr.bf16.mxu0 0
    %2180 = vmatpush1.bf16.msra.mxu0 0
    %2181 = vmatprep.subr.bf16.mxu0 0
    %2182 = vmatpush1.bf16.msra.mxu0 0
    %2183 = vmatprep.subr.bf16.mxu0 0
    %2184 = vmatpush1.bf16.msra.mxu0 0
    %2185 = vmatprep.subr.bf16.mxu0 0
    %2186 = vmatpush1.bf16.msra.mxu0 0
    %2187 = vmatprep.subr.bf16.mxu0 0
    %2188 = vmatpush1.bf16.msra.mxu0 0
    %2189 = vmatprep.subr.bf16.mxu0 0
    %2190 = vmatpush1.bf16.msra.mxu0 0
    %2191 = vmatprep.subr.bf16.mxu0 0
    %2192 = vmatpush1.bf16.msra.mxu0 0
    %2193 = vmatprep.subr.bf16.mxu0 0
    %2194 = vmatpush1.bf16.msra.mxu0 0
    %2195 = vmatprep.subr.bf16.mxu0 0
    %2196 = vmatpush1.bf16.msra.mxu0 0
    %2197 = vmatprep.subr.bf16.mxu0 0
    %2198 = vmatpush1.bf16.msra.mxu0 0
    %2199 = vmatprep.subr.bf16.mxu0 0
    %2200 = vmatpush1.bf16.msra.mxu0 0
    %2201 = vmatprep.subr.bf16.mxu0 0
    %2202 = vmatpush1.bf16.msra.mxu0 0
    %2203 = vmatprep.subr.bf16.mxu0 0
    %2204 = vmatpush1.bf16.msra.mxu0 0
    %2205 = vmatprep.mubr.bf16.mxu0 0
    %2206 = vmatmul.mubr.bf16.gmra.mrb[0].mxu0 %v2168
    %v2207 = vpop.f32.mrb[0].mxu0
    %v2208 = vadd.f32 0.0, %v2207
    %v2209 = vpop.f32.mrb[0].mxu0
    %v2210 = vpop.f32.mrb[0].mxu0
    %v2211 = vpop.f32.mrb[0].mxu0
    %2212 = vdwg.mxu0
    %2213 = vrot.lane.b32.xlu0 %v1989, 112
    %v2214 = vpop.permute.xlu0 %2213
    %2215 = vrot.lane.b32.xlu0 %v1989, 80
    %v2216 = vpop.permute.xlu0 %2215
    %v2218 = vsel %vm191, %v2214, 0
    %v2221 = vsel %vm191, %v2216, 0
    %2223 = vmatprep.subr.bf16.mxu0 0
    %2224 = vmatpush1.bf16.xpose.msra.mxu0 %v2221
    %2225 = vmatprep.subr.bf16.mxu0 0
    %2226 = vmatpush1.bf16.xpose.msra.mxu0 0
    %2227 = vmatprep.subr.bf16.mxu0 0
    %2228 = vmatpush1.bf16.xpose.msra.mxu0 0
    %2229 = vmatprep.subr.bf16.mxu0 0
    %2230 = vmatpush1.bf16.xpose.msra.mxu0 0
    %2231 = vmatprep.subr.bf16.mxu0 0
    %2232 = vmatpush1.bf16.xpose.msra.mxu0 0
    %2233 = vmatprep.subr.bf16.mxu0 0
    %2234 = vmatpush1.bf16.xpose.msra.mxu0 0
    %2235 = vmatprep.subr.bf16.mxu0 0
    %2236 = vmatpush1.bf16.xpose.msra.mxu0 0
    %2237 = vmatprep.subr.bf16.mxu0 0
    %2238 = vmatpush1.bf16.xpose.msra.mxu0 0
    %2239 = vmatprep.subr.bf16.mxu0 0
    %2240 = vmatpush1.bf16.xpose.msra.mxu0 0
    %2241 = vmatprep.subr.bf16.mxu0 0
    %2242 = vmatpush1.bf16.xpose.msra.mxu0 0
    %2243 = vmatprep.subr.bf16.mxu0 0
    %2244 = vmatpush1.bf16.xpose.msra.mxu0 0
    %2245 = vmatprep.subr.bf16.mxu0 0
    %2246 = vmatpush1.bf16.xpose.msra.mxu0 0
    %2247 = vmatprep.subr.bf16.mxu0 0
    %2248 = vmatpush1.bf16.xpose.msra.mxu0 0
    %2249 = vmatprep.subr.bf16.mxu0 0
    %2250 = vmatpush1.bf16.xpose.msra.mxu0 0
    %2251 = vmatprep.subr.bf16.mxu0 0
    %2252 = vmatpush1.bf16.xpose.msra.mxu0 0
    %2253 = vmatprep.subr.bf16.mxu0 0
    %2254 = vmatpush1.bf16.xpose.msra.mxu0 0
    %2255 = vmatprep.mubr.bf16.mxu0 0
    %2256 = vmatmul.mubr.bf16.gmra.mrb[0].mxu0 %v2218
    %v2257 = vpop.f32.mrb[0].mxu0
    %v2258 = vadd.f32 0.0, %v2257
    %v2259 = vpop.f32.mrb[0].mxu0
    %v2260 = vpop.f32.mrb[0].mxu0
    %v2261 = vpop.f32.mrb[0].mxu0
    %2262 = vdwg.mxu0
    %v2263 = vmul.f32 %v2258, 0.35355338
    %v2264 = vadd.f32 %v2263, %v712
    %v2265 = vsel %vm191, %v2264, -inf
    %2266 = vmax.xlane.f32.xlu0 %v2265
    %v2267 = vpop.xlane.xlu0 %2266
    %v2268 = vsub.f32 %v2264, %v2267
    %v2269 = vmul.f32 %v2268, 1.442695
    %v2270 = vpow.pop %v2269
    %v2271 = vsel %vm191, %v2270, 0.0
    %2272 = vadd.xlane.f32.xlu0 %v2271
    %v2273 = vpop.xlane.xlu0 %2272
    %v2274 = vrcp.pop %v2273
    %v2275 = vmul.f32 %v2270, %v2274
    %v2276 = vpack.c.bf16 %v2275, %v2275
    %2277 = vrot.lane.b32.xlu0 %v1989, 48
    %v2278 = vpop.permute.xlu0 %2277
    %v2280 = vsel %vm191, %v2276, 0
    %v2283 = vsel %vm261, %v2278, 0
    %2285 = vmatprep.subr.bf16.mxu0 0
    %2286 = vmatpush1.bf16.msra.mxu0 %v2283
    %2287 = vmatprep.subr.bf16.mxu0 0
    %2288 = vmatpush1.bf16.msra.mxu0 0
    %2289 = vmatprep.subr.bf16.mxu0 0
    %2290 = vmatpush1.bf16.msra.mxu0 0
    %2291 = vmatprep.subr.bf16.mxu0 0
    %2292 = vmatpush1.bf16.msra.mxu0 0
    %2293 = vmatprep.subr.bf16.mxu0 0
    %2294 = vmatpush1.bf16.msra.mxu0 0
    %2295 = vmatprep.subr.bf16.mxu0 0
    %2296 = vmatpush1.bf16.msra.mxu0 0
    %2297 = vmatprep.subr.bf16.mxu0 0
    %2298 = vmatpush1.bf16.msra.mxu0 0
    %2299 = vmatprep.subr.bf16.mxu0 0
    %2300 = vmatpush1.bf16.msra.mxu0 0
    %2301 = vmatprep.subr.bf16.mxu0 0
    %2302 = vmatpush1.bf16.msra.mxu0 0
    %2303 = vmatprep.subr.bf16.mxu0 0
    %2304 = vmatpush1.bf16.msra.mxu0 0
    %2305 = vmatprep.subr.bf16.mxu0 0
    %2306 = vmatpush1.bf16.msra.mxu0 0
    %2307 = vmatprep.subr.bf16.mxu0 0
    %2308 = vmatpush1.bf16.msra.mxu0 0
    %2309 = vmatprep.subr.bf16.mxu0 0
    %2310 = vmatpush1.bf16.msra.mxu0 0
    %2311 = vmatprep.subr.bf16.mxu0 0
    %2312 = vmatpush1.bf16.msra.mxu0 0
    %2313 = vmatprep.subr.bf16.mxu0 0
    %2314 = vmatpush1.bf16.msra.mxu0 0
    %2315 = vmatprep.subr.bf16.mxu0 0
    %2316 = vmatpush1.bf16.msra.mxu0 0
    %2317 = vmatprep.mubr.bf16.mxu0 0
    %2318 = vmatmul.mubr.bf16.gmra.mrb[0].mxu0 %v2280
    %v2319 = vpop.f32.mrb[0].mxu0
    %v2320 = vadd.f32 0.0, %v2319
    %v2321 = vpop.f32.mrb[0].mxu0
    %v2322 = vpop.f32.mrb[0].mxu0
    %v2323 = vpop.f32.mrb[0].mxu0
    %2324 = vdwg.mxu0
    %2325 = vrot.lane.b32.xlu0 %v1989, 104
    %v2326 = vpop.permute.xlu0 %2325
    %2327 = vrot.lane.b32.xlu0 %v1989, 72
    %v2328 = vpop.permute.xlu0 %2327
    %v2330 = vsel %vm191, %v2326, 0
    %v2333 = vsel %vm191, %v2328, 0
    %2335 = vmatprep.subr.bf16.mxu0 0
    %2336 = vmatpush1.bf16.xpose.msra.mxu0 %v2333
    %2337 = vmatprep.subr.bf16.mxu0 0
    %2338 = vmatpush1.bf16.xpose.msra.mxu0 0
    %2339 = vmatprep.subr.bf16.mxu0 0
    %2340 = vmatpush1.bf16.xpose.msra.mxu0 0
    %2341 = vmatprep.subr.bf16.mxu0 0
    %2342 = vmatpush1.bf16.xpose.msra.mxu0 0
    %2343 = vmatprep.subr.bf16.mxu0 0
    %2344 = vmatpush1.bf16.xpose.msra.mxu0 0
    %2345 = vmatprep.subr.bf16.mxu0 0
    %2346 = vmatpush1.bf16.xpose.msra.mxu0 0
    %2347 = vmatprep.subr.bf16.mxu0 0
    %2348 = vmatpush1.bf16.xpose.msra.mxu0 0
    %2349 = vmatprep.subr.bf16.mxu0 0
    %2350 = vmatpush1.bf16.xpose.msra.mxu0 0
    %2351 = vmatprep.subr.bf16.mxu0 0
    %2352 = vmatpush1.bf16.xpose.msra.mxu0 0
    %2353 = vmatprep.subr.bf16.mxu0 0
    %2354 = vmatpush1.bf16.xpose.msra.mxu0 0
    %2355 = vmatprep.subr.bf16.mxu0 0
    %2356 = vmatpush1.bf16.xpose.msra.mxu0 0
    %2357 = vmatprep.subr.bf16.mxu0 0
    %2358 = vmatpush1.bf16.xpose.msra.mxu0 0
    %2359 = vmatprep.subr.bf16.mxu0 0
    %2360 = vmatpush1.bf16.xpose.msra.mxu0 0
    %2361 = vmatprep.subr.bf16.mxu0 0
    %2362 = vmatpush1.bf16.xpose.msra.mxu0 0
    %2363 = vmatprep.subr.bf16.mxu0 0
    %2364 = vmatpush1.bf16.xpose.msra.mxu0 0
    %2365 = vmatprep.subr.bf16.mxu0 0
    %2366 = vmatpush1.bf16.xpose.msra.mxu0 0
    %2367 = vmatprep.mubr.bf16.mxu0 0
    %2368 = vmatmul.mubr.bf16.gmra.mrb[0].mxu0 %v2330
    %v2369 = vpop.f32.mrb[0].mxu0
    %v2370 = vadd.f32 0.0, %v2369
    %v2371 = vpop.f32.mrb[0].mxu0
    %v2372 = vpop.f32.mrb[0].mxu0
    %v2373 = vpop.f32.mrb[0].mxu0
    %2374 = vdwg.mxu0
    %v2375 = vmul.f32 %v2370, 0.35355338
    %v2376 = vadd.f32 %v2375, %v712
    %v2377 = vsel %vm191, %v2376, -inf
    %2378 = vmax.xlane.f32.xlu0 %v2377
    %v2379 = vpop.xlane.xlu0 %2378
    %v2380 = vsub.f32 %v2376, %v2379
    %v2381 = vmul.f32 %v2380, 1.442695
    %v2382 = vpow.pop %v2381
    %v2383 = vsel %vm191, %v2382, 0.0
    %2384 = vadd.xlane.f32.xlu0 %v2383
    %v2385 = vpop.xlane.xlu0 %2384
    %v2386 = vrcp.pop %v2385
    %v2387 = vmul.f32 %v2382, %v2386
    %v2388 = vpack.c.bf16 %v2387, %v2387
    %2389 = vrot.lane.b32.xlu0 %v1989, 40
    %v2390 = vpop.permute.xlu0 %2389
    %v2392 = vsel %vm191, %v2388, 0
    %v2395 = vsel %vm261, %v2390, 0
    %2397 = vmatprep.subr.bf16.mxu0 0
    %2398 = vmatpush1.bf16.msra.mxu0 %v2395
    %2399 = vmatprep.subr.bf16.mxu0 0
    %2400 = vmatpush1.bf16.msra.mxu0 0
    %2401 = vmatprep.subr.bf16.mxu0 0
    %2402 = vmatpush1.bf16.msra.mxu0 0
    %2403 = vmatprep.subr.bf16.mxu0 0
    %2404 = vmatpush1.bf16.msra.mxu0 0
    %2405 = vmatprep.subr.bf16.mxu0 0
    %2406 = vmatpush1.bf16.msra.mxu0 0
    %2407 = vmatprep.subr.bf16.mxu0 0
    %2408 = vmatpush1.bf16.msra.mxu0 0
    %2409 = vmatprep.subr.bf16.mxu0 0
    %2410 = vmatpush1.bf16.msra.mxu0 0
    %2411 = vmatprep.subr.bf16.mxu0 0
    %2412 = vmatpush1.bf16.msra.mxu0 0
    %2413 = vmatprep.subr.bf16.mxu0 0
    %2414 = vmatpush1.bf16.msra.mxu0 0
    %2415 = vmatprep.subr.bf16.mxu0 0
    %2416 = vmatpush1.bf16.msra.mxu0 0
    %2417 = vmatprep.subr.bf16.mxu0 0
    %2418 = vmatpush1.bf16.msra.mxu0 0
    %2419 = vmatprep.subr.bf16.mxu0 0
    %2420 = vmatpush1.bf16.msra.mxu0 0
    %2421 = vmatprep.subr.bf16.mxu0 0
    %2422 = vmatpush1.bf16.msra.mxu0 0
    %2423 = vmatprep.subr.bf16.mxu0 0
    %2424 = vmatpush1.bf16.msra.mxu0 0
    %2425 = vmatprep.subr.bf16.mxu0 0
    %2426 = vmatpush1.bf16.msra.mxu0 0
    %2427 = vmatprep.subr.bf16.mxu0 0
    %2428 = vmatpush1.bf16.msra.mxu0 0
    %2429 = vmatprep.mubr.bf16.mxu0 0
    %2430 = vmatmul.mubr.bf16.gmra.mrb[0].mxu0 %v2392
    %v2431 = vpop.f32.mrb[0].mxu0
    %v2432 = vadd.f32 0.0, %v2431
    %v2433 = vpop.f32.mrb[0].mxu0
    %v2434 = vpop.f32.mrb[0].mxu0
    %v2435 = vpop.f32.mrb[0].mxu0
    %2436 = vdwg.mxu0
    %2438 = vrot.lane.b32.xlu0 %v2208, 8
    %v2439 = vpop.permute.xlu0 %2438
    %2442 = vrot.lane.b32.xlu0 %v2320, 16
    %v2443 = vpop.permute.xlu0 %2442
    %2446 = vrot.lane.b32.xlu0 %v2432, 24
    %v2447 = vpop.permute.xlu0 %2446
    %v2449 = vsel %vm191, %v2096, %v2439
    %v2450 = vsel %vm654, %v2449, %v2443
    %v2451 = vsel %vm656, %v2450, %v2447
    %s2452 = scalar_lea.vmem %s6, 16
    %v2453 = vld [vmem:[%s2452] sm:$0xf]
    %v2454 = vld [vmem:[%s2452 + $0x4] sm:$0xf]
    %v2455 = vld [vmem:[%s2452 + $0x8] sm:$0xf]
    %v2456 = vld [vmem:[%s2452 + $0xc] sm:$0xf]
    %v2457 = vpack.c.bf16 %v2451, %v1988
    %s2458 = scalar_lea.vmem %s7, 1
    %v2459 = vld [vmem:[%s2458] sm:$0x1]
    %v2461 = vlaneseq
    %v2462 = vshrl.u32 %v2461, 7
    %v2463 = vsub.s32 0, %v2462
    %v2464 = vrot.slane %v2459, %v2463
    %v2470 = vunpack.c.l.b16 %v2453
    %v2471 = vunpack.c.l.b16 %v2454
    %v2472 = vunpack.c.l.b16 %v2455
    %v2473 = vunpack.c.l.b16 %v2456
    %v2474 = vpack.c.b16 %v2471, %v2470
    %v2475 = vpack.c.b16 %v2473, %v2472
    %v2479 = vsel %vm75, %v2457, 0
    %2481 = vmatprep.subr.bf16.mxu0 0
    %2482 = vmatpush1.bf16.msra.mxu0 %v2474
    %2483 = vmatprep.subr.bf16.mxu0 0
    %2484 = vmatpush1.bf16.msra.mxu0 %v2475
    %2485 = vmatprep.subr.bf16.mxu0 0
    %2486 = vmatpush1.bf16.msra.mxu0 0
    %2487 = vmatprep.subr.bf16.mxu0 0
    %2488 = vmatpush1.bf16.msra.mxu0 0
    %2489 = vmatprep.subr.bf16.mxu0 0
    %2490 = vmatpush1.bf16.msra.mxu0 0
    %2491 = vmatprep.subr.bf16.mxu0 0
    %2492 = vmatpush1.bf16.msra.mxu0 0
    %2493 = vmatprep.subr.bf16.mxu0 0
    %2494 = vmatpush1.bf16.msra.mxu0 0
    %2495 = vmatprep.subr.bf16.mxu0 0
    %2496 = vmatpush1.bf16.msra.mxu0 0
    %2497 = vmatprep.subr.bf16.mxu0 0
    %2498 = vmatpush1.bf16.msra.mxu0 0
    %2499 = vmatprep.subr.bf16.mxu0 0
    %2500 = vmatpush1.bf16.msra.mxu0 0
    %2501 = vmatprep.subr.bf16.mxu0 0
    %2502 = vmatpush1.bf16.msra.mxu0 0
    %2503 = vmatprep.subr.bf16.mxu0 0
    %2504 = vmatpush1.bf16.msra.mxu0 0
    %2505 = vmatprep.subr.bf16.mxu0 0
    %2506 = vmatpush1.bf16.msra.mxu0 0
    %2507 = vmatprep.subr.bf16.mxu0 0
    %2508 = vmatpush1.bf16.msra.mxu0 0
    %2509 = vmatprep.subr.bf16.mxu0 0
    %2510 = vmatpush1.bf16.msra.mxu0 0
    %2511 = vmatprep.subr.bf16.mxu0 0
    %2512 = vmatpush1.bf16.msra.mxu0 0
    %2513 = vmatprep.mubr.bf16.mxu0 0
    %2514 = vmatmul.mubr.bf16.gmra.mrb[0].mxu0 %v2479
    %v2515 = vpop.f32.mrb[0].mxu0
    %v2516 = vadd.f32 %v2464, %v2515
    %v2517 = vpop.f32.mrb[0].mxu0
    %v2518 = vpop.f32.mrb[0].mxu0
    %v2519 = vadd.f32 %v2464, %v2518
    %v2520 = vpop.f32.mrb[0].mxu0
    %2521 = vdwg.mxu0
    %v2522 = vadd.f32 %v2516, %v1454
    %v2523 = vadd.f32 %v2519, %v1455
    %s2524 = scalar_lea.vmem %s8, 1
    %v2525 = vld [vmem:[%s2524] sm:$0x1]
    %s2526 = scalar_lea.vmem %s9, 1
    %v2527 = vld [vmem:[%s2526] sm:$0x1]
    %v2528 = vsel %vm75, %v2522, 0.0
    %2529 = vadd.xlane.f32.xlu0 %v2528
    %v2530 = vpop.xlane.xlu0 %2529
    %v2531 = vsel %vm75, %v2523, 0.0
    %2532 = vadd.xlane.f32.xlu0 %v2531
    %v2533 = vpop.xlane.xlu0 %2532
    %v2534 = vmul.f32 %v2530, %v82
    %v2535 = vmul.f32 %v2533, %v82
    %v2536 = vsub.f32 %v2522, %v2534
    %v2537 = vsub.f32 %v2523, %v2535
    %v2538 = vmul.f32 %v2536, %v2536
    %v2539 = vmul.f32 %v2537, %v2537
    %v2540 = vsel %vm75, %v2538, 0.0
    %2541 = vadd.xlane.f32.xlu0 %v2540
    %v2542 = vpop.xlane.xlu0 %2541
    %v2543 = vsel %vm75, %v2539, 0.0
    %2544 = vadd.xlane.f32.xlu0 %v2543
    %v2545 = vpop.xlane.xlu0 %2544
    %v2546 = vmul.f32 %v2542, %v82
    %v2547 = vmul.f32 %v2545, %v82
    %v2548 = vadd.f32 %v2546, 1e-12
    %v2549 = vadd.f32 %v2547, 1e-12
    %v2550 = vrsqrt.pop %v2548
    %v2551 = vrsqrt.pop %v2549
    %v2552 = vmul.f32 %v2536, %v2550
    %v2553 = vmul.f32 %v2537, %v2551
    %v2555 = vlaneseq
    %v2556 = vshrl.u32 %v2555, 7
    %v2557 = vsub.s32 0, %v2556
    %v2558 = vrot.slane %v2525, %v2557
    %v2560 = vmul.f32 %v2552, %v2558
    %v2561 = vmul.f32 %v2553, %v2558
    %v2563 = vlaneseq
    %v2564 = vshrl.u32 %v2563, 7
    %v2565 = vsub.s32 0, %v2564
    %v2566 = vrot.slane %v2527, %v2565
    %v2568 = vadd.f32 %v2560, %v2566
    %v2569 = vadd.f32 %v2561, %v2566
    %s2570 = scalar_lea.vmem %s10, 16
    %v2571 = vld [vmem:[%s2570] sm:$0xf]
    %v2572 = vld [vmem:[%s2570 + $0x4] sm:$0xf]
    %v2573 = vld [vmem:[%s2570 + $0x8] sm:$0xf]
    %v2574 = vld [vmem:[%s2570 + $0xc] sm:$0xf]
    %v2575 = vpack.c.bf16 %v2569, %v2568
    %s2576 = scalar_lea.vmem %s11, 1
    %v2577 = vld [vmem:[%s2576] sm:$0x1]
    %v2579 = vlaneseq
    %v2580 = vshrl.u32 %v2579, 7
    %v2581 = vsub.s32 0, %v2580
    %v2582 = vrot.slane %v2577, %v2581
    %v2588 = vunpack.c.l.b16 %v2571
    %v2589 = vunpack.c.l.b16 %v2572
    %v2590 = vunpack.c.l.b16 %v2573
    %v2591 = vunpack.c.l.b16 %v2574
    %v2592 = vpack.c.b16 %v2589, %v2588
    %v2593 = vpack.c.b16 %v2591, %v2590
    %v2597 = vsel %vm75, %v2575, 0
    %2599 = vmatprep.subr.bf16.mxu0 0
    %2600 = vmatpush1.bf16.msra.mxu0 %v2592
    %2601 = vmatprep.subr.bf16.mxu0 0
    %2602 = vmatpush1.bf16.msra.mxu0 %v2593
    %2603 = vmatprep.subr.bf16.mxu0 0
    %2604 = vmatpush1.bf16.msra.mxu0 0
    %2605 = vmatprep.subr.bf16.mxu0 0
    %2606 = vmatpush1.bf16.msra.mxu0 0
    %2607 = vmatprep.subr.bf16.mxu0 0
    %2608 = vmatpush1.bf16.msra.mxu0 0
    %2609 = vmatprep.subr.bf16.mxu0 0
    %2610 = vmatpush1.bf16.msra.mxu0 0
    %2611 = vmatprep.subr.bf16.mxu0 0
    %2612 = vmatpush1.bf16.msra.mxu0 0
    %2613 = vmatprep.subr.bf16.mxu0 0
    %2614 = vmatpush1.bf16.msra.mxu0 0
    %2615 = vmatprep.subr.bf16.mxu0 0
    %2616 = vmatpush1.bf16.msra.mxu0 0
    %2617 = vmatprep.subr.bf16.mxu0 0
    %2618 = vmatpush1.bf16.msra.mxu0 0
    %2619 = vmatprep.subr.bf16.mxu0 0
    %2620 = vmatpush1.bf16.msra.mxu0 0
    %2621 = vmatprep.subr.bf16.mxu0 0
    %2622 = vmatpush1.bf16.msra.mxu0 0
    %2623 = vmatprep.subr.bf16.mxu0 0
    %2624 = vmatpush1.bf16.msra.mxu0 0
    %2625 = vmatprep.subr.bf16.mxu0 0
    %2626 = vmatpush1.bf16.msra.mxu0 0
    %2627 = vmatprep.subr.bf16.mxu0 0
    %2628 = vmatpush1.bf16.msra.mxu0 0
    %2629 = vmatprep.subr.bf16.mxu0 0
    %2630 = vmatpush1.bf16.msra.mxu0 0
    %2631 = vmatprep.mubr.bf16.mxu0 0
    %2632 = vmatmul.mubr.bf16.gmra.mrb[0].mxu0 %v2597
    %v2633 = vpop.f32.mrb[0].mxu0
    %v2634 = vadd.f32 %v2582, %v2633
    %v2635 = vpop.f32.mrb[0].mxu0
    %v2636 = vpop.f32.mrb[0].mxu0
    %v2637 = vadd.f32 %v2582, %v2636
    %v2638 = vpop.f32.mrb[0].mxu0
    %2639 = vdwg.mxu0
    %v2640 = vmul.f32 %v2634, 0.5
    %v2641 = vmul.f32 %v2637, 0.5
    %v2642 = vmul.f32 %v2634, 0.044715
    %v2643 = vmul.f32 %v2637, 0.044715
    %v2644 = vmul.f32 %v2642, %v2634
    %v2645 = vmul.f32 %v2643, %v2637
    %v2646 = vmul.f32 %v2644, %v2634
    %v2647 = vmul.f32 %v2645, %v2637
    %v2648 = vadd.f32 %v2634, %v2646
    %v2649 = vadd.f32 %v2637, %v2647
    %v2650 = vmul.f32 %v2648, 0.7978846
    %v2651 = vmul.f32 %v2649, 0.7978846
    %v2652 = vtanh.pop %v2650
    %v2653 = vtanh.pop %v2651
    %v2654 = vadd.f32 %v2652, 1.0
    %v2655 = vadd.f32 %v2653, 1.0
    %v2656 = vmul.f32 %v2640, %v2654
    %v2657 = vmul.f32 %v2641, %v2655
    %s2658 = scalar_lea.vmem %s12, 32
    %v2659 = vld [vmem:[%s2658] sm:$0xf]
    %v2660 = vld [vmem:[%s2658 + $0x4] sm:$0xf]
    %v2661 = vld [vmem:[%s2658 + $0x8] sm:$0xf]
    %v2662 = vld [vmem:[%s2658 + $0xc] sm:$0xf]
    %v2663 = vld [vmem:[%s2658 + $0x10] sm:$0xf]
    %v2664 = vld [vmem:[%s2658 + $0x14] sm:$0xf]
    %v2665 = vld [vmem:[%s2658 + $0x18] sm:$0xf]
    %v2666 = vld [vmem:[%s2658 + $0x1c] sm:$0xf]
    %v2667 = vpack.c.bf16 %v2657, %v2656
    %s2668 = scalar_lea.vmem %s13, 1
    %v2669 = vld [vmem:[%s2668] sm:$0x1]
    %v2671 = vlaneseq
    %v2672 = vshrl.u32 %v2671, 7
    %v2673 = vsub.s32 0, %v2672
    %v2674 = vrot.slane %v2669, %v2673
    %v2684 = vunpack.c.l.b16 %v2659
    %v2685 = vunpack.c.l.b16 %v2660
    %v2686 = vunpack.c.l.b16 %v2661
    %v2687 = vunpack.c.l.b16 %v2662
    %v2688 = vunpack.c.l.b16 %v2663
    %v2689 = vunpack.c.l.b16 %v2664
    %v2690 = vunpack.c.l.b16 %v2665
    %v2691 = vunpack.c.l.b16 %v2666
    %v2692 = vpack.c.b16 %v2685, %v2684
    %v2693 = vpack.c.b16 %v2687, %v2686
    %v2694 = vpack.c.b16 %v2689, %v2688
    %v2695 = vpack.c.b16 %v2691, %v2690
    %v2701 = vsel %vm1365, %v2667, 0
    %2703 = vmatprep.subr.bf16.mxu0 0
    %2704 = vmatpush1.bf16.msra.mxu0 %v2692
    %2705 = vmatprep.subr.bf16.mxu0 0
    %2706 = vmatpush1.bf16.msra.mxu0 %v2693
    %2707 = vmatprep.subr.bf16.mxu0 0
    %2708 = vmatpush1.bf16.msra.mxu0 %v2694
    %2709 = vmatprep.subr.bf16.mxu0 0
    %2710 = vmatpush1.bf16.msra.mxu0 %v2695
    %2711 = vmatprep.subr.bf16.mxu0 0
    %2712 = vmatpush1.bf16.msra.mxu0 0
    %2713 = vmatprep.subr.bf16.mxu0 0
    %2714 = vmatpush1.bf16.msra.mxu0 0
    %2715 = vmatprep.subr.bf16.mxu0 0
    %2716 = vmatpush1.bf16.msra.mxu0 0
    %2717 = vmatprep.subr.bf16.mxu0 0
    %2718 = vmatpush1.bf16.msra.mxu0 0
    %2719 = vmatprep.subr.bf16.mxu0 0
    %2720 = vmatpush1.bf16.msra.mxu0 0
    %2721 = vmatprep.subr.bf16.mxu0 0
    %2722 = vmatpush1.bf16.msra.mxu0 0
    %2723 = vmatprep.subr.bf16.mxu0 0
    %2724 = vmatpush1.bf16.msra.mxu0 0
    %2725 = vmatprep.subr.bf16.mxu0 0
    %2726 = vmatpush1.bf16.msra.mxu0 0
    %2727 = vmatprep.subr.bf16.mxu0 0
    %2728 = vmatpush1.bf16.msra.mxu0 0
    %2729 = vmatprep.subr.bf16.mxu0 0
    %2730 = vmatpush1.bf16.msra.mxu0 0
    %2731 = vmatprep.subr.bf16.mxu0 0
    %2732 = vmatpush1.bf16.msra.mxu0 0
    %2733 = vmatprep.subr.bf16.mxu0 0
    %2734 = vmatpush1.bf16.msra.mxu0 0
    %2735 = vmatprep.mubr.bf16.mxu0 0
    %2736 = vmatmul.mubr.bf16.gmra.mrb[0].mxu0 %v2701
    %v2737 = vpop.f32.mrb[0].mxu0
    %v2738 = vadd.f32 %v2674, %v2737
    %v2739 = vpop.f32.mrb[0].mxu0
    %v2740 = vpop.f32.mrb[0].mxu0
    %v2741 = vadd.f32 %v2674, %v2740
    %v2742 = vpop.f32.mrb[0].mxu0
    %2743 = vdwg.mxu0
    %v2744 = vadd.f32 %v2738, %v2568
    %v2745 = vadd.f32 %v2741, %v2569
    %s2746 = scalar_lea.vmem %s14, 1
    %v2747 = vld [vmem:[%s2746] sm:$0x1]
    %s2748 = scalar_lea.vmem %s15, 1
    %v2749 = vld [vmem:[%s2748] sm:$0x1]
    %v2750 = vsel %vm75, %v2744, 0.0
    %2751 = vadd.xlane.f32.xlu0 %v2750
    %v2752 = vpop.xlane.xlu0 %2751
    %v2753 = vsel %vm75, %v2745, 0.0
    %2754 = vadd.xlane.f32.xlu0 %v2753
    %v2755 = vpop.xlane.xlu0 %2754
    %v2756 = vmul.f32 %v2752, %v82
    %v2757 = vmul.f32 %v2755, %v82
    %v2758 = vsub.f32 %v2744, %v2756
    %v2759 = vsub.f32 %v2745, %v2757
    %v2760 = vmul.f32 %v2758, %v2758
    %v2761 = vmul.f32 %v2759, %v2759
    %v2762 = vsel %vm75, %v2760, 0.0
    %2763 = vadd.xlane.f32.xlu0 %v2762
    %v2764 = vpop.xlane.xlu0 %2763
    %v2765 = vsel %vm75, %v2761, 0.0
    %2766 = vadd.xlane.f32.xlu0 %v2765
    %v2767 = vpop.xlane.xlu0 %2766
    %v2768 = vmul.f32 %v2764, %v82
    %v2769 = vmul.f32 %v2767, %v82
    %v2770 = vadd.f32 %v2768, 1e-12
    %v2771 = vadd.f32 %v2769, 1e-12
    %v2772 = vrsqrt.pop %v2770
    %v2773 = vrsqrt.pop %v2771
    %v2774 = vmul.f32 %v2758, %v2772
    %v2775 = vmul.f32 %v2759, %v2773
    %v2777 = vlaneseq
    %v2778 = vshrl.u32 %v2777, 7
    %v2779 = vsub.s32 0, %v2778
    %v2780 = vrot.slane %v2747, %v2779
    %v2782 = vmul.f32 %v2774, %v2780
    %v2783 = vmul.f32 %v2775, %v2780
    %v2785 = vlaneseq
    %v2786 = vshrl.u32 %v2785, 7
    %v2787 = vsub.s32 0, %v2786
    %v2788 = vrot.slane %v2749, %v2787
    %v2790 = vadd.f32 %v2782, %v2788
    %v2791 = vadd.f32 %v2783, %v2788
    %v2793 = vrot.slane %v2791, 7
    %vm2795 = vcmask 1040384
    %v2796 = vsel %vm2795, %v2790, %v2793
    %v2797 = vld [vmem:[%s16] sm:$0xf]
    %v2798 = vld [vmem:[%s16 + $0x4] sm:$0xf]
    %v2799 = vld [vmem:[%s16 + $0x8] sm:$0xf]
    %v2800 = vld [vmem:[%s16 + $0xc] sm:$0xf]
    %v2801 = vpack.c.bf16 %v2796, %v2796
    %v2802 = vld [vmem:[%s17] sm:$0x1]
    %v2804 = vlaneseq
    %v2805 = vshrl.u32 %v2804, 7
    %v2806 = vsub.s32 0, %v2805
    %v2807 = vrot.slane %v2802, %v2806
    %v2813 = vunpack.c.l.b16 %v2797
    %v2814 = vunpack.c.l.b16 %v2798
    %v2815 = vunpack.c.l.b16 %v2799
    %v2816 = vunpack.c.l.b16 %v2800
    %v2817 = vpack.c.b16 %v2814, %v2813
    %v2818 = vpack.c.b16 %v2816, %v2815
    %v2822 = vsel %vm75, %v2801, 0
    %2824 = vmatprep.subr.bf16.mxu0 0
    %2825 = vmatpush1.bf16.msra.mxu0 %v2817
    %2826 = vmatprep.subr.bf16.mxu0 0
    %2827 = vmatpush1.bf16.msra.mxu0 %v2818
    %2828 = vmatprep.subr.bf16.mxu0 0
    %2829 = vmatpush1.bf16.msra.mxu0 0
    %2830 = vmatprep.subr.bf16.mxu0 0
    %2831 = vmatpush1.bf16.msra.mxu0 0
    %2832 = vmatprep.subr.bf16.mxu0 0
    %2833 = vmatpush1.bf16.msra.mxu0 0
    %2834 = vmatprep.subr.bf16.mxu0 0
    %2835 = vmatpush1.bf16.msra.mxu0 0
    %2836 = vmatprep.subr.bf16.mxu0 0
    %2837 = vmatpush1.bf16.msra.mxu0 0
    %2838 = vmatprep.subr.bf16.mxu0 0
    %2839 = vmatpush1.bf16.msra.mxu0 0
    %2840 = vmatprep.subr.bf16.mxu0 0
    %2841 = vmatpush1.bf16.msra.mxu0 0
    %2842 = vmatprep.subr.bf16.mxu0 0
    %2843 = vmatpush1.bf16.msra.mxu0 0
    %2844 = vmatprep.subr.bf16.mxu0 0
    %2845 = vmatpush1.bf16.msra.mxu0 0
    %2846 = vmatprep.subr.bf16.mxu0 0
    %2847 = vmatpush1.bf16.msra.mxu0 0
    %2848 = vmatprep.subr.bf16.mxu0 0
    %2849 = vmatpush1.bf16.msra.mxu0 0
    %2850 = vmatprep.subr.bf16.mxu0 0
    %2851 = vmatpush1.bf16.msra.mxu0 0
    %2852 = vmatprep.subr.bf16.mxu0 0
    %2853 = vmatpush1.bf16.msra.mxu0 0
    %2854 = vmatprep.subr.bf16.mxu0 0
    %2855 = vmatpush1.bf16.msra.mxu0 0
    %2856 = vmatprep.mubr.bf16.mxu0 0
    %2857 = vmatmul.mubr.bf16.gmra.mrb[0].mxu0 %v2822
    %v2858 = vpop.f32.mrb[0].mxu0
    %v2859 = vadd.f32 %v2807, %v2858
    %v2860 = vpop.f32.mrb[0].mxu0
    %v2861 = vpop.f32.mrb[0].mxu0
    %v2862 = vpop.f32.mrb[0].mxu0
    %2863 = vdwg.mxu0
    %v2864 = vtanh.pop %v2859
    %vm2865 = vcmask 254976
    %2866 = vst.msk [vmem:[#allocation2] sm:$0x3] %vm2865, %v2864
    %v2867 = vld [vmem:[%s18] sm:$0xf]
    %v2868 = vld [vmem:[%s18 + $0x4] sm:$0xf]
    %v2869 = vld [vmem:[%s18 + $0x8] sm:$0xf]
    %v2870 = vld [vmem:[%s18 + $0xc] sm:$0xf]
    %v2871 = vpack.c.bf16 %v2864, %v2864
    %v2872 = vld [vmem:[%s19] sm:$0x1]
    %v2874 = vlaneseq
    %v2875 = vshrl.u32 %v2874, 7
    %v2876 = vsub.s32 0, %v2875
    %v2877 = vrot.slane %v2872, %v2876
    %v2883 = vunpack.c.l.b16 %v2867
    %v2884 = vunpack.c.l.b16 %v2868
    %v2885 = vunpack.c.l.b16 %v2869
    %v2886 = vunpack.c.l.b16 %v2870
    %v2887 = vpack.c.b16 %v2884, %v2883
    %v2888 = vpack.c.b16 %v2886, %v2885
    %v2892 = vsel %vm75, %v2871, 0
    %2894 = vmatprep.subr.bf16.mxu0 0
    %2895 = vmatpush1.bf16.msra.mxu0 %v2887
    %2896 = vmatprep.subr.bf16.mxu0 0
    %2897 = vmatpush1.bf16.msra.mxu0 %v2888
    %2898 = vmatprep.subr.bf16.mxu0 0
    %2899 = vmatpush1.bf16.msra.mxu0 0
    %2900 = vmatprep.subr.bf16.mxu0 0
    %2901 = vmatpush1.bf16.msra.mxu0 0
    %2902 = vmatprep.subr.bf16.mxu0 0
    %2903 = vmatpush1.bf16.msra.mxu0 0
    %2904 = vmatprep.subr.bf16.mxu0 0
    %2905 = vmatpush1.bf16.msra.mxu0 0
    %2906 = vmatprep.subr.bf16.mxu0 0
    %2907 = vmatpush1.bf16.msra.mxu0 0
    %2908 = vmatprep.subr.bf16.mxu0 0
    %2909 = vmatpush1.bf16.msra.mxu0 0
    %2910 = vmatprep.subr.bf16.mxu0 0
    %2911 = vmatpush1.bf16.msra.mxu0 0
    %2912 = vmatprep.subr.bf16.mxu0 0
    %2913 = vmatpush1.bf16.msra.mxu0 0
    %2914 = vmatprep.subr.bf16.mxu0 0
    %2915 = vmatpush1.bf16.msra.mxu0 0
    %2916 = vmatprep.subr.bf16.mxu0 0
    %2917 = vmatpush1.bf16.msra.mxu0 0
    %2918 = vmatprep.subr.bf16.mxu0 0
    %2919 = vmatpush1.bf16.msra.mxu0 0
    %2920 = vmatprep.subr.bf16.mxu0 0
    %2921 = vmatpush1.bf16.msra.mxu0 0
    %2922 = vmatprep.subr.bf16.mxu0 0
    %2923 = vmatpush1.bf16.msra.mxu0 0
    %2924 = vmatprep.subr.bf16.mxu0 0
    %2925 = vmatpush1.bf16.msra.mxu0 0
    %2926 = vmatprep.mubr.bf16.mxu0 0
    %2927 = vmatmul.mubr.bf16.gmra.mrb[0].mxu0 %v2892
    %v2928 = vpop.f32.mrb[0].mxu0
    %v2929 = vadd.f32 %v2877, %v2928
    %v2930 = vpop.f32.mrb[0].mxu0
    %v2931 = vpop.f32.mrb[0].mxu0
    %v2932 = vpop.f32.mrb[0].mxu0
    %2933 = vdwg.mxu0
    %vm2934 = vcmask 17408
    %2935 = vst.msk [vmem:[#allocation4] sm:$0x3] %vm2934, %v2929
    // Predicated region
    $region82: #{bert_palm_classifier_forward.1} parent=1 // pred_check
      _
    $region83: #{bert_palm_classifier_forward.1} parent=1 // pred_check_branch
      %2937 = sbr.rel (0) target = $region85
    $region84: #{bert_palm_classifier_forward.1} parent=1 // pred_region
      %s2939 = ssub.s32 32, 32
      %2940 = vsyncadd [#allocation3], %s2939
      %s2942 = sshll.u32 [#allocation2], 4
      %s2943 = int_to_ptr.vmem [resolvable:$true] %s2942
      %2945 = dma.vmem_to_hbm [thread:$0]  %s2943, 32, %s20, [#allocation3]
    $region85: #{bert_palm_classifier_forward.1} parent=1 // pred_fallthru
      _
    // Predicated region
    $region86: #{bert_palm_classifier_forward.1} parent=1 // pred_check
      _
    $region87: #{bert_palm_classifier_forward.1} parent=1 // pred_check_branch
      %2947 = sbr.rel (0) target = $region89
    $region88: #{bert_palm_classifier_forward.1} parent=1 // pred_region
      %s2949 = ssub.s32 32, 32
      %2950 = vsyncadd [#allocation5], %s2949
      %s2952 = sshll.u32 [#allocation4], 4
      %s2953 = int_to_ptr.vmem [resolvable:$true] %s2952
      %2955 = dma.vmem_to_hbm [thread:$0]  %s2953, 32, %s21, [#allocation5]
    $region89: #{bert_palm_classifier_forward.1} parent=1 // pred_fallthru
      _
    // Predicated region
    $region90: #{bert_palm_classifier_forward.1} parent=1 // pred_check
      _
    $region91: #{bert_palm_classifier_forward.1} parent=1 // pred_check_branch
      %2957 = sbr.rel (0) target = $region93
    $region92: #{bert_palm_classifier_forward.1} parent=1 // pred_region
      %2958 = dma.done [#allocation3], 32
    $region93: #{bert_palm_classifier_forward.1} parent=1 // pred_fallthru
      _
    // Predicated region
    $region94: #{bert_palm_classifier_forward.1} parent=1 // pred_check
      _
    $region95: #{bert_palm_classifier_forward.1} parent=1 // pred_check_branch
      %2960 = sbr.rel (0) target = $region97
    $region96: #{bert_palm_classifier_forward.1} parent=1 // pred_region
      %2961 = dma.done [#allocation5], 32
    $region97: #{bert_palm_classifier_forward.1} parent=1 // pred_fallthru
      _
    %2962 = vsyncpa [#allocation3], 1
    %2963 = vsyncpa [#allocation5], 1

</llo_original>
